<compile_context>
chip_gen: v5e
topology: v5e:2x2
jax: 0.10.0
libtpu: 0.0.40
codegen_flags: <defaults>
</compile_context>

<pallas_src>
import functools

import jax
import jax.numpy as jnp
from jax.experimental import pallas as pl
from jax.experimental.pallas import tpu as pltpu


# ------------------------------ model dimensions ------------------------------
C_IN = 3          # RGB input
C_STEM = 128      # stem output / bottleneck input   (real resnet50: 64)
C_MID = 128       # bottleneck mid channels          (real resnet50 layer4: 512)
C_OUT = 256       # bottleneck output = num_features (real resnet50: 2048)
HIDDEN = 512      # classifier hidden width (matches the PyTorch head)
NUM_CLASSES = 9
NCLS_PAD = 128    # lane-dense padded class dim; sliced to NUM_CLASSES in the wrapper
PATCH_K = 32      # stem im2col feature dim: 9*C_IN = 27, zero-padded to 32


# ------------------------------ fused Pallas kernel ------------------------------

def _resnet_fused_kernel(
    patches_ref,                 # (B_TILE*P, PATCH_K)   bf16  im2col'd stem input
    stem_w_ref, stem_b_ref,      # (PATCH_K, C_STEM)     bf16 , (1, C_STEM) f32
    w1_ref, b1_ref,              # (C_STEM, C_MID)       bf16 , (1, C_MID)  f32
    w3_ref, b3_ref,              # (9*C_MID, C_MID)      bf16 , (1, C_MID)  f32  (tap-major)
    w2_ref, b2_ref,              # (C_MID, C_OUT)        bf16 , (1, C_OUT)  f32
    wd_ref, bd_ref,              # (C_STEM, C_OUT)       bf16 , (1, C_OUT)  f32
    fc1_w_ref, fc1_b_ref,        # (C_OUT, HIDDEN)       bf16 , (1, HIDDEN) f32
    fc2_w_ref, fc2_b_ref,        # (HIDDEN, NCLS_PAD)    bf16 , (1, NCLS_PAD) f32
    out_ref,                     # (B_TILE, 1, NCLS_PAD) f32
    halo_ref,                    # VMEM (B_TILE, H+2, W+2, C_MID) bf16 : 3x3 halo buffer
    slab_ref,                    # VMEM (B_TILE*P, 9*C_MID)       bf16 : im2col slab
    *, H, W, B_TILE,
):
    P = H * W
    c_mid = w1_ref.shape[1]

    def mm(x_f32, w_ref, b_ref):
        # bf16 MXU matmul with f32 accumulation; bias / activations stay in f32 vregs.
        acc = jnp.dot(x_f32.astype(jnp.bfloat16), w_ref[...],
                      preferred_element_type=jnp.float32)
        return acc + b_ref[...]

    # ---- stem: Conv3x3/s2 (as im2col matmul) + folded BN + ReLU -----------------
    # patches are already bf16 (and zero-padded 27->32), so no cast / masked lanes here.
    x0 = jnp.maximum(
        jnp.dot(patches_ref[...], stem_w_ref[...],
                preferred_element_type=jnp.float32) + stem_b_ref[...], 0.0)   # (M, C_STEM)

    # ---- bottleneck: 1x1 reduce + BN + ReLU -------------------------------------
    a = jnp.maximum(mm(x0, w1_ref, b1_ref), 0.0)                              # (M, C_MID)

    # ---- bottleneck: 3x3 conv + BN + ReLU ---------------------------------------
    # bf16 halo: zero ONLY the 1-px border (interior fully rewritten every step),
    # cast the activation once at the write, build a bf16 im2col slab, then one
    # K-fused MXU matmul (K = 9*C_MID = 1152) instead of nine K=128 matmuls.
    zrow = jnp.zeros((B_TILE, 1, W + 2, c_mid), jnp.bfloat16)
    zcol = jnp.zeros((B_TILE, H, 1, c_mid), jnp.bfloat16)
    halo_ref[:, 0:1] = zrow
    halo_ref[:, H + 1:H + 2] = zrow
    halo_ref[:, 1:H + 1, 0:1] = zcol
    halo_ref[:, 1:H + 1, W + 1:W + 2] = zcol
    halo_ref[:, 1:H + 1, 1:W + 1] = a.astype(jnp.bfloat16).reshape(B_TILE, H, W, c_mid)
    for t in range(9):                                                  # static unroll
        kh, kw = t // 3, t % 3
        slab_ref[:, t * c_mid:(t + 1) * c_mid] = (
            halo_ref[:, kh:kh + H, kw:kw + W, :].reshape(B_TILE * P, c_mid))
    m = jnp.maximum(
        jnp.dot(slab_ref[...], w3_ref[...],
                preferred_element_type=jnp.float32) + b3_ref[...], 0.0)        # (M, C_MID)

    # ---- bottleneck: 1x1 expand + BN, 1x1 downsample identity, residual, ReLU ---
    y = jnp.maximum(mm(m, w2_ref, b2_ref) + mm(x0, wd_ref, bd_ref), 0.0)       # (M, C_OUT)

    # ---- global average pool + classifier (dropout = identity at inference) -----
    # Classifier runs once per tile with M = B_TILE (not M=1 per image).
    feats = jnp.mean(y.reshape(B_TILE, P, -1), axis=1)                  # (B_TILE, C_OUT)
    h1 = jnp.maximum(mm(feats, fc1_w_ref, fc1_b_ref), 0.0)              # (B_TILE, HIDDEN)
    logits = mm(h1, fc2_w_ref, fc2_b_ref)                               # (B_TILE, NCLS_PAD)
    out_ref[...] = logits[:, None, :].astype(out_ref.dtype)


# ------------------------------ parameters ------------------------------

def _bn_fold(key, c, eps=1e-5):
    k1, k2, k3, k4 = jax.random.split(key, 4)
    gamma = 1.0 + 0.1 * jax.random.normal(k1, (c,), jnp.float32)
    beta = 0.1 * jax.random.normal(k2, (c,), jnp.float32)
    mean = 0.1 * jax.random.normal(k3, (c,), jnp.float32)
    var = 1.0 + 0.1 * jax.random.normal(k4, (c,), jnp.float32) ** 2
    scale = gamma / jnp.sqrt(var + eps)
    bias = beta - mean * scale
    return scale, bias


def init_params(key):
    keys = jax.random.split(key, 14)

    def w(k, shape, fan_in):
        return jax.random.normal(k, shape, jnp.float32) * (2.0 / fan_in) ** 0.5

    p = {}
    # stem Conv3x3/s2 (im2col layout (9*C_IN, C_STEM), rows zero-padded to PATCH_K);
    # conv has no bias, BN folded in.
    sw = w(keys[0], (9 * C_IN, C_STEM), 9 * C_IN)
    s, b = _bn_fold(keys[1], C_STEM)
    sw_pad = jnp.zeros((PATCH_K, C_STEM), jnp.float32).at[:9 * C_IN].set(sw * s[None, :])
    p["stem_w"], p["stem_b"] = sw_pad.astype(jnp.bfloat16), b.reshape(1, C_STEM)
    # bottleneck 1x1 reduce + BN
    w1 = w(keys[2], (C_STEM, C_MID), C_STEM)
    s, b = _bn_fold(keys[3], C_MID)
    p["w1"], p["b1"] = (w1 * s[None, :]).astype(jnp.bfloat16), b.reshape(1, C_MID)
    # bottleneck 3x3 (full conv, tap-major layout (9*C_in, C_out)) + BN
    w3 = w(keys[4], (9, C_MID, C_MID), 9 * C_MID)
    s, b = _bn_fold(keys[5], C_MID)
    w3 = (w3 * s[None, None, :]).reshape(9 * C_MID, C_MID)
    p["w3"], p["b3"] = w3.astype(jnp.bfloat16), b.reshape(1, C_MID)
    # bottleneck 1x1 expand + BN
    w2 = w(keys[6], (C_MID, C_OUT), C_MID)
    s, b = _bn_fold(keys[7], C_OUT)
    p["w2"], p["b2"] = (w2 * s[None, :]).astype(jnp.bfloat16), b.reshape(1, C_OUT)
    # 1x1 downsample on the identity path (C_STEM != C_OUT) + BN
    wd = w(keys[8], (C_STEM, C_OUT), C_STEM)
    s, b = _bn_fold(keys[9], C_OUT)
    p["wd"], p["bd"] = (wd * s[None, :]).astype(jnp.bfloat16), b.reshape(1, C_OUT)
    # classifier: Dropout(id) -> Linear(C_OUT,512) -> ReLU -> Dropout(id) -> Linear(512,9)
    p["fc1_w"] = w(keys[10], (C_OUT, HIDDEN), C_OUT).astype(jnp.bfloat16)
    p["fc1_b"] = 0.01 * jax.random.normal(keys[11], (1, HIDDEN), jnp.float32)
    fc2 = w(keys[12], (HIDDEN, NUM_CLASSES), HIDDEN)
    fc2_pad = jnp.zeros((HIDDEN, NCLS_PAD), jnp.float32).at[:, :NUM_CLASSES].set(fc2)
    p["fc2_w"] = fc2_pad.astype(jnp.bfloat16)                    # lane-dense padded logits
    fc2_b = jnp.zeros((1, NCLS_PAD), jnp.float32)
    fc2_b = fc2_b.at[:, :NUM_CLASSES].set(
        0.01 * jax.random.normal(keys[13], (1, NUM_CLASSES), jnp.float32))
    p["fc2_b"] = fc2_b
    return p


# ------------------------------ forward pass ------------------------------

def resnet_forward(params, x_nchw):
    # PyTorch module takes NCHW; convert once to NHWC (channels on the 128-lane axis).
    x = jnp.transpose(x_nchw, (0, 2, 3, 1)).astype(jnp.float32)          # (N, H, W, 3)
    N, H, W, Cin = x.shape
    Ho, Wo = H // 2, W // 2
    P = Ho * Wo

    # Stem im2col for the 3x3/stride-2 conv (tiny: 3 input channels, done once).
    # Feature dim padded 27 -> 32, shipped as bf16 (halves the per-step streamed DMA).
    # TODO(synk): at real resolutions replace this with an in-kernel halo DMA of the raw
    #             input to avoid the 9x HBM expansion.
    xp = jnp.pad(x, ((0, 0), (1, 1), (1, 1), (0, 0)))
    cols = [xp[:, kh:kh + 2 * Ho:2, kw:kw + 2 * Wo:2, :]
            for kh in range(3) for kw in range(3)]
    patches = jnp.concatenate(cols, axis=-1).reshape(N * P, 9 * Cin)
    patches = jnp.pad(patches, ((0, 0), (0, PATCH_K - 9 * Cin))).astype(jnp.bfloat16)

    # Batch tile: M = B_TILE*P rows per matmul (256 on v6e/v7x-friendly batches, 128 here).
    B_TILE = 4 if N % 4 == 0 else (2 if N % 2 == 0 else 1)
    steps = N // B_TILE

    full = lambda shape: pl.BlockSpec(shape, lambda n, _s=shape: (0,) * len(_s))

    # v7x: only CORE_PARALLEL actually splits grid steps across the two TensorCores.
    # The single-step test path uses ARBITRARY (nothing to split).
    dim_sem = (pltpu.CORE_PARALLEL,) if steps > 1 else (pltpu.ARBITRARY,)

    out_padded = pl.pallas_call(
        functools.partial(_resnet_fused_kernel, H=Ho, W=Wo, B_TILE=B_TILE),
        out_shape=jax.ShapeDtypeStruct((N, 1, NCLS_PAD), jnp.float32),
        grid=(steps,),                                   # one batch tile per grid step
        in_specs=[
            pl.BlockSpec((B_TILE * P, PATCH_K), lambda n: (n, 0)),
            full(params["stem_w"].shape), full(params["stem_b"].shape),
            full(params["w1"].shape), full(params["b1"].shape),
            full(params["w3"].shape), full(params["b3"].shape),
            full(params["w2"].shape), full(params["b2"].shape),
            full(params["wd"].shape), full(params["bd"].shape),
            full(params["fc1_w"].shape), full(params["fc1_b"].shape),
            full(params["fc2_w"].shape), full(params["fc2_b"].shape),
        ],
        out_specs=pl.BlockSpec((B_TILE, 1, NCLS_PAD), lambda n: (n, 0, 0)),
        scratch_shapes=[
            pltpu.VMEM((B_TILE, Ho + 2, Wo + 2, C_MID), jnp.bfloat16),   # bf16 halo
            pltpu.VMEM((B_TILE * P, 9 * C_MID), jnp.bfloat16),           # bf16 im2col slab
        ],
        compiler_params=pltpu.CompilerParams(
            dimension_semantics=dim_sem,
            vmem_limit_bytes=32 * 1024 * 1024,           # usage ~4 MiB/step; safe on v5e-v7x
        ),
    )(patches, params["stem_w"], params["stem_b"], params["w1"], params["b1"],
      params["w3"], params["b3"], params["w2"], params["b2"],
      params["wd"], params["bd"], params["fc1_w"], params["fc1_b"],
      params["fc2_w"], params["fc2_b"])

    return out_padded[:, 0, :NUM_CLASSES]                               # (N, num_classes)


# ------------------------------ main ------------------------------

if __name__ == "__main__":
    key = jax.random.PRNGKey(0)
    pkey, xkey = jax.random.split(key)
    params = init_params(pkey)
    x = jax.random.normal(xkey, (2, 3, 16, 16), dtype=jnp.float32)      # NCHW, like PyTorch
    fwd = jax.jit(resnet_forward)
    out = fwd(params, x)
    jax.block_until_ready(out)
    assert out.shape == (2, NUM_CLASSES) and out.dtype == jnp.float32
    assert bool(jnp.all(jnp.isfinite(out)))
    print("KERNEL_OK")
</pallas_src>

<mosaic_0001>
module attributes {stable_mosaic.version = 11 : i64} {
  func.func @_resnet_fused_kernel(%arg0: i32, %arg1: memref<128x32xbf16, #tpu.memory_space<vmem>>, %arg2: memref<32x128xbf16, #tpu.memory_space<vmem>>, %arg3: memref<1x128xf32, #tpu.memory_space<vmem>>, %arg4: memref<128x128xbf16, #tpu.memory_space<vmem>>, %arg5: memref<1x128xf32, #tpu.memory_space<vmem>>, %arg6: memref<1152x128xbf16, #tpu.memory_space<vmem>>, %arg7: memref<1x128xf32, #tpu.memory_space<vmem>>, %arg8: memref<128x256xbf16, #tpu.memory_space<vmem>>, %arg9: memref<1x256xf32, #tpu.memory_space<vmem>>, %arg10: memref<128x256xbf16, #tpu.memory_space<vmem>>, %arg11: memref<1x256xf32, #tpu.memory_space<vmem>>, %arg12: memref<256x512xbf16, #tpu.memory_space<vmem>>, %arg13: memref<1x512xf32, #tpu.memory_space<vmem>>, %arg14: memref<512x128xbf16, #tpu.memory_space<vmem>>, %arg15: memref<1x128xf32, #tpu.memory_space<vmem>>, %arg16: memref<2x1x128xf32, #tpu.memory_space<vmem>>, %arg17: memref<2x10x10x128xbf16, #tpu.memory_space<vmem>>, %arg18: memref<128x1152xbf16, #tpu.memory_space<vmem>>) attributes {dimension_semantics = [#tpu.dimension_semantics<arbitrary>], iteration_bounds = array<i64: 1>, scalar_prefetch = 0 : i64, scratch_operands = 2 : i64, tpu.core_type = #tpu.core_type<tc>, window_params = [{transform_indices = @transform_0, window_bounds = array<i64: 128, 32>}, {pipeline_mode = #tpu.pipeline_mode<synchronous>, transform_indices = @transform_1, window_bounds = array<i64: 32, 128>}, {pipeline_mode = #tpu.pipeline_mode<synchronous>, transform_indices = @transform_2, window_bounds = array<i64: 1, 128>}, {pipeline_mode = #tpu.pipeline_mode<synchronous>, transform_indices = @transform_3, window_bounds = array<i64: 128, 128>}, {pipeline_mode = #tpu.pipeline_mode<synchronous>, transform_indices = @transform_4, window_bounds = array<i64: 1, 128>}, {pipeline_mode = #tpu.pipeline_mode<synchronous>, transform_indices = @transform_5, window_bounds = array<i64: 1152, 128>}, {pipeline_mode = #tpu.pipeline_mode<synchronous>, transform_indices = @transform_6, window_bounds = array<i64: 1, 128>}, {pipeline_mode = #tpu.pipeline_mode<synchronous>, transform_indices = @transform_7, window_bounds = array<i64: 128, 256>}, {pipeline_mode = #tpu.pipeline_mode<synchronous>, transform_indices = @transform_8, window_bounds = array<i64: 1, 256>}, {pipeline_mode = #tpu.pipeline_mode<synchronous>, transform_indices = @transform_9, window_bounds = array<i64: 128, 256>}, {pipeline_mode = #tpu.pipeline_mode<synchronous>, transform_indices = @transform_10, window_bounds = array<i64: 1, 256>}, {pipeline_mode = #tpu.pipeline_mode<synchronous>, transform_indices = @transform_11, window_bounds = array<i64: 256, 512>}, {pipeline_mode = #tpu.pipeline_mode<synchronous>, transform_indices = @transform_12, window_bounds = array<i64: 1, 512>}, {pipeline_mode = #tpu.pipeline_mode<synchronous>, transform_indices = @transform_13, window_bounds = array<i64: 512, 128>}, {pipeline_mode = #tpu.pipeline_mode<synchronous>, transform_indices = @transform_14, window_bounds = array<i64: 1, 128>}, {transform_indices = @transform_15, window_bounds = array<i64: 2, 1, 128>}]} {
    %c0 = arith.constant 0 : index
    %c0_0 = arith.constant 0 : index
    %0 = vector.load %arg1[%c0, %c0_0] : memref<128x32xbf16, #tpu.memory_space<vmem>>, vector<128x32xbf16>
    %c0_1 = arith.constant 0 : index
    %c0_2 = arith.constant 0 : index
    %1 = vector.load %arg2[%c0_1, %c0_2] : memref<32x128xbf16, #tpu.memory_space<vmem>>, vector<32x128xbf16>
    %cst = arith.constant dense<0.000000e+00> : vector<128x128xf32>
    %2 = tpu.matmul %0, %1, %cst {dimension_numbers = #tpu.dot_dimension_numbers<[1], [0], [0], [1], [0, 0, 1, 1], [], []>} : vector<128x32xbf16>, vector<32x128xbf16>, vector<128x128xf32> -> vector<128x128xf32>
    %c0_3 = arith.constant 0 : index
    %c0_4 = arith.constant 0 : index
    %3 = vector.load %arg3[%c0_3, %c0_4] : memref<1x128xf32, #tpu.memory_space<vmem>>, vector<1x128xf32>
    %4 = vector.broadcast %3 : vector<1x128xf32> to vector<128x128xf32>
    %5 = arith.addf %2, %4 : vector<128x128xf32>
    %cst_5 = arith.constant 0.000000e+00 : f32
    %6 = vector.broadcast %cst_5 : f32 to vector<128x128xf32>
    %7 = arith.maximumf %5, %6 : vector<128x128xf32>
    %8 = arith.truncf %7 : vector<128x128xf32> to vector<128x128xbf16>
    %c0_6 = arith.constant 0 : index
    %c0_7 = arith.constant 0 : index
    %9 = vector.load %arg4[%c0_6, %c0_7] : memref<128x128xbf16, #tpu.memory_space<vmem>>, vector<128x128xbf16>
    %cst_8 = arith.constant dense<0.000000e+00> : vector<128x128xf32>
    %10 = tpu.matmul %8, %9, %cst_8 {dimension_numbers = #tpu.dot_dimension_numbers<[1], [0], [0], [1], [0, 0, 1, 1], [], []>} : vector<128x128xbf16>, vector<128x128xbf16>, vector<128x128xf32> -> vector<128x128xf32>
    %c0_9 = arith.constant 0 : index
    %c0_10 = arith.constant 0 : index
    %11 = vector.load %arg5[%c0_9, %c0_10] : memref<1x128xf32, #tpu.memory_space<vmem>>, vector<1x128xf32>
    %12 = vector.broadcast %11 : vector<1x128xf32> to vector<128x128xf32>
    %13 = arith.addf %10, %12 : vector<128x128xf32>
    %cst_11 = arith.constant 0.000000e+00 : f32
    %14 = vector.broadcast %cst_11 : f32 to vector<128x128xf32>
    %15 = arith.maximumf %13, %14 : vector<128x128xf32>
    %cst_12 = arith.constant 0.000000e+00 : bf16
    %16 = vector.broadcast %cst_12 : bf16 to vector<2x1x10x128xbf16>
    %cst_13 = arith.constant 0.000000e+00 : bf16
    %17 = vector.broadcast %cst_13 : bf16 to vector<2x8x1x128xbf16>
    %c0_14 = arith.constant 0 : index
    %c0_15 = arith.constant 0 : index
    %c0_16 = arith.constant 0 : index
    %c0_17 = arith.constant 0 : index
    %18 = vector.load %arg17[%c0_14, %c0_15, %c0_16, %c0_17] : memref<2x10x10x128xbf16, #tpu.memory_space<vmem>>, vector<2x1x10x128xbf16>
    tpu.vector_store %arg17[%c0_14, %c0_15, %c0_16, %c0_17], %16 {strides = array<i32>} : memref<2x10x10x128xbf16, #tpu.memory_space<vmem>>, vector<2x1x10x128xbf16>,
    %c0_18 = arith.constant 0 : index
    %c9 = arith.constant 9 : index
    %c0_19 = arith.constant 0 : index
    %c0_20 = arith.constant 0 : index
    %19 = vector.load %arg17[%c0_18, %c9, %c0_19, %c0_20] : memref<2x10x10x128xbf16, #tpu.memory_space<vmem>>, vector<2x1x10x128xbf16>
    tpu.vector_store %arg17[%c0_18, %c9, %c0_19, %c0_20], %16 {strides = array<i32>} : memref<2x10x10x128xbf16, #tpu.memory_space<vmem>>, vector<2x1x10x128xbf16>,
    %c0_21 = arith.constant 0 : index
    %c1 = arith.constant 1 : index
    %c0_22 = arith.constant 0 : index
    %c0_23 = arith.constant 0 : index
    %20 = vector.load %arg17[%c0_21, %c1, %c0_22, %c0_23] : memref<2x10x10x128xbf16, #tpu.memory_space<vmem>>, vector<2x8x1x128xbf16>
    tpu.vector_store %arg17[%c0_21, %c1, %c0_22, %c0_23], %17 {strides = array<i32>} : memref<2x10x10x128xbf16, #tpu.memory_space<vmem>>, vector<2x8x1x128xbf16>,
    %c0_24 = arith.constant 0 : index
    %c1_25 = arith.constant 1 : index
    %c9_26 = arith.constant 9 : index
    %c0_27 = arith.constant 0 : index
    %21 = vector.load %arg17[%c0_24, %c1_25, %c9_26, %c0_27] : memref<2x10x10x128xbf16, #tpu.memory_space<vmem>>, vector<2x8x1x128xbf16>
    tpu.vector_store %arg17[%c0_24, %c1_25, %c9_26, %c0_27], %17 {strides = array<i32>} : memref<2x10x10x128xbf16, #tpu.memory_space<vmem>>, vector<2x8x1x128xbf16>,
    %22 = arith.truncf %15 : vector<128x128xf32> to vector<128x128xbf16>
    %23 = vector.shape_cast %22 : vector<128x128xbf16> to vector<2x8x8x128xbf16>
    %c0_28 = arith.constant 0 : index
    %c1_29 = arith.constant 1 : index
    %c1_30 = arith.constant 1 : index
    %c0_31 = arith.constant 0 : index
    %24 = vector.load %arg17[%c0_28, %c1_29, %c1_30, %c0_31] : memref<2x10x10x128xbf16, #tpu.memory_space<vmem>>, vector<2x8x8x128xbf16>
    tpu.vector_store %arg17[%c0_28, %c1_29, %c1_30, %c0_31], %23 {strides = array<i32>} : memref<2x10x10x128xbf16, #tpu.memory_space<vmem>>, vector<2x8x8x128xbf16>,
    %c0_32 = arith.constant 0 : index
    %c0_33 = arith.constant 0 : index
    %c0_34 = arith.constant 0 : index
    %c0_35 = arith.constant 0 : index
    %25 = vector.load %arg17[%c0_32, %c0_33, %c0_34, %c0_35] : memref<2x10x10x128xbf16, #tpu.memory_space<vmem>>, vector<2x8x8x128xbf16>
    %26 = vector.shape_cast %25 : vector<2x8x8x128xbf16> to vector<128x128xbf16>
    %c0_36 = arith.constant 0 : index
    %c0_37 = arith.constant 0 : index
    %27 = vector.load %arg18[%c0_36, %c0_37] : memref<128x1152xbf16, #tpu.memory_space<vmem>>, vector<128x128xbf16>
    tpu.vector_store %arg18[%c0_36, %c0_37], %26 {strides = array<i32>} : memref<128x1152xbf16, #tpu.memory_space<vmem>>, vector<128x128xbf16>,
    %c0_38 = arith.constant 0 : index
    %c0_39 = arith.constant 0 : index
    %c1_40 = arith.constant 1 : index
    %c0_41 = arith.constant 0 : index
    %28 = vector.load %arg17[%c0_38, %c0_39, %c1_40, %c0_41] : memref<2x10x10x128xbf16, #tpu.memory_space<vmem>>, vector<2x8x8x128xbf16>
    %29 = vector.shape_cast %28 : vector<2x8x8x128xbf16> to vector<128x128xbf16>
    %c0_42 = arith.constant 0 : index
    %c128 = arith.constant 128 : index
    %30 = vector.load %arg18[%c0_42, %c128] : memref<128x1152xbf16, #tpu.memory_space<vmem>>, vector<128x128xbf16>
    tpu.vector_store %arg18[%c0_42, %c128], %29 {strides = array<i32>} : memref<128x1152xbf16, #tpu.memory_space<vmem>>, vector<128x128xbf16>,
    %c0_43 = arith.constant 0 : index
    %c0_44 = arith.constant 0 : index
    %c2 = arith.constant 2 : index
    %c0_45 = arith.constant 0 : index
    %31 = vector.load %arg17[%c0_43, %c0_44, %c2, %c0_45] : memref<2x10x10x128xbf16, #tpu.memory_space<vmem>>, vector<2x8x8x128xbf16>
    %32 = vector.shape_cast %31 : vector<2x8x8x128xbf16> to vector<128x128xbf16>
    %c0_46 = arith.constant 0 : index
    %c256 = arith.constant 256 : index
    %33 = vector.load %arg18[%c0_46, %c256] : memref<128x1152xbf16, #tpu.memory_space<vmem>>, vector<128x128xbf16>
    tpu.vector_store %arg18[%c0_46, %c256], %32 {strides = array<i32>} : memref<128x1152xbf16, #tpu.memory_space<vmem>>, vector<128x128xbf16>,
    %c0_47 = arith.constant 0 : index
    %c1_48 = arith.constant 1 : index
    %c0_49 = arith.constant 0 : index
    %c0_50 = arith.constant 0 : index
    %34 = vector.load %arg17[%c0_47, %c1_48, %c0_49, %c0_50] : memref<2x10x10x128xbf16, #tpu.memory_space<vmem>>, vector<2x8x8x128xbf16>
    %35 = vector.shape_cast %34 : vector<2x8x8x128xbf16> to vector<128x128xbf16>
    %c0_51 = arith.constant 0 : index
    %c384 = arith.constant 384 : index
    %36 = vector.load %arg18[%c0_51, %c384] : memref<128x1152xbf16, #tpu.memory_space<vmem>>, vector<128x128xbf16>
    tpu.vector_store %arg18[%c0_51, %c384], %35 {strides = array<i32>} : memref<128x1152xbf16, #tpu.memory_space<vmem>>, vector<128x128xbf16>,
    %c0_52 = arith.constant 0 : index
    %c1_53 = arith.constant 1 : index
    %c1_54 = arith.constant 1 : index
    %c0_55 = arith.constant 0 : index
    %37 = vector.load %arg17[%c0_52, %c1_53, %c1_54, %c0_55] : memref<2x10x10x128xbf16, #tpu.memory_space<vmem>>, vector<2x8x8x128xbf16>
    %38 = vector.shape_cast %37 : vector<2x8x8x128xbf16> to vector<128x128xbf16>
    %c0_56 = arith.constant 0 : index
    %c512 = arith.constant 512 : index
    %39 = vector.load %arg18[%c0_56, %c512] : memref<128x1152xbf16, #tpu.memory_space<vmem>>, vector<128x128xbf16>
    tpu.vector_store %arg18[%c0_56, %c512], %38 {strides = array<i32>} : memref<128x1152xbf16, #tpu.memory_space<vmem>>, vector<128x128xbf16>,
    %c0_57 = arith.constant 0 : index
    %c1_58 = arith.constant 1 : index
    %c2_59 = arith.constant 2 : index
    %c0_60 = arith.constant 0 : index
    %40 = vector.load %arg17[%c0_57, %c1_58, %c2_59, %c0_60] : memref<2x10x10x128xbf16, #tpu.memory_space<vmem>>, vector<2x8x8x128xbf16>
    %41 = vector.shape_cast %40 : vector<2x8x8x128xbf16> to vector<128x128xbf16>
    %c0_61 = arith.constant 0 : index
    %c640 = arith.constant 640 : index
    %42 = vector.load %arg18[%c0_61, %c640] : memref<128x1152xbf16, #tpu.memory_space<vmem>>, vector<128x128xbf16>
    tpu.vector_store %arg18[%c0_61, %c640], %41 {strides = array<i32>} : memref<128x1152xbf16, #tpu.memory_space<vmem>>, vector<128x128xbf16>,
    %c0_62 = arith.constant 0 : index
    %c2_63 = arith.constant 2 : index
    %c0_64 = arith.constant 0 : index
    %c0_65 = arith.constant 0 : index
    %43 = vector.load %arg17[%c0_62, %c2_63, %c0_64, %c0_65] : memref<2x10x10x128xbf16, #tpu.memory_space<vmem>>, vector<2x8x8x128xbf16>
    %44 = vector.shape_cast %43 : vector<2x8x8x128xbf16> to vector<128x128xbf16>
    %c0_66 = arith.constant 0 : index
    %c768 = arith.constant 768 : index
    %45 = vector.load %arg18[%c0_66, %c768] : memref<128x1152xbf16, #tpu.memory_space<vmem>>, vector<128x128xbf16>
    tpu.vector_store %arg18[%c0_66, %c768], %44 {strides = array<i32>} : memref<128x1152xbf16, #tpu.memory_space<vmem>>, vector<128x128xbf16>,
    %c0_67 = arith.constant 0 : index
    %c2_68 = arith.constant 2 : index
    %c1_69 = arith.constant 1 : index
    %c0_70 = arith.constant 0 : index
    %46 = vector.load %arg17[%c0_67, %c2_68, %c1_69, %c0_70] : memref<2x10x10x128xbf16, #tpu.memory_space<vmem>>, vector<2x8x8x128xbf16>
    %47 = vector.shape_cast %46 : vector<2x8x8x128xbf16> to vector<128x128xbf16>
    %c0_71 = arith.constant 0 : index
    %c896 = arith.constant 896 : index
    %48 = vector.load %arg18[%c0_71, %c896] : memref<128x1152xbf16, #tpu.memory_space<vmem>>, vector<128x128xbf16>
    tpu.vector_store %arg18[%c0_71, %c896], %47 {strides = array<i32>} : memref<128x1152xbf16, #tpu.memory_space<vmem>>, vector<128x128xbf16>,
    %c0_72 = arith.constant 0 : index
    %c2_73 = arith.constant 2 : index
    %c2_74 = arith.constant 2 : index
    %c0_75 = arith.constant 0 : index
    %49 = vector.load %arg17[%c0_72, %c2_73, %c2_74, %c0_75] : memref<2x10x10x128xbf16, #tpu.memory_space<vmem>>, vector<2x8x8x128xbf16>
    %50 = vector.shape_cast %49 : vector<2x8x8x128xbf16> to vector<128x128xbf16>
    %c0_76 = arith.constant 0 : index
    %c1024 = arith.constant 1024 : index
    %51 = vector.load %arg18[%c0_76, %c1024] : memref<128x1152xbf16, #tpu.memory_space<vmem>>, vector<128x128xbf16>
    tpu.vector_store %arg18[%c0_76, %c1024], %50 {strides = array<i32>} : memref<128x1152xbf16, #tpu.memory_space<vmem>>, vector<128x128xbf16>,
    %c0_77 = arith.constant 0 : index
    %c0_78 = arith.constant 0 : index
    %52 = vector.load %arg18[%c0_77, %c0_78] : memref<128x1152xbf16, #tpu.memory_space<vmem>>, vector<128x1152xbf16>
    %c0_79 = arith.constant 0 : index
    %c0_80 = arith.constant 0 : index
    %53 = vector.load %arg6[%c0_79, %c0_80] : memref<1152x128xbf16, #tpu.memory_space<vmem>>, vector<1152x128xbf16>
    %cst_81 = arith.constant dense<0.000000e+00> : vector<128x128xf32>
    %54 = tpu.matmul %52, %53, %cst_81 {dimension_numbers = #tpu.dot_dimension_numbers<[1], [0], [0], [1], [0, 0, 1, 1], [], []>} : vector<128x1152xbf16>, vector<1152x128xbf16>, vector<128x128xf32> -> vector<128x128xf32>
    %c0_82 = arith.constant 0 : index
    %c0_83 = arith.constant 0 : index
    %55 = vector.load %arg7[%c0_82, %c0_83] : memref<1x128xf32, #tpu.memory_space<vmem>>, vector<1x128xf32>
    %56 = vector.broadcast %55 : vector<1x128xf32> to vector<128x128xf32>
    %57 = arith.addf %54, %56 : vector<128x128xf32>
    %cst_84 = arith.constant 0.000000e+00 : f32
    %58 = vector.broadcast %cst_84 : f32 to vector<128x128xf32>
    %59 = arith.maximumf %57, %58 : vector<128x128xf32>
    %60 = arith.truncf %59 : vector<128x128xf32> to vector<128x128xbf16>
    %c0_85 = arith.constant 0 : index
    %c0_86 = arith.constant 0 : index
    %61 = vector.load %arg8[%c0_85, %c0_86] : memref<128x256xbf16, #tpu.memory_space<vmem>>, vector<128x256xbf16>
    %cst_87 = arith.constant dense<0.000000e+00> : vector<128x256xf32>
    %62 = tpu.matmul %60, %61, %cst_87 {dimension_numbers = #tpu.dot_dimension_numbers<[1], [0], [0], [1], [0, 0, 1, 1], [], []>} : vector<128x128xbf16>, vector<128x256xbf16>, vector<128x256xf32> -> vector<128x256xf32>
    %c0_88 = arith.constant 0 : index
    %c0_89 = arith.constant 0 : index
    %63 = vector.load %arg9[%c0_88, %c0_89] : memref<1x256xf32, #tpu.memory_space<vmem>>, vector<1x256xf32>
    %64 = vector.broadcast %63 : vector<1x256xf32> to vector<128x256xf32>
    %65 = arith.addf %62, %64 : vector<128x256xf32>
    %66 = arith.truncf %7 : vector<128x128xf32> to vector<128x128xbf16>
    %c0_90 = arith.constant 0 : index
    %c0_91 = arith.constant 0 : index
    %67 = vector.load %arg10[%c0_90, %c0_91] : memref<128x256xbf16, #tpu.memory_space<vmem>>, vector<128x256xbf16>
    %cst_92 = arith.constant dense<0.000000e+00> : vector<128x256xf32>
    %68 = tpu.matmul %66, %67, %cst_92 {dimension_numbers = #tpu.dot_dimension_numbers<[1], [0], [0], [1], [0, 0, 1, 1], [], []>} : vector<128x128xbf16>, vector<128x256xbf16>, vector<128x256xf32> -> vector<128x256xf32>
    %c0_93 = arith.constant 0 : index
    %c0_94 = arith.constant 0 : index
    %69 = vector.load %arg11[%c0_93, %c0_94] : memref<1x256xf32, #tpu.memory_space<vmem>>, vector<1x256xf32>
    %70 = vector.broadcast %69 : vector<1x256xf32> to vector<128x256xf32>
    %71 = arith.addf %68, %70 : vector<128x256xf32>
    %72 = arith.addf %65, %71 : vector<128x256xf32>
    %cst_95 = arith.constant 0.000000e+00 : f32
    %73 = vector.broadcast %cst_95 : f32 to vector<128x256xf32>
    %74 = arith.maximumf %72, %73 : vector<128x256xf32>
    %75 = vector.shape_cast %74 : vector<128x256xf32> to vector<2x64x256xf32>
    %cst_96 = arith.constant dense<0.000000e+00> : vector<2x256xf32>
    %76 = vector.multi_reduction <add>, %75, %cst_96 [1] : vector<2x64x256xf32> to vector<2x256xf32>
    %cst_97 = arith.constant 6.400000e+01 : f32
    %77 = vector.broadcast %cst_97 : f32 to vector<2x256xf32>
    %78 = arith.divf %76, %77 : vector<2x256xf32>
    %79 = arith.truncf %78 : vector<2x256xf32> to vector<2x256xbf16>
    %c0_98 = arith.constant 0 : index
    %c0_99 = arith.constant 0 : index
    %80 = vector.load %arg12[%c0_98, %c0_99] : memref<256x512xbf16, #tpu.memory_space<vmem>>, vector<256x512xbf16>
    %cst_100 = arith.constant dense<0.000000e+00> : vector<2x512xf32>
    %81 = tpu.matmul %79, %80, %cst_100 {dimension_numbers = #tpu.dot_dimension_numbers<[1], [0], [0], [1], [0, 0, 1, 1], [], []>} : vector<2x256xbf16>, vector<256x512xbf16>, vector<2x512xf32> -> vector<2x512xf32>
    %c0_101 = arith.constant 0 : index
    %c0_102 = arith.constant 0 : index
    %82 = vector.load %arg13[%c0_101, %c0_102] : memref<1x512xf32, #tpu.memory_space<vmem>>, vector<1x512xf32>
    %83 = vector.broadcast %82 : vector<1x512xf32> to vector<2x512xf32>
    %84 = arith.addf %81, %83 : vector<2x512xf32>
    %cst_103 = arith.constant 0.000000e+00 : f32
    %85 = vector.broadcast %cst_103 : f32 to vector<2x512xf32>
    %86 = arith.maximumf %84, %85 : vector<2x512xf32>
    %87 = arith.truncf %86 : vector<2x512xf32> to vector<2x512xbf16>
    %c0_104 = arith.constant 0 : index
    %c0_105 = arith.constant 0 : index
    %88 = vector.load %arg14[%c0_104, %c0_105] : memref<512x128xbf16, #tpu.memory_space<vmem>>, vector<512x128xbf16>
    %cst_106 = arith.constant dense<0.000000e+00> : vector<2x128xf32>
    %89 = tpu.matmul %87, %88, %cst_106 {dimension_numbers = #tpu.dot_dimension_numbers<[1], [0], [0], [1], [0, 0, 1, 1], [], []>} : vector<2x512xbf16>, vector<512x128xbf16>, vector<2x128xf32> -> vector<2x128xf32>
    %c0_107 = arith.constant 0 : index
    %c0_108 = arith.constant 0 : index
    %90 = vector.load %arg15[%c0_107, %c0_108] : memref<1x128xf32, #tpu.memory_space<vmem>>, vector<1x128xf32>
    %91 = vector.broadcast %90 : vector<1x128xf32> to vector<2x128xf32>
    %92 = arith.addf %89, %91 : vector<2x128xf32>
    %93 = vector.shape_cast %92 : vector<2x128xf32> to vector<2x1x128xf32>
    %c0_109 = arith.constant 0 : index
    %c0_110 = arith.constant 0 : index
    %c0_111 = arith.constant 0 : index
    %94 = vector.load %arg16[%c0_109, %c0_110, %c0_111] : memref<2x1x128xf32, #tpu.memory_space<vmem>>, vector<2x1x128xf32>
    tpu.vector_store %arg16[%c0_109, %c0_110, %c0_111], %93 {strides = array<i32>} : memref<2x1x128xf32, #tpu.memory_space<vmem>>, vector<2x1x128xf32>,
    return
  }
  func.func @transform_0(%arg0: i32) -> (i32, i32) {
    %c0_i32 = arith.constant 0 : i32
    %c0_i32_0 = arith.constant 0 : i32
    return %arg0, %c0_i32 : i32, i32
  }
  func.func @transform_1(%arg0: i32) -> (i32, i32) {
    %c0_i32 = arith.constant 0 : i32
    %c0_i32_0 = arith.constant 0 : i32
    %c0_i32_1 = arith.constant 0 : i32
    return %c0_i32, %c0_i32_0 : i32, i32
  }
  func.func @transform_2(%arg0: i32) -> (i32, i32) {
    %c0_i32 = arith.constant 0 : i32
    %c0_i32_0 = arith.constant 0 : i32
    %c0_i32_1 = arith.constant 0 : i32
    return %c0_i32, %c0_i32_0 : i32, i32
  }
  func.func @transform_3(%arg0: i32) -> (i32, i32) {
    %c0_i32 = arith.constant 0 : i32
    %c0_i32_0 = arith.constant 0 : i32
    %c0_i32_1 = arith.constant 0 : i32
    return %c0_i32, %c0_i32_0 : i32, i32
  }
  func.func @transform_4(%arg0: i32) -> (i32, i32) {
    %c0_i32 = arith.constant 0 : i32
    %c0_i32_0 = arith.constant 0 : i32
    %c0_i32_1 = arith.constant 0 : i32
    return %c0_i32, %c0_i32_0 : i32, i32
  }
  func.func @transform_5(%arg0: i32) -> (i32, i32) {
    %c0_i32 = arith.constant 0 : i32
    %c0_i32_0 = arith.constant 0 : i32
    %c0_i32_1 = arith.constant 0 : i32
    return %c0_i32, %c0_i32_0 : i32, i32
  }
  func.func @transform_6(%arg0: i32) -> (i32, i32) {
    %c0_i32 = arith.constant 0 : i32
    %c0_i32_0 = arith.constant 0 : i32
    %c0_i32_1 = arith.constant 0 : i32
    return %c0_i32, %c0_i32_0 : i32, i32
  }
  func.func @transform_7(%arg0: i32) -> (i32, i32) {
    %c0_i32 = arith.constant 0 : i32
    %c0_i32_0 = arith.constant 0 : i32
    %c0_i32_1 = arith.constant 0 : i32
    return %c0_i32, %c0_i32_0 : i32, i32
  }
  func.func @transform_8(%arg0: i32) -> (i32, i32) {
    %c0_i32 = arith.constant 0 : i32
    %c0_i32_0 = arith.constant 0 : i32
    %c0_i32_1 = arith.constant 0 : i32
    return %c0_i32, %c0_i32_0 : i32, i32
  }
  func.func @transform_9(%arg0: i32) -> (i32, i32) {
    %c0_i32 = arith.constant 0 : i32
    %c0_i32_0 = arith.constant 0 : i32
    %c0_i32_1 = arith.constant 0 : i32
    return %c0_i32, %c0_i32_0 : i32, i32
  }
  func.func @transform_10(%arg0: i32) -> (i32, i32) {
    %c0_i32 = arith.constant 0 : i32
    %c0_i32_0 = arith.constant 0 : i32
    %c0_i32_1 = arith.constant 0 : i32
    return %c0_i32, %c0_i32_0 : i32, i32
  }
  func.func @transform_11(%arg0: i32) -> (i32, i32) {
    %c0_i32 = arith.constant 0 : i32
    %c0_i32_0 = arith.constant 0 : i32
    %c0_i32_1 = arith.constant 0 : i32
    return %c0_i32, %c0_i32_0 : i32, i32
  }
  func.func @transform_12(%arg0: i32) -> (i32, i32) {
    %c0_i32 = arith.constant 0 : i32
    %c0_i32_0 = arith.constant 0 : i32
    %c0_i32_1 = arith.constant 0 : i32
    return %c0_i32, %c0_i32_0 : i32, i32
  }
  func.func @transform_13(%arg0: i32) -> (i32, i32) {
    %c0_i32 = arith.constant 0 : i32
    %c0_i32_0 = arith.constant 0 : i32
    %c0_i32_1 = arith.constant 0 : i32
    return %c0_i32, %c0_i32_0 : i32, i32
  }
  func.func @transform_14(%arg0: i32) -> (i32, i32) {
    %c0_i32 = arith.constant 0 : i32
    %c0_i32_0 = arith.constant 0 : i32
    %c0_i32_1 = arith.constant 0 : i32
    return %c0_i32, %c0_i32_0 : i32, i32
  }
  func.func @transform_15(%arg0: i32) -> (i32, i32, i32) {
    %c0_i32 = arith.constant 0 : i32
    %c0_i32_0 = arith.constant 0 : i32
    %c0_i32_1 = arith.constant 0 : i32
    return %arg0, %c0_i32, %c0_i32_0 : i32, i32, i32
  }
}

</mosaic_0001>

<llo_original>
// kernel: resnet_forward.1
$region0: #{resnet_forward.1}
  #allocation0 [shape = 'u32[]', space=smem, size = 0x4, offset = 0x4, fixed_abs, tag = 'smem constant byte address 0x4 - core index']
  #allocation1 [shape = 'u32[72,128]{1,0:T(1,128)}', space=vmem, size = 0x9000, scoped, tag = 'internal scratch']
  #allocation2 [shape = 'bf16[2,10,10,128]{3,2,1,0:T(8,128)(2,1)}', space=vmem, size = 0x14000, scoped, tag = 'scratch operand']
  #allocation3 [shape = 'bf16[128,1152]{1,0:T(8,128)(2,1)}', space=vmem, size = 0x48000, scoped, tag = 'scratch operand']
  %s0 = inlined_call_operand.vmem [shape: bf16[128,32], index: 0, kind: input, shape index: {}]
  %s1 = inlined_call_operand.vmem [shape: bf16[32,128], index: 1, kind: input, shape index: {}]
  %s2 = inlined_call_operand.vmem [shape: f32[1,128], index: 2, kind: input, shape index: {}]
  %s3 = inlined_call_operand.vmem [shape: bf16[128,128], index: 3, kind: input, shape index: {}]
  %s4 = inlined_call_operand.vmem [shape: f32[1,128], index: 4, kind: input, shape index: {}]
  %s5 = inlined_call_operand.vmem [shape: bf16[1152,128], index: 5, kind: input, shape index: {}]
  %s6 = inlined_call_operand.vmem [shape: f32[1,128], index: 6, kind: input, shape index: {}]
  %s7 = inlined_call_operand.vmem [shape: bf16[128,256], index: 7, kind: input, shape index: {}]
  %s8 = inlined_call_operand.vmem [shape: f32[1,256], index: 8, kind: input, shape index: {}]
  %s9 = inlined_call_operand.vmem [shape: bf16[128,256], index: 9, kind: input, shape index: {}]
  %s10 = inlined_call_operand.vmem [shape: f32[1,256], index: 10, kind: input, shape index: {}]
  %s11 = inlined_call_operand.vmem [shape: bf16[256,512], index: 11, kind: input, shape index: {}]
  %s12 = inlined_call_operand.vmem [shape: f32[1,512], index: 12, kind: input, shape index: {}]
  %s13 = inlined_call_operand.vmem [shape: bf16[512,128], index: 13, kind: input, shape index: {}]
  %s14 = inlined_call_operand.vmem [shape: f32[1,128], index: 14, kind: input, shape index: {}]
  %s15 = inlined_call_operand.hbm [shape: f32[2,1,128], index: 15, kind: output, shape index: {}]
  %s16 = sld [smem:[#allocation0]]
  $region70: #{resnet_forward.1} parent=0
    _
  %s18 = ssub.s32 1, %s16
  %s19 = scalar_select 0, %s18, %s16
  $region1: #{resnet_forward.1} parent=0
    #allocation4 [shape = 'u8[1024]{0}', space=vmem, size = 0x400, scoped, tag = 'output window, operand 0, single buffered']
    #allocation5 [shape = 's32[1]{0}', space=sflag, size = 0x4, scoped, tag = 'scoped memory for resnet_forward.1']
    %20 = vsyncpa [#allocation5], 0
    // Predicated region
    $region2: #{resnet_forward.1} parent=1 // pred_check
      _
    $region3: #{resnet_forward.1} parent=1 // pred_check_branch
      %22 = sbr.rel (0) target = $region5
    $region4: #{resnet_forward.1} parent=1 // pred_region
      _
    $region5: #{resnet_forward.1} parent=1 // pred_fallthru
      _
    // Predicated region
    $region6: #{resnet_forward.1} parent=1 // pred_check
      _
    $region7: #{resnet_forward.1} parent=1 // pred_check_branch
      %24 = sbr.rel (0) target = $region9
    $region8: #{resnet_forward.1} parent=1 // pred_region
      _
    $region9: #{resnet_forward.1} parent=1 // pred_fallthru
      _
    // Predicated region
    $region10: #{resnet_forward.1} parent=1 // pred_check
      _
    $region11: #{resnet_forward.1} parent=1 // pred_check_branch
      %26 = sbr.rel (0) target = $region13
    $region12: #{resnet_forward.1} parent=1 // pred_region
      _
    $region13: #{resnet_forward.1} parent=1 // pred_fallthru
      _
    // Predicated region
    $region14: #{resnet_forward.1} parent=1 // pred_check
      _
    $region15: #{resnet_forward.1} parent=1 // pred_check_branch
      %28 = sbr.rel (0) target = $region17
    $region16: #{resnet_forward.1} parent=1 // pred_region
      _
    $region17: #{resnet_forward.1} parent=1 // pred_fallthru
      _
    // Predicated region
    $region18: #{resnet_forward.1} parent=1 // pred_check
      _
    $region19: #{resnet_forward.1} parent=1 // pred_check_branch
      %30 = sbr.rel (0) target = $region21
    $region20: #{resnet_forward.1} parent=1 // pred_region
      _
    $region21: #{resnet_forward.1} parent=1 // pred_fallthru
      _
    // Predicated region
    $region22: #{resnet_forward.1} parent=1 // pred_check
      _
    $region23: #{resnet_forward.1} parent=1 // pred_check_branch
      %32 = sbr.rel (0) target = $region25
    $region24: #{resnet_forward.1} parent=1 // pred_region
      _
    $region25: #{resnet_forward.1} parent=1 // pred_fallthru
      _
    // Predicated region
    $region26: #{resnet_forward.1} parent=1 // pred_check
      _
    $region27: #{resnet_forward.1} parent=1 // pred_check_branch
      %34 = sbr.rel (0) target = $region29
    $region28: #{resnet_forward.1} parent=1 // pred_region
      _
    $region29: #{resnet_forward.1} parent=1 // pred_fallthru
      _
    // Predicated region
    $region30: #{resnet_forward.1} parent=1 // pred_check
      _
    $region31: #{resnet_forward.1} parent=1 // pred_check_branch
      %36 = sbr.rel (0) target = $region33
    $region32: #{resnet_forward.1} parent=1 // pred_region
      _
    $region33: #{resnet_forward.1} parent=1 // pred_fallthru
      _
    // Predicated region
    $region34: #{resnet_forward.1} parent=1 // pred_check
      _
    $region35: #{resnet_forward.1} parent=1 // pred_check_branch
      %38 = sbr.rel (0) target = $region37
    $region36: #{resnet_forward.1} parent=1 // pred_region
      _
    $region37: #{resnet_forward.1} parent=1 // pred_fallthru
      _
    // Predicated region
    $region38: #{resnet_forward.1} parent=1 // pred_check
      _
    $region39: #{resnet_forward.1} parent=1 // pred_check_branch
      %40 = sbr.rel (0) target = $region41
    $region40: #{resnet_forward.1} parent=1 // pred_region
      _
    $region41: #{resnet_forward.1} parent=1 // pred_fallthru
      _
    // Predicated region
    $region42: #{resnet_forward.1} parent=1 // pred_check
      _
    $region43: #{resnet_forward.1} parent=1 // pred_check_branch
      %42 = sbr.rel (0) target = $region45
    $region44: #{resnet_forward.1} parent=1 // pred_region
      _
    $region45: #{resnet_forward.1} parent=1 // pred_fallthru
      _
    // Predicated region
    $region46: #{resnet_forward.1} parent=1 // pred_check
      _
    $region47: #{resnet_forward.1} parent=1 // pred_check_branch
      %44 = sbr.rel (0) target = $region49
    $region48: #{resnet_forward.1} parent=1 // pred_region
      _
    $region49: #{resnet_forward.1} parent=1 // pred_fallthru
      _
    // Predicated region
    $region50: #{resnet_forward.1} parent=1 // pred_check
      _
    $region51: #{resnet_forward.1} parent=1 // pred_check_branch
      %46 = sbr.rel (0) target = $region53
    $region52: #{resnet_forward.1} parent=1 // pred_region
      _
    $region53: #{resnet_forward.1} parent=1 // pred_fallthru
      _
    // Predicated region
    $region54: #{resnet_forward.1} parent=1 // pred_check
      _
    $region55: #{resnet_forward.1} parent=1 // pred_check_branch
      %48 = sbr.rel (0) target = $region57
    $region56: #{resnet_forward.1} parent=1 // pred_region
      _
    $region57: #{resnet_forward.1} parent=1 // pred_fallthru
      _
    // Predicated region
    $region58: #{resnet_forward.1} parent=1 // pred_check
      _
    $region59: #{resnet_forward.1} parent=1 // pred_check_branch
      %50 = sbr.rel (0) target = $region61
    $region60: #{resnet_forward.1} parent=1 // pred_region
      _
    $region61: #{resnet_forward.1} parent=1 // pred_fallthru
      _
    %v52 = vld [vmem:[%s0] sm:$0xf]
    %v53 = vld [vmem:[%s0 + $0x4] sm:$0xf]
    %v54 = vld [vmem:[%s0 + $0x8] sm:$0xf]
    %v55 = vld [vmem:[%s0 + $0xc] sm:$0xf]
    %v56 = vld [vmem:[%s0 + $0x10] sm:$0xf]
    %v57 = vld [vmem:[%s0 + $0x14] sm:$0xf]
    %v58 = vld [vmem:[%s0 + $0x18] sm:$0xf]
    %v59 = vld [vmem:[%s0 + $0x1c] sm:$0xf]
    %v60 = vld [vmem:[%s0 + $0x20] sm:$0xf]
    %v61 = vld [vmem:[%s0 + $0x24] sm:$0xf]
    %v62 = vld [vmem:[%s0 + $0x28] sm:$0xf]
    %v63 = vld [vmem:[%s0 + $0x2c] sm:$0xf]
    %v64 = vld [vmem:[%s0 + $0x30] sm:$0xf]
    %v65 = vld [vmem:[%s0 + $0x34] sm:$0xf]
    %v66 = vld [vmem:[%s0 + $0x38] sm:$0xf]
    %v67 = vld [vmem:[%s0 + $0x3c] sm:$0xf]
    %v68 = vld [vmem:[%s1] sm:$0xf]
    %v69 = vld [vmem:[%s1 + $0x4] sm:$0xf]
    %v70 = vld [vmem:[%s1 + $0x8] sm:$0xf]
    %v71 = vld [vmem:[%s1 + $0xc] sm:$0xf]
    %v72 = vld [vmem:[%s2] sm:$0x1]
    %v74 = vperm.slane %v72, 0
    %v92 = vunpack.c.l.b16 %v52
    %v93 = vunpack.c.l.b16 %v53
    %v94 = vunpack.c.l.b16 %v54
    %v95 = vunpack.c.l.b16 %v55
    %v96 = vunpack.c.l.b16 %v56
    %v97 = vunpack.c.l.b16 %v57
    %v98 = vunpack.c.l.b16 %v58
    %v99 = vunpack.c.l.b16 %v59
    %v100 = vunpack.c.l.b16 %v60
    %v101 = vunpack.c.l.b16 %v61
    %v102 = vunpack.c.l.b16 %v62
    %v103 = vunpack.c.l.b16 %v63
    %v104 = vunpack.c.l.b16 %v64
    %v105 = vunpack.c.l.b16 %v65
    %v106 = vunpack.c.l.b16 %v66
    %v107 = vunpack.c.l.b16 %v67
    %v108 = vpack.c.b16 %v93, %v92
    %v109 = vpack.c.b16 %v95, %v94
    %v110 = vpack.c.b16 %v97, %v96
    %v111 = vpack.c.b16 %v99, %v98
    %v112 = vpack.c.b16 %v101, %v100
    %v113 = vpack.c.b16 %v103, %v102
    %v114 = vpack.c.b16 %v105, %v104
    %v115 = vpack.c.b16 %v107, %v106
    %v120 = vunpack.c.l.b16 %v68
    %v121 = vunpack.c.l.b16 %v69
    %v122 = vunpack.c.l.b16 %v70
    %v123 = vunpack.c.l.b16 %v71
    %v124 = vpack.c.b16 %v121, %v120
    %v125 = vpack.c.b16 %v123, %v122
    %vm128 = vcmask 261120
    %v130 = vsel %vm128, %v108, 0
    %v133 = vsel %vm128, %v109, 0
    %v136 = vsel %vm128, %v110, 0
    %v139 = vsel %vm128, %v111, 0
    %v142 = vsel %vm128, %v112, 0
    %v145 = vsel %vm128, %v113, 0
    %v148 = vsel %vm128, %v114, 0
    %v151 = vsel %vm128, %v115, 0
    %153 = vmatpush.bf16.msra.mxu0 0
    %154 = vmatpush.bf16.msra.mxu0 0
    %155 = vmatpush.bf16.msra.mxu0 0
    %156 = vmatpush.bf16.msra.mxu0 0
    %157 = vmatpush.bf16.msra.mxu0 0
    %158 = vmatpush.bf16.msra.mxu0 0
    %159 = vmatpush.bf16.msra.mxu0 %v125
    %160 = vmatpush.bf16.msra.mxu0 %v124
    %161 = vmatmul.bf16.gmra.mxu0 %v130
    %v162 = vpop.f32.mrf.mxu0
    %v163 = vadd.f32 %v74, %v162
    %v164 = vpop.f32.mrf.mxu0
    %v165 = vadd.f32 %v74, %v164
    %166 = vmatmul.bf16.gmra.mxu0 %v133
    %v167 = vpop.f32.mrf.mxu0
    %v168 = vadd.f32 %v74, %v167
    %v169 = vpop.f32.mrf.mxu0
    %v170 = vadd.f32 %v74, %v169
    %171 = vmatmul.bf16.gmra.mxu0 %v136
    %v172 = vpop.f32.mrf.mxu0
    %v173 = vadd.f32 %v74, %v172
    %v174 = vpop.f32.mrf.mxu0
    %v175 = vadd.f32 %v74, %v174
    %176 = vmatmul.bf16.gmra.mxu0 %v139
    %v177 = vpop.f32.mrf.mxu0
    %v178 = vadd.f32 %v74, %v177
    %v179 = vpop.f32.mrf.mxu0
    %v180 = vadd.f32 %v74, %v179
    %181 = vmatmul.bf16.gmra.mxu0 %v142
    %v182 = vpop.f32.mrf.mxu0
    %v183 = vadd.f32 %v74, %v182
    %v184 = vpop.f32.mrf.mxu0
    %v185 = vadd.f32 %v74, %v184
    %186 = vmatmul.bf16.gmra.mxu0 %v145
    %v187 = vpop.f32.mrf.mxu0
    %v188 = vadd.f32 %v74, %v187
    %v189 = vpop.f32.mrf.mxu0
    %v190 = vadd.f32 %v74, %v189
    %191 = vmatmul.bf16.gmra.mxu0 %v148
    %v192 = vpop.f32.mrf.mxu0
    %v193 = vadd.f32 %v74, %v192
    %v194 = vpop.f32.mrf.mxu0
    %v195 = vadd.f32 %v74, %v194
    %196 = vmatmul.bf16.gmra.mxu0 %v151
    %v197 = vpop.f32.mrf.mxu0
    %v198 = vadd.f32 %v74, %v197
    %v199 = vpop.f32.mrf.mxu0
    %v200 = vadd.f32 %v74, %v199
    %201 = vdwg.mxu0
    %v202 = vmax.f32 %v163, 0.0
    %v203 = vmax.f32 %v165, 0.0
    %v204 = vmax.f32 %v168, 0.0
    %v205 = vmax.f32 %v170, 0.0
    %v206 = vmax.f32 %v173, 0.0
    %v207 = vmax.f32 %v175, 0.0
    %v208 = vmax.f32 %v178, 0.0
    %v209 = vmax.f32 %v180, 0.0
    %v210 = vmax.f32 %v183, 0.0
    %v211 = vmax.f32 %v185, 0.0
    %v212 = vmax.f32 %v188, 0.0
    %v213 = vmax.f32 %v190, 0.0
    %v214 = vmax.f32 %v193, 0.0
    %v215 = vmax.f32 %v195, 0.0
    %v216 = vmax.f32 %v198, 0.0
    %v217 = vmax.f32 %v200, 0.0
    %v218 = vpack.c.bf16 %v203, %v202
    %v219 = vpack.c.bf16 %v205, %v204
    %v220 = vpack.c.bf16 %v207, %v206
    %v221 = vpack.c.bf16 %v209, %v208
    %v222 = vpack.c.bf16 %v211, %v210
    %v223 = vpack.c.bf16 %v213, %v212
    %v224 = vpack.c.bf16 %v215, %v214
    %v225 = vpack.c.bf16 %v217, %v216
    %v226 = vld [vmem:[%s3] sm:$0xf]
    %v227 = vld [vmem:[%s3 + $0x4] sm:$0xf]
    %v228 = vld [vmem:[%s3 + $0x8] sm:$0xf]
    %v229 = vld [vmem:[%s3 + $0xc] sm:$0xf]
    %v230 = vld [vmem:[%s3 + $0x10] sm:$0xf]
    %v231 = vld [vmem:[%s3 + $0x14] sm:$0xf]
    %v232 = vld [vmem:[%s3 + $0x18] sm:$0xf]
    %v233 = vld [vmem:[%s3 + $0x1c] sm:$0xf]
    %v234 = vld [vmem:[%s3 + $0x20] sm:$0xf]
    %v235 = vld [vmem:[%s3 + $0x24] sm:$0xf]
    %v236 = vld [vmem:[%s3 + $0x28] sm:$0xf]
    %v237 = vld [vmem:[%s3 + $0x2c] sm:$0xf]
    %v238 = vld [vmem:[%s3 + $0x30] sm:$0xf]
    %v239 = vld [vmem:[%s3 + $0x34] sm:$0xf]
    %v240 = vld [vmem:[%s3 + $0x38] sm:$0xf]
    %v241 = vld [vmem:[%s3 + $0x3c] sm:$0xf]
    %v242 = vld [vmem:[%s4] sm:$0x1]
    %v244 = vperm.slane %v242, 0
    %v262 = vunpack.c.l.b16 %v226
    %v263 = vunpack.c.l.b16 %v227
    %v264 = vunpack.c.l.b16 %v228
    %v265 = vunpack.c.l.b16 %v229
    %v266 = vunpack.c.l.b16 %v230
    %v267 = vunpack.c.l.b16 %v231
    %v268 = vunpack.c.l.b16 %v232
    %v269 = vunpack.c.l.b16 %v233
    %v270 = vunpack.c.l.b16 %v234
    %v271 = vunpack.c.l.b16 %v235
    %v272 = vunpack.c.l.b16 %v236
    %v273 = vunpack.c.l.b16 %v237
    %v274 = vunpack.c.l.b16 %v238
    %v275 = vunpack.c.l.b16 %v239
    %v276 = vunpack.c.l.b16 %v240
    %v277 = vunpack.c.l.b16 %v241
    %v278 = vpack.c.b16 %v263, %v262
    %v279 = vpack.c.b16 %v265, %v264
    %v280 = vpack.c.b16 %v267, %v266
    %v281 = vpack.c.b16 %v269, %v268
    %v282 = vpack.c.b16 %v271, %v270
    %v283 = vpack.c.b16 %v273, %v272
    %v284 = vpack.c.b16 %v275, %v274
    %v285 = vpack.c.b16 %v277, %v276
    %294 = vmatpush.bf16.msra.mxu0 %v285
    %295 = vmatpush.bf16.msra.mxu0 %v284
    %296 = vmatpush.bf16.msra.mxu0 %v283
    %297 = vmatpush.bf16.msra.mxu0 %v282
    %298 = vmatpush.bf16.msra.mxu0 %v281
    %299 = vmatpush.bf16.msra.mxu0 %v280
    %300 = vmatpush.bf16.msra.mxu0 %v279
    %301 = vmatpush.bf16.msra.mxu0 %v278
    %302 = vmatmul.bf16.gmra.mxu0 %v218
    %v303 = vpop.f32.mrf.mxu0
    %v304 = vadd.f32 %v244, %v303
    %v305 = vpop.f32.mrf.mxu0
    %v306 = vadd.f32 %v244, %v305
    %307 = vmatmul.bf16.gmra.mxu0 %v219
    %v308 = vpop.f32.mrf.mxu0
    %v309 = vadd.f32 %v244, %v308
    %v310 = vpop.f32.mrf.mxu0
    %v311 = vadd.f32 %v244, %v310
    %312 = vmatmul.bf16.gmra.mxu0 %v220
    %v313 = vpop.f32.mrf.mxu0
    %v314 = vadd.f32 %v244, %v313
    %v315 = vpop.f32.mrf.mxu0
    %v316 = vadd.f32 %v244, %v315
    %317 = vmatmul.bf16.gmra.mxu0 %v221
    %v318 = vpop.f32.mrf.mxu0
    %v319 = vadd.f32 %v244, %v318
    %v320 = vpop.f32.mrf.mxu0
    %v321 = vadd.f32 %v244, %v320
    %322 = vmatmul.bf16.gmra.mxu0 %v222
    %v323 = vpop.f32.mrf.mxu0
    %v324 = vadd.f32 %v244, %v323
    %v325 = vpop.f32.mrf.mxu0
    %v326 = vadd.f32 %v244, %v325
    %327 = vmatmul.bf16.gmra.mxu0 %v223
    %v328 = vpop.f32.mrf.mxu0
    %v329 = vadd.f32 %v244, %v328
    %v330 = vpop.f32.mrf.mxu0
    %v331 = vadd.f32 %v244, %v330
    %332 = vmatmul.bf16.gmra.mxu0 %v224
    %v333 = vpop.f32.mrf.mxu0
    %v334 = vadd.f32 %v244, %v333
    %v335 = vpop.f32.mrf.mxu0
    %v336 = vadd.f32 %v244, %v335
    %337 = vmatmul.bf16.gmra.mxu0 %v225
    %v338 = vpop.f32.mrf.mxu0
    %v339 = vadd.f32 %v244, %v338
    %v340 = vpop.f32.mrf.mxu0
    %v341 = vadd.f32 %v244, %v340
    %342 = vdwg.mxu0
    %v343 = vmax.f32 %v304, 0.0
    %v344 = vmax.f32 %v306, 0.0
    %v345 = vmax.f32 %v309, 0.0
    %v346 = vmax.f32 %v311, 0.0
    %v347 = vmax.f32 %v314, 0.0
    %v348 = vmax.f32 %v316, 0.0
    %v349 = vmax.f32 %v319, 0.0
    %v350 = vmax.f32 %v321, 0.0
    %v351 = vmax.f32 %v324, 0.0
    %v352 = vmax.f32 %v326, 0.0
    %v353 = vmax.f32 %v329, 0.0
    %v354 = vmax.f32 %v331, 0.0
    %v355 = vmax.f32 %v334, 0.0
    %v356 = vmax.f32 %v336, 0.0
    %v357 = vmax.f32 %v339, 0.0
    %v358 = vmax.f32 %v341, 0.0
    %359 = vst [vmem:[#allocation2] sm:$0xf] 0
    %360 = vst [vmem:[#allocation2 + $0x4] sm:$0x1] 0
    %361 = vst [vmem:[#allocation2 + $0x50] sm:$0xf] 0
    %362 = vst [vmem:[#allocation2 + $0x54] sm:$0x1] 0
    %s363 = scalar_lea.vmem [#allocation2], 72
    %364 = vst [vmem:[%s363] sm:$0xf] 0
    %365 = vst [vmem:[%s363 + $0x4] sm:$0x1] 0
    %366 = vst [vmem:[%s363 + $0x50] sm:$0xf] 0
    %367 = vst [vmem:[%s363 + $0x54] sm:$0x1] 0
    %s368 = scalar_lea.vmem [#allocation2], 8
    %vm369 = vcmask 1040384
    %vm370 = vsmask.f32 256
    %vm371 = vmand %vm369, %vm370
    %v372 = vld [vmem:[%s368] sm:$0x1]
    %v373 = vsel %vm371, 0, %v372
    %374 = vst [vmem:[%s368] sm:$0x1] %v373
    %v375 = vld [vmem:[%s368 + $0x8] sm:$0x1]
    %v376 = vsel %vm371, 0, %v375
    %377 = vst [vmem:[%s368 + $0x8] sm:$0x1] %v376
    %v378 = vld [vmem:[%s368 + $0x10] sm:$0x1]
    %v379 = vsel %vm371, 0, %v378
    %380 = vst [vmem:[%s368 + $0x10] sm:$0x1] %v379
    %v381 = vld [vmem:[%s368 + $0x18] sm:$0x1]
    %v382 = vsel %vm371, 0, %v381
    %383 = vst [vmem:[%s368 + $0x18] sm:$0x1] %v382
    %v384 = vld [vmem:[%s368 + $0x20] sm:$0x1]
    %v385 = vsel %vm371, 0, %v384
    %386 = vst [vmem:[%s368 + $0x20] sm:$0x1] %v385
    %v387 = vld [vmem:[%s368 + $0x28] sm:$0x1]
    %v388 = vsel %vm371, 0, %v387
    %389 = vst [vmem:[%s368 + $0x28] sm:$0x1] %v388
    %v390 = vld [vmem:[%s368 + $0x30] sm:$0x1]
    %v391 = vsel %vm371, 0, %v390
    %392 = vst [vmem:[%s368 + $0x30] sm:$0x1] %v391
    %v393 = vld [vmem:[%s368 + $0x38] sm:$0x1]
    %v394 = vsel %vm371, 0, %v393
    %395 = vst [vmem:[%s368 + $0x38] sm:$0x1] %v394
    %v396 = vld [vmem:[%s368 + $0x50] sm:$0x1]
    %v397 = vsel %vm371, 0, %v396
    %398 = vst [vmem:[%s368 + $0x50] sm:$0x1] %v397
    %v399 = vld [vmem:[%s368 + $0x58] sm:$0x1]
    %v400 = vsel %vm371, 0, %v399
    %401 = vst [vmem:[%s368 + $0x58] sm:$0x1] %v400
    %v402 = vld [vmem:[%s368 + $0x60] sm:$0x1]
    %v403 = vsel %vm371, 0, %v402
    %404 = vst [vmem:[%s368 + $0x60] sm:$0x1] %v403
    %v405 = vld [vmem:[%s368 + $0x68] sm:$0x1]
    %v406 = vsel %vm371, 0, %v405
    %407 = vst [vmem:[%s368 + $0x68] sm:$0x1] %v406
    %v408 = vld [vmem:[%s368 + $0x70] sm:$0x1]
    %v409 = vsel %vm371, 0, %v408
    %410 = vst [vmem:[%s368 + $0x70] sm:$0x1] %v409
    %v411 = vld [vmem:[%s368 + $0x78] sm:$0x1]
    %v412 = vsel %vm371, 0, %v411
    %413 = vst [vmem:[%s368 + $0x78] sm:$0x1] %v412
    %v414 = vld [vmem:[%s368 + $0x80] sm:$0x1]
    %v415 = vsel %vm371, 0, %v414
    %416 = vst [vmem:[%s368 + $0x80] sm:$0x1] %v415
    %v417 = vld [vmem:[%s368 + $0x88] sm:$0x1]
    %v418 = vsel %vm371, 0, %v417
    %419 = vst [vmem:[%s368 + $0x88] sm:$0x1] %v418
    %vm420 = vsmask.f32 7938
    %vm421 = vmand %vm369, %vm420
    %v422 = vld [vmem:[%s368 + $0x4] sm:$0x1]
    %v423 = vsel %vm421, 0, %v422
    %424 = vst [vmem:[%s368 + $0x4] sm:$0x1] %v423
    %v425 = vld [vmem:[%s368 + $0xc] sm:$0x1]
    %v426 = vsel %vm421, 0, %v425
    %427 = vst [vmem:[%s368 + $0xc] sm:$0x1] %v426
    %v428 = vld [vmem:[%s368 + $0x14] sm:$0x1]
    %v429 = vsel %vm421, 0, %v428
    %430 = vst [vmem:[%s368 + $0x14] sm:$0x1] %v429
    %v431 = vld [vmem:[%s368 + $0x1c] sm:$0x1]
    %v432 = vsel %vm421, 0, %v431
    %433 = vst [vmem:[%s368 + $0x1c] sm:$0x1] %v432
    %v434 = vld [vmem:[%s368 + $0x24] sm:$0x1]
    %v435 = vsel %vm421, 0, %v434
    %436 = vst [vmem:[%s368 + $0x24] sm:$0x1] %v435
    %v437 = vld [vmem:[%s368 + $0x2c] sm:$0x1]
    %v438 = vsel %vm421, 0, %v437
    %439 = vst [vmem:[%s368 + $0x2c] sm:$0x1] %v438
    %v440 = vld [vmem:[%s368 + $0x34] sm:$0x1]
    %v441 = vsel %vm421, 0, %v440
    %442 = vst [vmem:[%s368 + $0x34] sm:$0x1] %v441
    %v443 = vld [vmem:[%s368 + $0x3c] sm:$0x1]
    %v444 = vsel %vm421, 0, %v443
    %445 = vst [vmem:[%s368 + $0x3c] sm:$0x1] %v444
    %v446 = vld [vmem:[%s368 + $0x54] sm:$0x1]
    %v447 = vsel %vm421, 0, %v446
    %448 = vst [vmem:[%s368 + $0x54] sm:$0x1] %v447
    %v449 = vld [vmem:[%s368 + $0x5c] sm:$0x1]
    %v450 = vsel %vm421, 0, %v449
    %451 = vst [vmem:[%s368 + $0x5c] sm:$0x1] %v450
    %v452 = vld [vmem:[%s368 + $0x64] sm:$0x1]
    %v453 = vsel %vm421, 0, %v452
    %454 = vst [vmem:[%s368 + $0x64] sm:$0x1] %v453
    %v455 = vld [vmem:[%s368 + $0x6c] sm:$0x1]
    %v456 = vsel %vm421, 0, %v455
    %457 = vst [vmem:[%s368 + $0x6c] sm:$0x1] %v456
    %v458 = vld [vmem:[%s368 + $0x74] sm:$0x1]
    %v459 = vsel %vm421, 0, %v458
    %460 = vst [vmem:[%s368 + $0x74] sm:$0x1] %v459
    %v461 = vld [vmem:[%s368 + $0x7c] sm:$0x1]
    %v462 = vsel %vm421, 0, %v461
    %463 = vst [vmem:[%s368 + $0x7c] sm:$0x1] %v462
    %v464 = vld [vmem:[%s368 + $0x84] sm:$0x1]
    %v465 = vsel %vm421, 0, %v464
    %466 = vst [vmem:[%s368 + $0x84] sm:$0x1] %v465
    %v467 = vld [vmem:[%s368 + $0x8c] sm:$0x1]
    %v468 = vsel %vm421, 0, %v467
    %469 = vst [vmem:[%s368 + $0x8c] sm:$0x1] %v468
    %v470 = vpack.c.bf16 %v343, %v343
    %v471 = vpack.c.bf16 %v344, %v344
    %v472 = vpack.c.bf16 %v345, %v345
    %v473 = vpack.c.bf16 %v346, %v346
    %v474 = vpack.c.bf16 %v347, %v347
    %v475 = vpack.c.bf16 %v348, %v348
    %v476 = vpack.c.bf16 %v349, %v349
    %v477 = vpack.c.bf16 %v350, %v350
    %v478 = vpack.c.bf16 %v351, %v351
    %v479 = vpack.c.bf16 %v352, %v352
    %v480 = vpack.c.bf16 %v353, %v353
    %v481 = vpack.c.bf16 %v354, %v354
    %v482 = vpack.c.bf16 %v355, %v355
    %v483 = vpack.c.bf16 %v356, %v356
    %v484 = vpack.c.bf16 %v357, %v357
    %v485 = vpack.c.bf16 %v358, %v358
    %v487 = vshrl.u32 %v470, 16
    %v489 = vrot.slane %v487, 7
    %v490 = vshll.u32 %v470, 16
    %v492 = vor.u32 %v489, %v490
    %v493 = vrot.slane %v489, 4
    %v495 = vshrl.u32 %v471, 16
    %v497 = vrot.slane %v495, 7
    %v498 = vshll.u32 %v471, 16
    %v500 = vor.u32 %v497, %v498
    %v501 = vrot.slane %v497, 4
    %v503 = vshrl.u32 %v472, 16
    %v505 = vrot.slane %v503, 7
    %v506 = vshll.u32 %v472, 16
    %v508 = vor.u32 %v505, %v506
    %v509 = vrot.slane %v505, 4
    %v511 = vshrl.u32 %v473, 16
    %v513 = vrot.slane %v511, 7
    %v514 = vshll.u32 %v473, 16
    %v516 = vor.u32 %v513, %v514
    %v517 = vrot.slane %v513, 4
    %v519 = vshrl.u32 %v474, 16
    %v521 = vrot.slane %v519, 7
    %v522 = vshll.u32 %v474, 16
    %v524 = vor.u32 %v521, %v522
    %v525 = vrot.slane %v521, 4
    %v527 = vshrl.u32 %v475, 16
    %v529 = vrot.slane %v527, 7
    %v530 = vshll.u32 %v475, 16
    %v532 = vor.u32 %v529, %v530
    %v533 = vrot.slane %v529, 4
    %v535 = vshrl.u32 %v476, 16
    %v537 = vrot.slane %v535, 7
    %v538 = vshll.u32 %v476, 16
    %v540 = vor.u32 %v537, %v538
    %v541 = vrot.slane %v537, 4
    %v543 = vshrl.u32 %v477, 16
    %v545 = vrot.slane %v543, 7
    %v546 = vshll.u32 %v477, 16
    %v548 = vor.u32 %v545, %v546
    %v549 = vrot.slane %v545, 4
    %v551 = vshrl.u32 %v478, 16
    %v553 = vrot.slane %v551, 7
    %v554 = vshll.u32 %v478, 16
    %v556 = vor.u32 %v553, %v554
    %v557 = vrot.slane %v553, 4
    %v559 = vshrl.u32 %v479, 16
    %v561 = vrot.slane %v559, 7
    %v562 = vshll.u32 %v479, 16
    %v564 = vor.u32 %v561, %v562
    %v565 = vrot.slane %v561, 4
    %v567 = vshrl.u32 %v480, 16
    %v569 = vrot.slane %v567, 7
    %v570 = vshll.u32 %v480, 16
    %v572 = vor.u32 %v569, %v570
    %v573 = vrot.slane %v569, 4
    %v575 = vshrl.u32 %v481, 16
    %v577 = vrot.slane %v575, 7
    %v578 = vshll.u32 %v481, 16
    %v580 = vor.u32 %v577, %v578
    %v581 = vrot.slane %v577, 4
    %v583 = vshrl.u32 %v482, 16
    %v585 = vrot.slane %v583, 7
    %v586 = vshll.u32 %v482, 16
    %v588 = vor.u32 %v585, %v586
    %v589 = vrot.slane %v585, 4
    %v591 = vshrl.u32 %v483, 16
    %v593 = vrot.slane %v591, 7
    %v594 = vshll.u32 %v483, 16
    %v596 = vor.u32 %v593, %v594
    %v597 = vrot.slane %v593, 4
    %v599 = vshrl.u32 %v484, 16
    %v601 = vrot.slane %v599, 7
    %v602 = vshll.u32 %v484, 16
    %v604 = vor.u32 %v601, %v602
    %v605 = vrot.slane %v601, 4
    %v607 = vshrl.u32 %v485, 16
    %v609 = vrot.slane %v607, 7
    %v610 = vshll.u32 %v485, 16
    %v612 = vor.u32 %v609, %v610
    %v613 = vrot.slane %v609, 4
    %vm646 = vcmask 1043456
    %vm647 = vmand %vm646, %vm420
    %v648 = vld [vmem:[%s368] sm:$0xf]
    %v649 = vsel %vm647, %v492, %v648
    %650 = vst [vmem:[%s368] sm:$0xf] %v649
    %v651 = vld [vmem:[%s368 + $0x4] sm:$0x1]
    %v652 = vsel %vm371, %v493, %v651
    %653 = vst [vmem:[%s368 + $0x4] sm:$0x1] %v652
    %v654 = vld [vmem:[%s368 + $0x8] sm:$0xf]
    %v655 = vsel %vm647, %v500, %v654
    %656 = vst [vmem:[%s368 + $0x8] sm:$0xf] %v655
    %v657 = vld [vmem:[%s368 + $0xc] sm:$0x1]
    %v658 = vsel %vm371, %v501, %v657
    %659 = vst [vmem:[%s368 + $0xc] sm:$0x1] %v658
    %v660 = vld [vmem:[%s368 + $0x10] sm:$0xf]
    %v661 = vsel %vm647, %v508, %v660
    %662 = vst [vmem:[%s368 + $0x10] sm:$0xf] %v661
    %v663 = vld [vmem:[%s368 + $0x14] sm:$0x1]
    %v664 = vsel %vm371, %v509, %v663
    %665 = vst [vmem:[%s368 + $0x14] sm:$0x1] %v664
    %v666 = vld [vmem:[%s368 + $0x18] sm:$0xf]
    %v667 = vsel %vm647, %v516, %v666
    %668 = vst [vmem:[%s368 + $0x18] sm:$0xf] %v667
    %v669 = vld [vmem:[%s368 + $0x1c] sm:$0x1]
    %v670 = vsel %vm371, %v517, %v669
    %671 = vst [vmem:[%s368 + $0x1c] sm:$0x1] %v670
    %v672 = vld [vmem:[%s368 + $0x20] sm:$0xf]
    %v673 = vsel %vm647, %v524, %v672
    %674 = vst [vmem:[%s368 + $0x20] sm:$0xf] %v673
    %v675 = vld [vmem:[%s368 + $0x24] sm:$0x1]
    %v676 = vsel %vm371, %v525, %v675
    %677 = vst [vmem:[%s368 + $0x24] sm:$0x1] %v676
    %v678 = vld [vmem:[%s368 + $0x28] sm:$0xf]
    %v679 = vsel %vm647, %v532, %v678
    %680 = vst [vmem:[%s368 + $0x28] sm:$0xf] %v679
    %v681 = vld [vmem:[%s368 + $0x2c] sm:$0x1]
    %v682 = vsel %vm371, %v533, %v681
    %683 = vst [vmem:[%s368 + $0x2c] sm:$0x1] %v682
    %v684 = vld [vmem:[%s368 + $0x30] sm:$0xf]
    %v685 = vsel %vm647, %v540, %v684
    %686 = vst [vmem:[%s368 + $0x30] sm:$0xf] %v685
    %v687 = vld [vmem:[%s368 + $0x34] sm:$0x1]
    %v688 = vsel %vm371, %v541, %v687
    %689 = vst [vmem:[%s368 + $0x34] sm:$0x1] %v688
    %v690 = vld [vmem:[%s368 + $0x38] sm:$0xf]
    %v691 = vsel %vm647, %v548, %v690
    %692 = vst [vmem:[%s368 + $0x38] sm:$0xf] %v691
    %v693 = vld [vmem:[%s368 + $0x3c] sm:$0x1]
    %v694 = vsel %vm371, %v549, %v693
    %695 = vst [vmem:[%s368 + $0x3c] sm:$0x1] %v694
    %v696 = vld [vmem:[%s368 + $0x50] sm:$0xf]
    %v697 = vsel %vm647, %v556, %v696
    %698 = vst [vmem:[%s368 + $0x50] sm:$0xf] %v697
    %v699 = vld [vmem:[%s368 + $0x54] sm:$0x1]
    %v700 = vsel %vm371, %v557, %v699
    %701 = vst [vmem:[%s368 + $0x54] sm:$0x1] %v700
    %v702 = vld [vmem:[%s368 + $0x58] sm:$0xf]
    %v703 = vsel %vm647, %v564, %v702
    %704 = vst [vmem:[%s368 + $0x58] sm:$0xf] %v703
    %v705 = vld [vmem:[%s368 + $0x5c] sm:$0x1]
    %v706 = vsel %vm371, %v565, %v705
    %707 = vst [vmem:[%s368 + $0x5c] sm:$0x1] %v706
    %v708 = vld [vmem:[%s368 + $0x60] sm:$0xf]
    %v709 = vsel %vm647, %v572, %v708
    %710 = vst [vmem:[%s368 + $0x60] sm:$0xf] %v709
    %v711 = vld [vmem:[%s368 + $0x64] sm:$0x1]
    %v712 = vsel %vm371, %v573, %v711
    %713 = vst [vmem:[%s368 + $0x64] sm:$0x1] %v712
    %v714 = vld [vmem:[%s368 + $0x68] sm:$0xf]
    %v715 = vsel %vm647, %v580, %v714
    %716 = vst [vmem:[%s368 + $0x68] sm:$0xf] %v715
    %v717 = vld [vmem:[%s368 + $0x6c] sm:$0x1]
    %v718 = vsel %vm371, %v581, %v717
    %719 = vst [vmem:[%s368 + $0x6c] sm:$0x1] %v718
    %v720 = vld [vmem:[%s368 + $0x70] sm:$0xf]
    %v721 = vsel %vm647, %v588, %v720
    %722 = vst [vmem:[%s368 + $0x70] sm:$0xf] %v721
    %v723 = vld [vmem:[%s368 + $0x74] sm:$0x1]
    %v724 = vsel %vm371, %v589, %v723
    %725 = vst [vmem:[%s368 + $0x74] sm:$0x1] %v724
    %v726 = vld [vmem:[%s368 + $0x78] sm:$0xf]
    %v727 = vsel %vm647, %v596, %v726
    %728 = vst [vmem:[%s368 + $0x78] sm:$0xf] %v727
    %v729 = vld [vmem:[%s368 + $0x7c] sm:$0x1]
    %v730 = vsel %vm371, %v597, %v729
    %731 = vst [vmem:[%s368 + $0x7c] sm:$0x1] %v730
    %v732 = vld [vmem:[%s368 + $0x80] sm:$0xf]
    %v733 = vsel %vm647, %v604, %v732
    %734 = vst [vmem:[%s368 + $0x80] sm:$0xf] %v733
    %v735 = vld [vmem:[%s368 + $0x84] sm:$0x1]
    %v736 = vsel %vm371, %v605, %v735
    %737 = vst [vmem:[%s368 + $0x84] sm:$0x1] %v736
    %v738 = vld [vmem:[%s368 + $0x88] sm:$0xf]
    %v739 = vsel %vm647, %v612, %v738
    %740 = vst [vmem:[%s368 + $0x88] sm:$0xf] %v739
    %v741 = vld [vmem:[%s368 + $0x8c] sm:$0x1]
    %v742 = vsel %vm371, %v613, %v741
    %743 = vst [vmem:[%s368 + $0x8c] sm:$0x1] %v742
    %v744 = vld [vmem:[#allocation2] sm:$0xf]
    %v745 = vld [vmem:[#allocation2 + $0x8] sm:$0xf]
    %v746 = vld [vmem:[#allocation2 + $0x10] sm:$0xf]
    %v747 = vld [vmem:[#allocation2 + $0x18] sm:$0xf]
    %v748 = vld [vmem:[#allocation2 + $0x20] sm:$0xf]
    %v749 = vld [vmem:[#allocation2 + $0x28] sm:$0xf]
    %v750 = vld [vmem:[#allocation2 + $0x30] sm:$0xf]
    %v751 = vld [vmem:[#allocation2 + $0x38] sm:$0xf]
    %v752 = vld [vmem:[#allocation2 + $0x50] sm:$0xf]
    %v753 = vld [vmem:[#allocation2 + $0x58] sm:$0xf]
    %v754 = vld [vmem:[#allocation2 + $0x60] sm:$0xf]
    %v755 = vld [vmem:[#allocation2 + $0x68] sm:$0xf]
    %v756 = vld [vmem:[#allocation2 + $0x70] sm:$0xf]
    %v757 = vld [vmem:[#allocation2 + $0x78] sm:$0xf]
    %v758 = vld [vmem:[#allocation2 + $0x80] sm:$0xf]
    %v759 = vld [vmem:[#allocation2 + $0x88] sm:$0xf]
    %760 = vst [vmem:[#allocation3] sm:$0xf] %v744
    %761 = vst [vmem:[#allocation3 + $0x24] sm:$0xf] %v745
    %762 = vst [vmem:[#allocation3 + $0x48] sm:$0xf] %v746
    %763 = vst [vmem:[#allocation3 + $0x6c] sm:$0xf] %v747
    %764 = vst [vmem:[#allocation3 + $0x90] sm:$0xf] %v748
    %765 = vst [vmem:[#allocation3 + $0xb4] sm:$0xf] %v749
    %766 = vst [vmem:[#allocation3 + $0xd8] sm:$0xf] %v750
    %767 = vst [vmem:[#allocation3 + $0xfc] sm:$0xf] %v751
    %768 = vst [vmem:[#allocation3 + $0x120] sm:$0xf] %v752
    %769 = vst [vmem:[#allocation3 + $0x144] sm:$0xf] %v753
    %770 = vst [vmem:[#allocation3 + $0x168] sm:$0xf] %v754
    %771 = vst [vmem:[#allocation3 + $0x18c] sm:$0xf] %v755
    %772 = vst [vmem:[#allocation3 + $0x1b0] sm:$0xf] %v756
    %773 = vst [vmem:[#allocation3 + $0x1d4] sm:$0xf] %v757
    %774 = vst [vmem:[#allocation3 + $0x1f8] sm:$0xf] %v758
    %775 = vst [vmem:[#allocation3 + $0x21c] sm:$0xf] %v759
    %v776 = vld [vmem:[#allocation2] sm:$0xf]
    %v777 = vld [vmem:[#allocation2 + $0x4] sm:$0x1]
    %v778 = vld [vmem:[#allocation2 + $0x8] sm:$0xf]
    %v779 = vld [vmem:[#allocation2 + $0xc] sm:$0x1]
    %v780 = vld [vmem:[#allocation2 + $0x10] sm:$0xf]
    %v781 = vld [vmem:[#allocation2 + $0x14] sm:$0x1]
    %v782 = vld [vmem:[#allocation2 + $0x18] sm:$0xf]
    %v783 = vld [vmem:[#allocation2 + $0x1c] sm:$0x1]
    %v784 = vld [vmem:[#allocation2 + $0x20] sm:$0xf]
    %v785 = vld [vmem:[#allocation2 + $0x24] sm:$0x1]
    %v786 = vld [vmem:[#allocation2 + $0x28] sm:$0xf]
    %v787 = vld [vmem:[#allocation2 + $0x2c] sm:$0x1]
    %v788 = vld [vmem:[#allocation2 + $0x30] sm:$0xf]
    %v789 = vld [vmem:[#allocation2 + $0x34] sm:$0x1]
    %v790 = vld [vmem:[#allocation2 + $0x38] sm:$0xf]
    %v791 = vld [vmem:[#allocation2 + $0x3c] sm:$0x1]
    %v792 = vld [vmem:[#allocation2 + $0x50] sm:$0xf]
    %v793 = vld [vmem:[#allocation2 + $0x54] sm:$0x1]
    %v794 = vld [vmem:[#allocation2 + $0x58] sm:$0xf]
    %v795 = vld [vmem:[#allocation2 + $0x5c] sm:$0x1]
    %v796 = vld [vmem:[#allocation2 + $0x60] sm:$0xf]
    %v797 = vld [vmem:[#allocation2 + $0x64] sm:$0x1]
    %v798 = vld [vmem:[#allocation2 + $0x68] sm:$0xf]
    %v799 = vld [vmem:[#allocation2 + $0x6c] sm:$0x1]
    %v800 = vld [vmem:[#allocation2 + $0x70] sm:$0xf]
    %v801 = vld [vmem:[#allocation2 + $0x74] sm:$0x1]
    %v802 = vld [vmem:[#allocation2 + $0x78] sm:$0xf]
    %v803 = vld [vmem:[#allocation2 + $0x7c] sm:$0x1]
    %v804 = vld [vmem:[#allocation2 + $0x80] sm:$0xf]
    %v805 = vld [vmem:[#allocation2 + $0x84] sm:$0x1]
    %v806 = vld [vmem:[#allocation2 + $0x88] sm:$0xf]
    %v807 = vld [vmem:[#allocation2 + $0x8c] sm:$0x1]
    %vm808 = vsmask.f32 3328
    %vm809 = vsmask.f32 7440
    %vm810 = vmor %vm808, %vm809
    %v812 = vshrl.u32 %v776, 16
    %v814 = vrot.slane %v812, 4
    %v815 = vshll.u32 %v776, 16
    %v817 = vrot.slane %v815, 5
    %v818 = vor.u32 %v814, %v817
    %v819 = vrot.slane %v818, 4
    %v821 = vshll.u32 %v777, 16
    %v823 = vrot.slane %v821, 5
    %v824 = vsel %vm810, %v819, %v823
    %v826 = vshrl.u32 %v778, 16
    %v828 = vrot.slane %v826, 4
    %v829 = vshll.u32 %v778, 16
    %v831 = vrot.slane %v829, 5
    %v832 = vor.u32 %v828, %v831
    %v833 = vrot.slane %v832, 4
    %v835 = vshll.u32 %v779, 16
    %v837 = vrot.slane %v835, 5
    %v838 = vsel %vm810, %v833, %v837
    %v840 = vshrl.u32 %v780, 16
    %v842 = vrot.slane %v840, 4
    %v843 = vshll.u32 %v780, 16
    %v845 = vrot.slane %v843, 5
    %v846 = vor.u32 %v842, %v845
    %v847 = vrot.slane %v846, 4
    %v849 = vshll.u32 %v781, 16
    %v851 = vrot.slane %v849, 5
    %v852 = vsel %vm810, %v847, %v851
    %v854 = vshrl.u32 %v782, 16
    %v856 = vrot.slane %v854, 4
    %v857 = vshll.u32 %v782, 16
    %v859 = vrot.slane %v857, 5
    %v860 = vor.u32 %v856, %v859
    %v861 = vrot.slane %v860, 4
    %v863 = vshll.u32 %v783, 16
    %v865 = vrot.slane %v863, 5
    %v866 = vsel %vm810, %v861, %v865
    %v868 = vshrl.u32 %v784, 16
    %v870 = vrot.slane %v868, 4
    %v871 = vshll.u32 %v784, 16
    %v873 = vrot.slane %v871, 5
    %v874 = vor.u32 %v870, %v873
    %v875 = vrot.slane %v874, 4
    %v877 = vshll.u32 %v785, 16
    %v879 = vrot.slane %v877, 5
    %v880 = vsel %vm810, %v875, %v879
    %v882 = vshrl.u32 %v786, 16
    %v884 = vrot.slane %v882, 4
    %v885 = vshll.u32 %v786, 16
    %v887 = vrot.slane %v885, 5
    %v888 = vor.u32 %v884, %v887
    %v889 = vrot.slane %v888, 4
    %v891 = vshll.u32 %v787, 16
    %v893 = vrot.slane %v891, 5
    %v894 = vsel %vm810, %v889, %v893
    %v896 = vshrl.u32 %v788, 16
    %v898 = vrot.slane %v896, 4
    %v899 = vshll.u32 %v788, 16
    %v901 = vrot.slane %v899, 5
    %v902 = vor.u32 %v898, %v901
    %v903 = vrot.slane %v902, 4
    %v905 = vshll.u32 %v789, 16
    %v907 = vrot.slane %v905, 5
    %v908 = vsel %vm810, %v903, %v907
    %v910 = vshrl.u32 %v790, 16
    %v912 = vrot.slane %v910, 4
    %v913 = vshll.u32 %v790, 16
    %v915 = vrot.slane %v913, 5
    %v916 = vor.u32 %v912, %v915
    %v917 = vrot.slane %v916, 4
    %v919 = vshll.u32 %v791, 16
    %v921 = vrot.slane %v919, 5
    %v922 = vsel %vm810, %v917, %v921
    %v924 = vshrl.u32 %v792, 16
    %v926 = vrot.slane %v924, 4
    %v927 = vshll.u32 %v792, 16
    %v929 = vrot.slane %v927, 5
    %v930 = vor.u32 %v926, %v929
    %v931 = vrot.slane %v930, 4
    %v933 = vshll.u32 %v793, 16
    %v935 = vrot.slane %v933, 5
    %v936 = vsel %vm810, %v931, %v935
    %v938 = vshrl.u32 %v794, 16
    %v940 = vrot.slane %v938, 4
    %v941 = vshll.u32 %v794, 16
    %v943 = vrot.slane %v941, 5
    %v944 = vor.u32 %v940, %v943
    %v945 = vrot.slane %v944, 4
    %v947 = vshll.u32 %v795, 16
    %v949 = vrot.slane %v947, 5
    %v950 = vsel %vm810, %v945, %v949
    %v952 = vshrl.u32 %v796, 16
    %v954 = vrot.slane %v952, 4
    %v955 = vshll.u32 %v796, 16
    %v957 = vrot.slane %v955, 5
    %v958 = vor.u32 %v954, %v957
    %v959 = vrot.slane %v958, 4
    %v961 = vshll.u32 %v797, 16
    %v963 = vrot.slane %v961, 5
    %v964 = vsel %vm810, %v959, %v963
    %v966 = vshrl.u32 %v798, 16
    %v968 = vrot.slane %v966, 4
    %v969 = vshll.u32 %v798, 16
    %v971 = vrot.slane %v969, 5
    %v972 = vor.u32 %v968, %v971
    %v973 = vrot.slane %v972, 4
    %v975 = vshll.u32 %v799, 16
    %v977 = vrot.slane %v975, 5
    %v978 = vsel %vm810, %v973, %v977
    %v980 = vshrl.u32 %v800, 16
    %v982 = vrot.slane %v980, 4
    %v983 = vshll.u32 %v800, 16
    %v985 = vrot.slane %v983, 5
    %v986 = vor.u32 %v982, %v985
    %v987 = vrot.slane %v986, 4
    %v989 = vshll.u32 %v801, 16
    %v991 = vrot.slane %v989, 5
    %v992 = vsel %vm810, %v987, %v991
    %v994 = vshrl.u32 %v802, 16
    %v996 = vrot.slane %v994, 4
    %v997 = vshll.u32 %v802, 16
    %v999 = vrot.slane %v997, 5
    %v1000 = vor.u32 %v996, %v999
    %v1001 = vrot.slane %v1000, 4
    %v1003 = vshll.u32 %v803, 16
    %v1005 = vrot.slane %v1003, 5
    %v1006 = vsel %vm810, %v1001, %v1005
    %v1008 = vshrl.u32 %v804, 16
    %v1010 = vrot.slane %v1008, 4
    %v1011 = vshll.u32 %v804, 16
    %v1013 = vrot.slane %v1011, 5
    %v1014 = vor.u32 %v1010, %v1013
    %v1015 = vrot.slane %v1014, 4
    %v1017 = vshll.u32 %v805, 16
    %v1019 = vrot.slane %v1017, 5
    %v1020 = vsel %vm810, %v1015, %v1019
    %v1022 = vshrl.u32 %v806, 16
    %v1024 = vrot.slane %v1022, 4
    %v1025 = vshll.u32 %v806, 16
    %v1027 = vrot.slane %v1025, 5
    %v1028 = vor.u32 %v1024, %v1027
    %v1029 = vrot.slane %v1028, 4
    %v1031 = vshll.u32 %v807, 16
    %v1033 = vrot.slane %v1031, 5
    %v1034 = vsel %vm810, %v1029, %v1033
    %1051 = vst [vmem:[#allocation3 + $0x4] sm:$0xf] %v824
    %1052 = vst [vmem:[#allocation3 + $0x28] sm:$0xf] %v838
    %1053 = vst [vmem:[#allocation3 + $0x4c] sm:$0xf] %v852
    %1054 = vst [vmem:[#allocation3 + $0x70] sm:$0xf] %v866
    %1055 = vst [vmem:[#allocation3 + $0x94] sm:$0xf] %v880
    %1056 = vst [vmem:[#allocation3 + $0xb8] sm:$0xf] %v894
    %1057 = vst [vmem:[#allocation3 + $0xdc] sm:$0xf] %v908
    %1058 = vst [vmem:[#allocation3 + $0x100] sm:$0xf] %v922
    %1059 = vst [vmem:[#allocation3 + $0x124] sm:$0xf] %v936
    %1060 = vst [vmem:[#allocation3 + $0x148] sm:$0xf] %v950
    %1061 = vst [vmem:[#allocation3 + $0x16c] sm:$0xf] %v964
    %1062 = vst [vmem:[#allocation3 + $0x190] sm:$0xf] %v978
    %1063 = vst [vmem:[#allocation3 + $0x1b4] sm:$0xf] %v992
    %1064 = vst [vmem:[#allocation3 + $0x1d8] sm:$0xf] %v1006
    %1065 = vst [vmem:[#allocation3 + $0x1fc] sm:$0xf] %v1020
    %1066 = vst [vmem:[#allocation3 + $0x220] sm:$0xf] %v1034
    %v1067 = vld [vmem:[#allocation2] sm:$0xe]
    %v1068 = vld [vmem:[#allocation2 + $0x4] sm:$0x1]
    %v1069 = vld [vmem:[#allocation2 + $0x8] sm:$0xe]
    %v1070 = vld [vmem:[#allocation2 + $0xc] sm:$0x1]
    %v1071 = vld [vmem:[#allocation2 + $0x10] sm:$0xe]
    %v1072 = vld [vmem:[#allocation2 + $0x14] sm:$0x1]
    %v1073 = vld [vmem:[#allocation2 + $0x18] sm:$0xe]
    %v1074 = vld [vmem:[#allocation2 + $0x1c] sm:$0x1]
    %v1075 = vld [vmem:[#allocation2 + $0x20] sm:$0xe]
    %v1076 = vld [vmem:[#allocation2 + $0x24] sm:$0x1]
    %v1077 = vld [vmem:[#allocation2 + $0x28] sm:$0xe]
    %v1078 = vld [vmem:[#allocation2 + $0x2c] sm:$0x1]
    %v1079 = vld [vmem:[#allocation2 + $0x30] sm:$0xe]
    %v1080 = vld [vmem:[#allocation2 + $0x34] sm:$0x1]
    %v1081 = vld [vmem:[#allocation2 + $0x38] sm:$0xe]
    %v1082 = vld [vmem:[#allocation2 + $0x3c] sm:$0x1]
    %v1083 = vld [vmem:[#allocation2 + $0x50] sm:$0xe]
    %v1084 = vld [vmem:[#allocation2 + $0x54] sm:$0x1]
    %v1085 = vld [vmem:[#allocation2 + $0x58] sm:$0xe]
    %v1086 = vld [vmem:[#allocation2 + $0x5c] sm:$0x1]
    %v1087 = vld [vmem:[#allocation2 + $0x60] sm:$0xe]
    %v1088 = vld [vmem:[#allocation2 + $0x64] sm:$0x1]
    %v1089 = vld [vmem:[#allocation2 + $0x68] sm:$0xe]
    %v1090 = vld [vmem:[#allocation2 + $0x6c] sm:$0x1]
    %v1091 = vld [vmem:[#allocation2 + $0x70] sm:$0xe]
    %v1092 = vld [vmem:[#allocation2 + $0x74] sm:$0x1]
    %v1093 = vld [vmem:[#allocation2 + $0x78] sm:$0xe]
    %v1094 = vld [vmem:[#allocation2 + $0x7c] sm:$0x1]
    %v1095 = vld [vmem:[#allocation2 + $0x80] sm:$0xe]
    %v1096 = vld [vmem:[#allocation2 + $0x84] sm:$0x1]
    %v1097 = vld [vmem:[#allocation2 + $0x88] sm:$0xe]
    %v1098 = vld [vmem:[#allocation2 + $0x8c] sm:$0x1]
    %vm1131 = vcmask 1042432
    %vm1132 = vcmask 1046532
    %vm1133 = vmor %vm1131, %vm1132
    %v1134 = vrot.slane %v1067, 5
    %v1135 = vrot.slane %v1134, 4
    %v1136 = vrot.slane %v1068, 5
    %v1137 = vsel %vm1133, %v1135, %v1136
    %v1138 = vrot.slane %v1069, 5
    %v1139 = vrot.slane %v1138, 4
    %v1140 = vrot.slane %v1070, 5
    %v1141 = vsel %vm1133, %v1139, %v1140
    %v1142 = vrot.slane %v1071, 5
    %v1143 = vrot.slane %v1142, 4
    %v1144 = vrot.slane %v1072, 5
    %v1145 = vsel %vm1133, %v1143, %v1144
    %v1146 = vrot.slane %v1073, 5
    %v1147 = vrot.slane %v1146, 4
    %v1148 = vrot.slane %v1074, 5
    %v1149 = vsel %vm1133, %v1147, %v1148
    %v1150 = vrot.slane %v1075, 5
    %v1151 = vrot.slane %v1150, 4
    %v1152 = vrot.slane %v1076, 5
    %v1153 = vsel %vm1133, %v1151, %v1152
    %v1154 = vrot.slane %v1077, 5
    %v1155 = vrot.slane %v1154, 4
    %v1156 = vrot.slane %v1078, 5
    %v1157 = vsel %vm1133, %v1155, %v1156
    %v1158 = vrot.slane %v1079, 5
    %v1159 = vrot.slane %v1158, 4
    %v1160 = vrot.slane %v1080, 5
    %v1161 = vsel %vm1133, %v1159, %v1160
    %v1162 = vrot.slane %v1081, 5
    %v1163 = vrot.slane %v1162, 4
    %v1164 = vrot.slane %v1082, 5
    %v1165 = vsel %vm1133, %v1163, %v1164
    %v1166 = vrot.slane %v1083, 5
    %v1167 = vrot.slane %v1166, 4
    %v1168 = vrot.slane %v1084, 5
    %v1169 = vsel %vm1133, %v1167, %v1168
    %v1170 = vrot.slane %v1085, 5
    %v1171 = vrot.slane %v1170, 4
    %v1172 = vrot.slane %v1086, 5
    %v1173 = vsel %vm1133, %v1171, %v1172
    %v1174 = vrot.slane %v1087, 5
    %v1175 = vrot.slane %v1174, 4
    %v1176 = vrot.slane %v1088, 5
    %v1177 = vsel %vm1133, %v1175, %v1176
    %v1178 = vrot.slane %v1089, 5
    %v1179 = vrot.slane %v1178, 4
    %v1180 = vrot.slane %v1090, 5
    %v1181 = vsel %vm1133, %v1179, %v1180
    %v1182 = vrot.slane %v1091, 5
    %v1183 = vrot.slane %v1182, 4
    %v1184 = vrot.slane %v1092, 5
    %v1185 = vsel %vm1133, %v1183, %v1184
    %v1186 = vrot.slane %v1093, 5
    %v1187 = vrot.slane %v1186, 4
    %v1188 = vrot.slane %v1094, 5
    %v1189 = vsel %vm1133, %v1187, %v1188
    %v1190 = vrot.slane %v1095, 5
    %v1191 = vrot.slane %v1190, 4
    %v1192 = vrot.slane %v1096, 5
    %v1193 = vsel %vm1133, %v1191, %v1192
    %v1194 = vrot.slane %v1097, 5
    %v1195 = vrot.slane %v1194, 4
    %v1196 = vrot.slane %v1098, 5
    %v1197 = vsel %vm1133, %v1195, %v1196
    %1214 = vst [vmem:[#allocation3 + $0x8] sm:$0xf] %v1137
    %1215 = vst [vmem:[#allocation3 + $0x2c] sm:$0xf] %v1141
    %1216 = vst [vmem:[#allocation3 + $0x50] sm:$0xf] %v1145
    %1217 = vst [vmem:[#allocation3 + $0x74] sm:$0xf] %v1149
    %1218 = vst [vmem:[#allocation3 + $0x98] sm:$0xf] %v1153
    %1219 = vst [vmem:[#allocation3 + $0xbc] sm:$0xf] %v1157
    %1220 = vst [vmem:[#allocation3 + $0xe0] sm:$0xf] %v1161
    %1221 = vst [vmem:[#allocation3 + $0x104] sm:$0xf] %v1165
    %1222 = vst [vmem:[#allocation3 + $0x128] sm:$0xf] %v1169
    %1223 = vst [vmem:[#allocation3 + $0x14c] sm:$0xf] %v1173
    %1224 = vst [vmem:[#allocation3 + $0x170] sm:$0xf] %v1177
    %1225 = vst [vmem:[#allocation3 + $0x194] sm:$0xf] %v1181
    %1226 = vst [vmem:[#allocation3 + $0x1b8] sm:$0xf] %v1185
    %1227 = vst [vmem:[#allocation3 + $0x1dc] sm:$0xf] %v1189
    %1228 = vst [vmem:[#allocation3 + $0x200] sm:$0xf] %v1193
    %1229 = vst [vmem:[#allocation3 + $0x224] sm:$0xf] %v1197
    %v1230 = vld [vmem:[%s368] sm:$0xf]
    %v1231 = vld [vmem:[%s368 + $0x8] sm:$0xf]
    %v1232 = vld [vmem:[%s368 + $0x10] sm:$0xf]
    %v1233 = vld [vmem:[%s368 + $0x18] sm:$0xf]
    %v1234 = vld [vmem:[%s368 + $0x20] sm:$0xf]
    %v1235 = vld [vmem:[%s368 + $0x28] sm:$0xf]
    %v1236 = vld [vmem:[%s368 + $0x30] sm:$0xf]
    %v1237 = vld [vmem:[%s368 + $0x38] sm:$0xf]
    %v1238 = vld [vmem:[%s368 + $0x50] sm:$0xf]
    %v1239 = vld [vmem:[%s368 + $0x58] sm:$0xf]
    %v1240 = vld [vmem:[%s368 + $0x60] sm:$0xf]
    %v1241 = vld [vmem:[%s368 + $0x68] sm:$0xf]
    %v1242 = vld [vmem:[%s368 + $0x70] sm:$0xf]
    %v1243 = vld [vmem:[%s368 + $0x78] sm:$0xf]
    %v1244 = vld [vmem:[%s368 + $0x80] sm:$0xf]
    %v1245 = vld [vmem:[%s368 + $0x88] sm:$0xf]
    %1246 = vst [vmem:[#allocation3 + $0xc] sm:$0xf] %v1230
    %1247 = vst [vmem:[#allocation3 + $0x30] sm:$0xf] %v1231
    %1248 = vst [vmem:[#allocation3 + $0x54] sm:$0xf] %v1232
    %1249 = vst [vmem:[#allocation3 + $0x78] sm:$0xf] %v1233
    %1250 = vst [vmem:[#allocation3 + $0x9c] sm:$0xf] %v1234
    %1251 = vst [vmem:[#allocation3 + $0xc0] sm:$0xf] %v1235
    %1252 = vst [vmem:[#allocation3 + $0xe4] sm:$0xf] %v1236
    %1253 = vst [vmem:[#allocation3 + $0x108] sm:$0xf] %v1237
    %1254 = vst [vmem:[#allocation3 + $0x12c] sm:$0xf] %v1238
    %1255 = vst [vmem:[#allocation3 + $0x150] sm:$0xf] %v1239
    %1256 = vst [vmem:[#allocation3 + $0x174] sm:$0xf] %v1240
    %1257 = vst [vmem:[#allocation3 + $0x198] sm:$0xf] %v1241
    %1258 = vst [vmem:[#allocation3 + $0x1bc] sm:$0xf] %v1242
    %1259 = vst [vmem:[#allocation3 + $0x1e0] sm:$0xf] %v1243
    %1260 = vst [vmem:[#allocation3 + $0x204] sm:$0xf] %v1244
    %1261 = vst [vmem:[#allocation3 + $0x228] sm:$0xf] %v1245
    %v1262 = vld [vmem:[%s368] sm:$0xf]
    %v1263 = vld [vmem:[%s368 + $0x4] sm:$0x1]
    %v1264 = vld [vmem:[%s368 + $0x8] sm:$0xf]
    %v1265 = vld [vmem:[%s368 + $0xc] sm:$0x1]
    %v1266 = vld [vmem:[%s368 + $0x10] sm:$0xf]
    %v1267 = vld [vmem:[%s368 + $0x14] sm:$0x1]
    %v1268 = vld [vmem:[%s368 + $0x18] sm:$0xf]
    %v1269 = vld [vmem:[%s368 + $0x1c] sm:$0x1]
    %v1270 = vld [vmem:[%s368 + $0x20] sm:$0xf]
    %v1271 = vld [vmem:[%s368 + $0x24] sm:$0x1]
    %v1272 = vld [vmem:[%s368 + $0x28] sm:$0xf]
    %v1273 = vld [vmem:[%s368 + $0x2c] sm:$0x1]
    %v1274 = vld [vmem:[%s368 + $0x30] sm:$0xf]
    %v1275 = vld [vmem:[%s368 + $0x34] sm:$0x1]
    %v1276 = vld [vmem:[%s368 + $0x38] sm:$0xf]
    %v1277 = vld [vmem:[%s368 + $0x3c] sm:$0x1]
    %v1278 = vld [vmem:[%s368 + $0x50] sm:$0xf]
    %v1279 = vld [vmem:[%s368 + $0x54] sm:$0x1]
    %v1280 = vld [vmem:[%s368 + $0x58] sm:$0xf]
    %v1281 = vld [vmem:[%s368 + $0x5c] sm:$0x1]
    %v1282 = vld [vmem:[%s368 + $0x60] sm:$0xf]
    %v1283 = vld [vmem:[%s368 + $0x64] sm:$0x1]
    %v1284 = vld [vmem:[%s368 + $0x68] sm:$0xf]
    %v1285 = vld [vmem:[%s368 + $0x6c] sm:$0x1]
    %v1286 = vld [vmem:[%s368 + $0x70] sm:$0xf]
    %v1287 = vld [vmem:[%s368 + $0x74] sm:$0x1]
    %v1288 = vld [vmem:[%s368 + $0x78] sm:$0xf]
    %v1289 = vld [vmem:[%s368 + $0x7c] sm:$0x1]
    %v1290 = vld [vmem:[%s368 + $0x80] sm:$0xf]
    %v1291 = vld [vmem:[%s368 + $0x84] sm:$0x1]
    %v1292 = vld [vmem:[%s368 + $0x88] sm:$0xf]
    %v1293 = vld [vmem:[%s368 + $0x8c] sm:$0x1]
    %v1295 = vshrl.u32 %v1262, 16
    %v1297 = vrot.slane %v1295, 4
    %v1298 = vshll.u32 %v1262, 16
    %v1300 = vrot.slane %v1298, 5
    %v1301 = vor.u32 %v1297, %v1300
    %v1302 = vrot.slane %v1301, 4
    %v1304 = vshll.u32 %v1263, 16
    %v1306 = vrot.slane %v1304, 5
    %v1307 = vsel %vm810, %v1302, %v1306
    %v1309 = vshrl.u32 %v1264, 16
    %v1311 = vrot.slane %v1309, 4
    %v1312 = vshll.u32 %v1264, 16
    %v1314 = vrot.slane %v1312, 5
    %v1315 = vor.u32 %v1311, %v1314
    %v1316 = vrot.slane %v1315, 4
    %v1318 = vshll.u32 %v1265, 16
    %v1320 = vrot.slane %v1318, 5
    %v1321 = vsel %vm810, %v1316, %v1320
    %v1323 = vshrl.u32 %v1266, 16
    %v1325 = vrot.slane %v1323, 4
    %v1326 = vshll.u32 %v1266, 16
    %v1328 = vrot.slane %v1326, 5
    %v1329 = vor.u32 %v1325, %v1328
    %v1330 = vrot.slane %v1329, 4
    %v1332 = vshll.u32 %v1267, 16
    %v1334 = vrot.slane %v1332, 5
    %v1335 = vsel %vm810, %v1330, %v1334
    %v1337 = vshrl.u32 %v1268, 16
    %v1339 = vrot.slane %v1337, 4
    %v1340 = vshll.u32 %v1268, 16
    %v1342 = vrot.slane %v1340, 5
    %v1343 = vor.u32 %v1339, %v1342
    %v1344 = vrot.slane %v1343, 4
    %v1346 = vshll.u32 %v1269, 16
    %v1348 = vrot.slane %v1346, 5
    %v1349 = vsel %vm810, %v1344, %v1348
    %v1351 = vshrl.u32 %v1270, 16
    %v1353 = vrot.slane %v1351, 4
    %v1354 = vshll.u32 %v1270, 16
    %v1356 = vrot.slane %v1354, 5
    %v1357 = vor.u32 %v1353, %v1356
    %v1358 = vrot.slane %v1357, 4
    %v1360 = vshll.u32 %v1271, 16
    %v1362 = vrot.slane %v1360, 5
    %v1363 = vsel %vm810, %v1358, %v1362
    %v1365 = vshrl.u32 %v1272, 16
    %v1367 = vrot.slane %v1365, 4
    %v1368 = vshll.u32 %v1272, 16
    %v1370 = vrot.slane %v1368, 5
    %v1371 = vor.u32 %v1367, %v1370
    %v1372 = vrot.slane %v1371, 4
    %v1374 = vshll.u32 %v1273, 16
    %v1376 = vrot.slane %v1374, 5
    %v1377 = vsel %vm810, %v1372, %v1376
    %v1379 = vshrl.u32 %v1274, 16
    %v1381 = vrot.slane %v1379, 4
    %v1382 = vshll.u32 %v1274, 16
    %v1384 = vrot.slane %v1382, 5
    %v1385 = vor.u32 %v1381, %v1384
    %v1386 = vrot.slane %v1385, 4
    %v1388 = vshll.u32 %v1275, 16
    %v1390 = vrot.slane %v1388, 5
    %v1391 = vsel %vm810, %v1386, %v1390
    %v1393 = vshrl.u32 %v1276, 16
    %v1395 = vrot.slane %v1393, 4
    %v1396 = vshll.u32 %v1276, 16
    %v1398 = vrot.slane %v1396, 5
    %v1399 = vor.u32 %v1395, %v1398
    %v1400 = vrot.slane %v1399, 4
    %v1402 = vshll.u32 %v1277, 16
    %v1404 = vrot.slane %v1402, 5
    %v1405 = vsel %vm810, %v1400, %v1404
    %v1407 = vshrl.u32 %v1278, 16
    %v1409 = vrot.slane %v1407, 4
    %v1410 = vshll.u32 %v1278, 16
    %v1412 = vrot.slane %v1410, 5
    %v1413 = vor.u32 %v1409, %v1412
    %v1414 = vrot.slane %v1413, 4
    %v1416 = vshll.u32 %v1279, 16
    %v1418 = vrot.slane %v1416, 5
    %v1419 = vsel %vm810, %v1414, %v1418
    %v1421 = vshrl.u32 %v1280, 16
    %v1423 = vrot.slane %v1421, 4
    %v1424 = vshll.u32 %v1280, 16
    %v1426 = vrot.slane %v1424, 5
    %v1427 = vor.u32 %v1423, %v1426
    %v1428 = vrot.slane %v1427, 4
    %v1430 = vshll.u32 %v1281, 16
    %v1432 = vrot.slane %v1430, 5
    %v1433 = vsel %vm810, %v1428, %v1432
    %v1435 = vshrl.u32 %v1282, 16
    %v1437 = vrot.slane %v1435, 4
    %v1438 = vshll.u32 %v1282, 16
    %v1440 = vrot.slane %v1438, 5
    %v1441 = vor.u32 %v1437, %v1440
    %v1442 = vrot.slane %v1441, 4
    %v1444 = vshll.u32 %v1283, 16
    %v1446 = vrot.slane %v1444, 5
    %v1447 = vsel %vm810, %v1442, %v1446
    %v1449 = vshrl.u32 %v1284, 16
    %v1451 = vrot.slane %v1449, 4
    %v1452 = vshll.u32 %v1284, 16
    %v1454 = vrot.slane %v1452, 5
    %v1455 = vor.u32 %v1451, %v1454
    %v1456 = vrot.slane %v1455, 4
    %v1458 = vshll.u32 %v1285, 16
    %v1460 = vrot.slane %v1458, 5
    %v1461 = vsel %vm810, %v1456, %v1460
    %v1463 = vshrl.u32 %v1286, 16
    %v1465 = vrot.slane %v1463, 4
    %v1466 = vshll.u32 %v1286, 16
    %v1468 = vrot.slane %v1466, 5
    %v1469 = vor.u32 %v1465, %v1468
    %v1470 = vrot.slane %v1469, 4
    %v1472 = vshll.u32 %v1287, 16
    %v1474 = vrot.slane %v1472, 5
    %v1475 = vsel %vm810, %v1470, %v1474
    %v1477 = vshrl.u32 %v1288, 16
    %v1479 = vrot.slane %v1477, 4
    %v1480 = vshll.u32 %v1288, 16
    %v1482 = vrot.slane %v1480, 5
    %v1483 = vor.u32 %v1479, %v1482
    %v1484 = vrot.slane %v1483, 4
    %v1486 = vshll.u32 %v1289, 16
    %v1488 = vrot.slane %v1486, 5
    %v1489 = vsel %vm810, %v1484, %v1488
    %v1491 = vshrl.u32 %v1290, 16
    %v1493 = vrot.slane %v1491, 4
    %v1494 = vshll.u32 %v1290, 16
    %v1496 = vrot.slane %v1494, 5
    %v1497 = vor.u32 %v1493, %v1496
    %v1498 = vrot.slane %v1497, 4
    %v1500 = vshll.u32 %v1291, 16
    %v1502 = vrot.slane %v1500, 5
    %v1503 = vsel %vm810, %v1498, %v1502
    %v1505 = vshrl.u32 %v1292, 16
    %v1507 = vrot.slane %v1505, 4
    %v1508 = vshll.u32 %v1292, 16
    %v1510 = vrot.slane %v1508, 5
    %v1511 = vor.u32 %v1507, %v1510
    %v1512 = vrot.slane %v1511, 4
    %v1514 = vshll.u32 %v1293, 16
    %v1516 = vrot.slane %v1514, 5
    %v1517 = vsel %vm810, %v1512, %v1516
    %1534 = vst [vmem:[#allocation3 + $0x10] sm:$0xf] %v1307
    %1535 = vst [vmem:[#allocation3 + $0x34] sm:$0xf] %v1321
    %1536 = vst [vmem:[#allocation3 + $0x58] sm:$0xf] %v1335
    %1537 = vst [vmem:[#allocation3 + $0x7c] sm:$0xf] %v1349
    %1538 = vst [vmem:[#allocation3 + $0xa0] sm:$0xf] %v1363
    %1539 = vst [vmem:[#allocation3 + $0xc4] sm:$0xf] %v1377
    %1540 = vst [vmem:[#allocation3 + $0xe8] sm:$0xf] %v1391
    %1541 = vst [vmem:[#allocation3 + $0x10c] sm:$0xf] %v1405
    %1542 = vst [vmem:[#allocation3 + $0x130] sm:$0xf] %v1419
    %1543 = vst [vmem:[#allocation3 + $0x154] sm:$0xf] %v1433
    %1544 = vst [vmem:[#allocation3 + $0x178] sm:$0xf] %v1447
    %1545 = vst [vmem:[#allocation3 + $0x19c] sm:$0xf] %v1461
    %1546 = vst [vmem:[#allocation3 + $0x1c0] sm:$0xf] %v1475
    %1547 = vst [vmem:[#allocation3 + $0x1e4] sm:$0xf] %v1489
    %1548 = vst [vmem:[#allocation3 + $0x208] sm:$0xf] %v1503
    %1549 = vst [vmem:[#allocation3 + $0x22c] sm:$0xf] %v1517
    %v1550 = vld [vmem:[%s368] sm:$0xe]
    %v1551 = vld [vmem:[%s368 + $0x4] sm:$0x1]
    %v1552 = vld [vmem:[%s368 + $0x8] sm:$0xe]
    %v1553 = vld [vmem:[%s368 + $0xc] sm:$0x1]
    %v1554 = vld [vmem:[%s368 + $0x10] sm:$0xe]
    %v1555 = vld [vmem:[%s368 + $0x14] sm:$0x1]
    %v1556 = vld [vmem:[%s368 + $0x18] sm:$0xe]
    %v1557 = vld [vmem:[%s368 + $0x1c] sm:$0x1]
    %v1558 = vld [vmem:[%s368 + $0x20] sm:$0xe]
    %v1559 = vld [vmem:[%s368 + $0x24] sm:$0x1]
    %v1560 = vld [vmem:[%s368 + $0x28] sm:$0xe]
    %v1561 = vld [vmem:[%s368 + $0x2c] sm:$0x1]
    %v1562 = vld [vmem:[%s368 + $0x30] sm:$0xe]
    %v1563 = vld [vmem:[%s368 + $0x34] sm:$0x1]
    %v1564 = vld [vmem:[%s368 + $0x38] sm:$0xe]
    %v1565 = vld [vmem:[%s368 + $0x3c] sm:$0x1]
    %v1566 = vld [vmem:[%s368 + $0x50] sm:$0xe]
    %v1567 = vld [vmem:[%s368 + $0x54] sm:$0x1]
    %v1568 = vld [vmem:[%s368 + $0x58] sm:$0xe]
    %v1569 = vld [vmem:[%s368 + $0x5c] sm:$0x1]
    %v1570 = vld [vmem:[%s368 + $0x60] sm:$0xe]
    %v1571 = vld [vmem:[%s368 + $0x64] sm:$0x1]
    %v1572 = vld [vmem:[%s368 + $0x68] sm:$0xe]
    %v1573 = vld [vmem:[%s368 + $0x6c] sm:$0x1]
    %v1574 = vld [vmem:[%s368 + $0x70] sm:$0xe]
    %v1575 = vld [vmem:[%s368 + $0x74] sm:$0x1]
    %v1576 = vld [vmem:[%s368 + $0x78] sm:$0xe]
    %v1577 = vld [vmem:[%s368 + $0x7c] sm:$0x1]
    %v1578 = vld [vmem:[%s368 + $0x80] sm:$0xe]
    %v1579 = vld [vmem:[%s368 + $0x84] sm:$0x1]
    %v1580 = vld [vmem:[%s368 + $0x88] sm:$0xe]
    %v1581 = vld [vmem:[%s368 + $0x8c] sm:$0x1]
    %v1614 = vrot.slane %v1550, 5
    %v1615 = vrot.slane %v1614, 4
    %v1616 = vrot.slane %v1551, 5
    %v1617 = vsel %vm1133, %v1615, %v1616
    %v1618 = vrot.slane %v1552, 5
    %v1619 = vrot.slane %v1618, 4
    %v1620 = vrot.slane %v1553, 5
    %v1621 = vsel %vm1133, %v1619, %v1620
    %v1622 = vrot.slane %v1554, 5
    %v1623 = vrot.slane %v1622, 4
    %v1624 = vrot.slane %v1555, 5
    %v1625 = vsel %vm1133, %v1623, %v1624
    %v1626 = vrot.slane %v1556, 5
    %v1627 = vrot.slane %v1626, 4
    %v1628 = vrot.slane %v1557, 5
    %v1629 = vsel %vm1133, %v1627, %v1628
    %v1630 = vrot.slane %v1558, 5
    %v1631 = vrot.slane %v1630, 4
    %v1632 = vrot.slane %v1559, 5
    %v1633 = vsel %vm1133, %v1631, %v1632
    %v1634 = vrot.slane %v1560, 5
    %v1635 = vrot.slane %v1634, 4
    %v1636 = vrot.slane %v1561, 5
    %v1637 = vsel %vm1133, %v1635, %v1636
    %v1638 = vrot.slane %v1562, 5
    %v1639 = vrot.slane %v1638, 4
    %v1640 = vrot.slane %v1563, 5
    %v1641 = vsel %vm1133, %v1639, %v1640
    %v1642 = vrot.slane %v1564, 5
    %v1643 = vrot.slane %v1642, 4
    %v1644 = vrot.slane %v1565, 5
    %v1645 = vsel %vm1133, %v1643, %v1644
    %v1646 = vrot.slane %v1566, 5
    %v1647 = vrot.slane %v1646, 4
    %v1648 = vrot.slane %v1567, 5
    %v1649 = vsel %vm1133, %v1647, %v1648
    %v1650 = vrot.slane %v1568, 5
    %v1651 = vrot.slane %v1650, 4
    %v1652 = vrot.slane %v1569, 5
    %v1653 = vsel %vm1133, %v1651, %v1652
    %v1654 = vrot.slane %v1570, 5
    %v1655 = vrot.slane %v1654, 4
    %v1656 = vrot.slane %v1571, 5
    %v1657 = vsel %vm1133, %v1655, %v1656
    %v1658 = vrot.slane %v1572, 5
    %v1659 = vrot.slane %v1658, 4
    %v1660 = vrot.slane %v1573, 5
    %v1661 = vsel %vm1133, %v1659, %v1660
    %v1662 = vrot.slane %v1574, 5
    %v1663 = vrot.slane %v1662, 4
    %v1664 = vrot.slane %v1575, 5
    %v1665 = vsel %vm1133, %v1663, %v1664
    %v1666 = vrot.slane %v1576, 5
    %v1667 = vrot.slane %v1666, 4
    %v1668 = vrot.slane %v1577, 5
    %v1669 = vsel %vm1133, %v1667, %v1668
    %v1670 = vrot.slane %v1578, 5
    %v1671 = vrot.slane %v1670, 4
    %v1672 = vrot.slane %v1579, 5
    %v1673 = vsel %vm1133, %v1671, %v1672
    %v1674 = vrot.slane %v1580, 5
    %v1675 = vrot.slane %v1674, 4
    %v1676 = vrot.slane %v1581, 5
    %v1677 = vsel %vm1133, %v1675, %v1676
    %1694 = vst [vmem:[#allocation3 + $0x14] sm:$0xf] %v1617
    %1695 = vst [vmem:[#allocation3 + $0x38] sm:$0xf] %v1621
    %1696 = vst [vmem:[#allocation3 + $0x5c] sm:$0xf] %v1625
    %1697 = vst [vmem:[#allocation3 + $0x80] sm:$0xf] %v1629
    %1698 = vst [vmem:[#allocation3 + $0xa4] sm:$0xf] %v1633
    %1699 = vst [vmem:[#allocation3 + $0xc8] sm:$0xf] %v1637
    %1700 = vst [vmem:[#allocation3 + $0xec] sm:$0xf] %v1641
    %1701 = vst [vmem:[#allocation3 + $0x110] sm:$0xf] %v1645
    %1702 = vst [vmem:[#allocation3 + $0x134] sm:$0xf] %v1649
    %1703 = vst [vmem:[#allocation3 + $0x158] sm:$0xf] %v1653
    %1704 = vst [vmem:[#allocation3 + $0x17c] sm:$0xf] %v1657
    %1705 = vst [vmem:[#allocation3 + $0x1a0] sm:$0xf] %v1661
    %1706 = vst [vmem:[#allocation3 + $0x1c4] sm:$0xf] %v1665
    %1707 = vst [vmem:[#allocation3 + $0x1e8] sm:$0xf] %v1669
    %1708 = vst [vmem:[#allocation3 + $0x20c] sm:$0xf] %v1673
    %1709 = vst [vmem:[#allocation3 + $0x230] sm:$0xf] %v1677
    %s1710 = scalar_lea.vmem [#allocation2], 16
    %v1711 = vld [vmem:[%s1710] sm:$0xf]
    %v1712 = vld [vmem:[%s1710 + $0x8] sm:$0xf]
    %v1713 = vld [vmem:[%s1710 + $0x10] sm:$0xf]
    %v1714 = vld [vmem:[%s1710 + $0x18] sm:$0xf]
    %v1715 = vld [vmem:[%s1710 + $0x20] sm:$0xf]
    %v1716 = vld [vmem:[%s1710 + $0x28] sm:$0xf]
    %v1717 = vld [vmem:[%s1710 + $0x30] sm:$0xf]
    %v1718 = vld [vmem:[%s1710 + $0x38] sm:$0xf]
    %v1719 = vld [vmem:[%s1710 + $0x50] sm:$0xf]
    %v1720 = vld [vmem:[%s1710 + $0x58] sm:$0xf]
    %v1721 = vld [vmem:[%s1710 + $0x60] sm:$0xf]
    %v1722 = vld [vmem:[%s1710 + $0x68] sm:$0xf]
    %v1723 = vld [vmem:[%s1710 + $0x70] sm:$0xf]
    %v1724 = vld [vmem:[%s1710 + $0x78] sm:$0xf]
    %v1725 = vld [vmem:[%s1710 + $0x80] sm:$0xf]
    %v1726 = vld [vmem:[%s1710 + $0x88] sm:$0xf]
    %1727 = vst [vmem:[#allocation3 + $0x18] sm:$0xf] %v1711
    %1728 = vst [vmem:[#allocation3 + $0x3c] sm:$0xf] %v1712
    %1729 = vst [vmem:[#allocation3 + $0x60] sm:$0xf] %v1713
    %1730 = vst [vmem:[#allocation3 + $0x84] sm:$0xf] %v1714
    %1731 = vst [vmem:[#allocation3 + $0xa8] sm:$0xf] %v1715
    %1732 = vst [vmem:[#allocation3 + $0xcc] sm:$0xf] %v1716
    %1733 = vst [vmem:[#allocation3 + $0xf0] sm:$0xf] %v1717
    %1734 = vst [vmem:[#allocation3 + $0x114] sm:$0xf] %v1718
    %1735 = vst [vmem:[#allocation3 + $0x138] sm:$0xf] %v1719
    %1736 = vst [vmem:[#allocation3 + $0x15c] sm:$0xf] %v1720
    %1737 = vst [vmem:[#allocation3 + $0x180] sm:$0xf] %v1721
    %1738 = vst [vmem:[#allocation3 + $0x1a4] sm:$0xf] %v1722
    %1739 = vst [vmem:[#allocation3 + $0x1c8] sm:$0xf] %v1723
    %1740 = vst [vmem:[#allocation3 + $0x1ec] sm:$0xf] %v1724
    %1741 = vst [vmem:[#allocation3 + $0x210] sm:$0xf] %v1725
    %1742 = vst [vmem:[#allocation3 + $0x234] sm:$0xf] %v1726
    %v1743 = vld [vmem:[%s1710] sm:$0xf]
    %v1744 = vld [vmem:[%s1710 + $0x4] sm:$0x1]
    %v1745 = vld [vmem:[%s1710 + $0x8] sm:$0xf]
    %v1746 = vld [vmem:[%s1710 + $0xc] sm:$0x1]
    %v1747 = vld [vmem:[%s1710 + $0x10] sm:$0xf]
    %v1748 = vld [vmem:[%s1710 + $0x14] sm:$0x1]
    %v1749 = vld [vmem:[%s1710 + $0x18] sm:$0xf]
    %v1750 = vld [vmem:[%s1710 + $0x1c] sm:$0x1]
    %v1751 = vld [vmem:[%s1710 + $0x20] sm:$0xf]
    %v1752 = vld [vmem:[%s1710 + $0x24] sm:$0x1]
    %v1753 = vld [vmem:[%s1710 + $0x28] sm:$0xf]
    %v1754 = vld [vmem:[%s1710 + $0x2c] sm:$0x1]
    %v1755 = vld [vmem:[%s1710 + $0x30] sm:$0xf]
    %v1756 = vld [vmem:[%s1710 + $0x34] sm:$0x1]
    %v1757 = vld [vmem:[%s1710 + $0x38] sm:$0xf]
    %v1758 = vld [vmem:[%s1710 + $0x3c] sm:$0x1]
    %v1759 = vld [vmem:[%s1710 + $0x50] sm:$0xf]
    %v1760 = vld [vmem:[%s1710 + $0x54] sm:$0x1]
    %v1761 = vld [vmem:[%s1710 + $0x58] sm:$0xf]
    %v1762 = vld [vmem:[%s1710 + $0x5c] sm:$0x1]
    %v1763 = vld [vmem:[%s1710 + $0x60] sm:$0xf]
    %v1764 = vld [vmem:[%s1710 + $0x64] sm:$0x1]
    %v1765 = vld [vmem:[%s1710 + $0x68] sm:$0xf]
    %v1766 = vld [vmem:[%s1710 + $0x6c] sm:$0x1]
    %v1767 = vld [vmem:[%s1710 + $0x70] sm:$0xf]
    %v1768 = vld [vmem:[%s1710 + $0x74] sm:$0x1]
    %v1769 = vld [vmem:[%s1710 + $0x78] sm:$0xf]
    %v1770 = vld [vmem:[%s1710 + $0x7c] sm:$0x1]
    %v1771 = vld [vmem:[%s1710 + $0x80] sm:$0xf]
    %v1772 = vld [vmem:[%s1710 + $0x84] sm:$0x1]
    %v1773 = vld [vmem:[%s1710 + $0x88] sm:$0xf]
    %v1774 = vld [vmem:[%s1710 + $0x8c] sm:$0x1]
    %v1776 = vshrl.u32 %v1743, 16
    %v1778 = vrot.slane %v1776, 4
    %v1779 = vshll.u32 %v1743, 16
    %v1781 = vrot.slane %v1779, 5
    %v1782 = vor.u32 %v1778, %v1781
    %v1783 = vrot.slane %v1782, 4
    %v1785 = vshll.u32 %v1744, 16
    %v1787 = vrot.slane %v1785, 5
    %v1788 = vsel %vm810, %v1783, %v1787
    %v1790 = vshrl.u32 %v1745, 16
    %v1792 = vrot.slane %v1790, 4
    %v1793 = vshll.u32 %v1745, 16
    %v1795 = vrot.slane %v1793, 5
    %v1796 = vor.u32 %v1792, %v1795
    %v1797 = vrot.slane %v1796, 4
    %v1799 = vshll.u32 %v1746, 16
    %v1801 = vrot.slane %v1799, 5
    %v1802 = vsel %vm810, %v1797, %v1801
    %v1804 = vshrl.u32 %v1747, 16
    %v1806 = vrot.slane %v1804, 4
    %v1807 = vshll.u32 %v1747, 16
    %v1809 = vrot.slane %v1807, 5
    %v1810 = vor.u32 %v1806, %v1809
    %v1811 = vrot.slane %v1810, 4
    %v1813 = vshll.u32 %v1748, 16
    %v1815 = vrot.slane %v1813, 5
    %v1816 = vsel %vm810, %v1811, %v1815
    %v1818 = vshrl.u32 %v1749, 16
    %v1820 = vrot.slane %v1818, 4
    %v1821 = vshll.u32 %v1749, 16
    %v1823 = vrot.slane %v1821, 5
    %v1824 = vor.u32 %v1820, %v1823
    %v1825 = vrot.slane %v1824, 4
    %v1827 = vshll.u32 %v1750, 16
    %v1829 = vrot.slane %v1827, 5
    %v1830 = vsel %vm810, %v1825, %v1829
    %v1832 = vshrl.u32 %v1751, 16
    %v1834 = vrot.slane %v1832, 4
    %v1835 = vshll.u32 %v1751, 16
    %v1837 = vrot.slane %v1835, 5
    %v1838 = vor.u32 %v1834, %v1837
    %v1839 = vrot.slane %v1838, 4
    %v1841 = vshll.u32 %v1752, 16
    %v1843 = vrot.slane %v1841, 5
    %v1844 = vsel %vm810, %v1839, %v1843
    %v1846 = vshrl.u32 %v1753, 16
    %v1848 = vrot.slane %v1846, 4
    %v1849 = vshll.u32 %v1753, 16
    %v1851 = vrot.slane %v1849, 5
    %v1852 = vor.u32 %v1848, %v1851
    %v1853 = vrot.slane %v1852, 4
    %v1855 = vshll.u32 %v1754, 16
    %v1857 = vrot.slane %v1855, 5
    %v1858 = vsel %vm810, %v1853, %v1857
    %v1860 = vshrl.u32 %v1755, 16
    %v1862 = vrot.slane %v1860, 4
    %v1863 = vshll.u32 %v1755, 16
    %v1865 = vrot.slane %v1863, 5
    %v1866 = vor.u32 %v1862, %v1865
    %v1867 = vrot.slane %v1866, 4
    %v1869 = vshll.u32 %v1756, 16
    %v1871 = vrot.slane %v1869, 5
    %v1872 = vsel %vm810, %v1867, %v1871
    %v1874 = vshrl.u32 %v1757, 16
    %v1876 = vrot.slane %v1874, 4
    %v1877 = vshll.u32 %v1757, 16
    %v1879 = vrot.slane %v1877, 5
    %v1880 = vor.u32 %v1876, %v1879
    %v1881 = vrot.slane %v1880, 4
    %v1883 = vshll.u32 %v1758, 16
    %v1885 = vrot.slane %v1883, 5
    %v1886 = vsel %vm810, %v1881, %v1885
    %v1888 = vshrl.u32 %v1759, 16
    %v1890 = vrot.slane %v1888, 4
    %v1891 = vshll.u32 %v1759, 16
    %v1893 = vrot.slane %v1891, 5
    %v1894 = vor.u32 %v1890, %v1893
    %v1895 = vrot.slane %v1894, 4
    %v1897 = vshll.u32 %v1760, 16
    %v1899 = vrot.slane %v1897, 5
    %v1900 = vsel %vm810, %v1895, %v1899
    %v1902 = vshrl.u32 %v1761, 16
    %v1904 = vrot.slane %v1902, 4
    %v1905 = vshll.u32 %v1761, 16
    %v1907 = vrot.slane %v1905, 5
    %v1908 = vor.u32 %v1904, %v1907
    %v1909 = vrot.slane %v1908, 4
    %v1911 = vshll.u32 %v1762, 16
    %v1913 = vrot.slane %v1911, 5
    %v1914 = vsel %vm810, %v1909, %v1913
    %v1916 = vshrl.u32 %v1763, 16
    %v1918 = vrot.slane %v1916, 4
    %v1919 = vshll.u32 %v1763, 16
    %v1921 = vrot.slane %v1919, 5
    %v1922 = vor.u32 %v1918, %v1921
    %v1923 = vrot.slane %v1922, 4
    %v1925 = vshll.u32 %v1764, 16
    %v1927 = vrot.slane %v1925, 5
    %v1928 = vsel %vm810, %v1923, %v1927
    %v1930 = vshrl.u32 %v1765, 16
    %v1932 = vrot.slane %v1930, 4
    %v1933 = vshll.u32 %v1765, 16
    %v1935 = vrot.slane %v1933, 5
    %v1936 = vor.u32 %v1932, %v1935
    %v1937 = vrot.slane %v1936, 4
    %v1939 = vshll.u32 %v1766, 16
    %v1941 = vrot.slane %v1939, 5
    %v1942 = vsel %vm810, %v1937, %v1941
    %v1944 = vshrl.u32 %v1767, 16
    %v1946 = vrot.slane %v1944, 4
    %v1947 = vshll.u32 %v1767, 16
    %v1949 = vrot.slane %v1947, 5
    %v1950 = vor.u32 %v1946, %v1949
    %v1951 = vrot.slane %v1950, 4
    %v1953 = vshll.u32 %v1768, 16
    %v1955 = vrot.slane %v1953, 5
    %v1956 = vsel %vm810, %v1951, %v1955
    %v1958 = vshrl.u32 %v1769, 16
    %v1960 = vrot.slane %v1958, 4
    %v1961 = vshll.u32 %v1769, 16
    %v1963 = vrot.slane %v1961, 5
    %v1964 = vor.u32 %v1960, %v1963
    %v1965 = vrot.slane %v1964, 4
    %v1967 = vshll.u32 %v1770, 16
    %v1969 = vrot.slane %v1967, 5
    %v1970 = vsel %vm810, %v1965, %v1969
    %v1972 = vshrl.u32 %v1771, 16
    %v1974 = vrot.slane %v1972, 4
    %v1975 = vshll.u32 %v1771, 16
    %v1977 = vrot.slane %v1975, 5
    %v1978 = vor.u32 %v1974, %v1977
    %v1979 = vrot.slane %v1978, 4
    %v1981 = vshll.u32 %v1772, 16
    %v1983 = vrot.slane %v1981, 5
    %v1984 = vsel %vm810, %v1979, %v1983
    %v1986 = vshrl.u32 %v1773, 16
    %v1988 = vrot.slane %v1986, 4
    %v1989 = vshll.u32 %v1773, 16
    %v1991 = vrot.slane %v1989, 5
    %v1992 = vor.u32 %v1988, %v1991
    %v1993 = vrot.slane %v1992, 4
    %v1995 = vshll.u32 %v1774, 16
    %v1997 = vrot.slane %v1995, 5
    %v1998 = vsel %vm810, %v1993, %v1997
    %2015 = vst [vmem:[#allocation3 + $0x1c] sm:$0xf] %v1788
    %2016 = vst [vmem:[#allocation3 + $0x40] sm:$0xf] %v1802
    %2017 = vst [vmem:[#allocation3 + $0x64] sm:$0xf] %v1816
    %2018 = vst [vmem:[#allocation3 + $0x88] sm:$0xf] %v1830
    %2019 = vst [vmem:[#allocation3 + $0xac] sm:$0xf] %v1844
    %2020 = vst [vmem:[#allocation3 + $0xd0] sm:$0xf] %v1858
    %2021 = vst [vmem:[#allocation3 + $0xf4] sm:$0xf] %v1872
    %2022 = vst [vmem:[#allocation3 + $0x118] sm:$0xf] %v1886
    %2023 = vst [vmem:[#allocation3 + $0x13c] sm:$0xf] %v1900
    %2024 = vst [vmem:[#allocation3 + $0x160] sm:$0xf] %v1914
    %2025 = vst [vmem:[#allocation3 + $0x184] sm:$0xf] %v1928
    %2026 = vst [vmem:[#allocation3 + $0x1a8] sm:$0xf] %v1942
    %2027 = vst [vmem:[#allocation3 + $0x1cc] sm:$0xf] %v1956
    %2028 = vst [vmem:[#allocation3 + $0x1f0] sm:$0xf] %v1970
    %2029 = vst [vmem:[#allocation3 + $0x214] sm:$0xf] %v1984
    %2030 = vst [vmem:[#allocation3 + $0x238] sm:$0xf] %v1998
    %v2031 = vld [vmem:[%s1710] sm:$0xe]
    %v2032 = vld [vmem:[%s1710 + $0x4] sm:$0x1]
    %v2033 = vld [vmem:[%s1710 + $0x8] sm:$0xe]
    %v2034 = vld [vmem:[%s1710 + $0xc] sm:$0x1]
    %v2035 = vld [vmem:[%s1710 + $0x10] sm:$0xe]
    %v2036 = vld [vmem:[%s1710 + $0x14] sm:$0x1]
    %v2037 = vld [vmem:[%s1710 + $0x18] sm:$0xe]
    %v2038 = vld [vmem:[%s1710 + $0x1c] sm:$0x1]
    %v2039 = vld [vmem:[%s1710 + $0x20] sm:$0xe]
    %v2040 = vld [vmem:[%s1710 + $0x24] sm:$0x1]
    %v2041 = vld [vmem:[%s1710 + $0x28] sm:$0xe]
    %v2042 = vld [vmem:[%s1710 + $0x2c] sm:$0x1]
    %v2043 = vld [vmem:[%s1710 + $0x30] sm:$0xe]
    %v2044 = vld [vmem:[%s1710 + $0x34] sm:$0x1]
    %v2045 = vld [vmem:[%s1710 + $0x38] sm:$0xe]
    %v2046 = vld [vmem:[%s1710 + $0x3c] sm:$0x1]
    %v2047 = vld [vmem:[%s1710 + $0x50] sm:$0xe]
    %v2048 = vld [vmem:[%s1710 + $0x54] sm:$0x1]
    %v2049 = vld [vmem:[%s1710 + $0x58] sm:$0xe]
    %v2050 = vld [vmem:[%s1710 + $0x5c] sm:$0x1]
    %v2051 = vld [vmem:[%s1710 + $0x60] sm:$0xe]
    %v2052 = vld [vmem:[%s1710 + $0x64] sm:$0x1]
    %v2053 = vld [vmem:[%s1710 + $0x68] sm:$0xe]
    %v2054 = vld [vmem:[%s1710 + $0x6c] sm:$0x1]
    %v2055 = vld [vmem:[%s1710 + $0x70] sm:$0xe]
    %v2056 = vld [vmem:[%s1710 + $0x74] sm:$0x1]
    %v2057 = vld [vmem:[%s1710 + $0x78] sm:$0xe]
    %v2058 = vld [vmem:[%s1710 + $0x7c] sm:$0x1]
    %v2059 = vld [vmem:[%s1710 + $0x80] sm:$0xe]
    %v2060 = vld [vmem:[%s1710 + $0x84] sm:$0x1]
    %v2061 = vld [vmem:[%s1710 + $0x88] sm:$0xe]
    %v2062 = vld [vmem:[%s1710 + $0x8c] sm:$0x1]
    %v2095 = vrot.slane %v2031, 5
    %v2096 = vrot.slane %v2095, 4
    %v2097 = vrot.slane %v2032, 5
    %v2098 = vsel %vm1133, %v2096, %v2097
    %v2099 = vrot.slane %v2033, 5
    %v2100 = vrot.slane %v2099, 4
    %v2101 = vrot.slane %v2034, 5
    %v2102 = vsel %vm1133, %v2100, %v2101
    %v2103 = vrot.slane %v2035, 5
    %v2104 = vrot.slane %v2103, 4
    %v2105 = vrot.slane %v2036, 5
    %v2106 = vsel %vm1133, %v2104, %v2105
    %v2107 = vrot.slane %v2037, 5
    %v2108 = vrot.slane %v2107, 4
    %v2109 = vrot.slane %v2038, 5
    %v2110 = vsel %vm1133, %v2108, %v2109
    %v2111 = vrot.slane %v2039, 5
    %v2112 = vrot.slane %v2111, 4
    %v2113 = vrot.slane %v2040, 5
    %v2114 = vsel %vm1133, %v2112, %v2113
    %v2115 = vrot.slane %v2041, 5
    %v2116 = vrot.slane %v2115, 4
    %v2117 = vrot.slane %v2042, 5
    %v2118 = vsel %vm1133, %v2116, %v2117
    %v2119 = vrot.slane %v2043, 5
    %v2120 = vrot.slane %v2119, 4
    %v2121 = vrot.slane %v2044, 5
    %v2122 = vsel %vm1133, %v2120, %v2121
    %v2123 = vrot.slane %v2045, 5
    %v2124 = vrot.slane %v2123, 4
    %v2125 = vrot.slane %v2046, 5
    %v2126 = vsel %vm1133, %v2124, %v2125
    %v2127 = vrot.slane %v2047, 5
    %v2128 = vrot.slane %v2127, 4
    %v2129 = vrot.slane %v2048, 5
    %v2130 = vsel %vm1133, %v2128, %v2129
    %v2131 = vrot.slane %v2049, 5
    %v2132 = vrot.slane %v2131, 4
    %v2133 = vrot.slane %v2050, 5
    %v2134 = vsel %vm1133, %v2132, %v2133
    %v2135 = vrot.slane %v2051, 5
    %v2136 = vrot.slane %v2135, 4
    %v2137 = vrot.slane %v2052, 5
    %v2138 = vsel %vm1133, %v2136, %v2137
    %v2139 = vrot.slane %v2053, 5
    %v2140 = vrot.slane %v2139, 4
    %v2141 = vrot.slane %v2054, 5
    %v2142 = vsel %vm1133, %v2140, %v2141
    %v2143 = vrot.slane %v2055, 5
    %v2144 = vrot.slane %v2143, 4
    %v2145 = vrot.slane %v2056, 5
    %v2146 = vsel %vm1133, %v2144, %v2145
    %v2147 = vrot.slane %v2057, 5
    %v2148 = vrot.slane %v2147, 4
    %v2149 = vrot.slane %v2058, 5
    %v2150 = vsel %vm1133, %v2148, %v2149
    %v2151 = vrot.slane %v2059, 5
    %v2152 = vrot.slane %v2151, 4
    %v2153 = vrot.slane %v2060, 5
    %v2154 = vsel %vm1133, %v2152, %v2153
    %v2155 = vrot.slane %v2061, 5
    %v2156 = vrot.slane %v2155, 4
    %v2157 = vrot.slane %v2062, 5
    %v2158 = vsel %vm1133, %v2156, %v2157
    %2175 = vst [vmem:[#allocation3 + $0x20] sm:$0xf] %v2098
    %2176 = vst [vmem:[#allocation3 + $0x44] sm:$0xf] %v2102
    %2177 = vst [vmem:[#allocation3 + $0x68] sm:$0xf] %v2106
    %2178 = vst [vmem:[#allocation3 + $0x8c] sm:$0xf] %v2110
    %2179 = vst [vmem:[#allocation3 + $0xb0] sm:$0xf] %v2114
    %2180 = vst [vmem:[#allocation3 + $0xd4] sm:$0xf] %v2118
    %2181 = vst [vmem:[#allocation3 + $0xf8] sm:$0xf] %v2122
    %2182 = vst [vmem:[#allocation3 + $0x11c] sm:$0xf] %v2126
    %2183 = vst [vmem:[#allocation3 + $0x140] sm:$0xf] %v2130
    %2184 = vst [vmem:[#allocation3 + $0x164] sm:$0xf] %v2134
    %2185 = vst [vmem:[#allocation3 + $0x188] sm:$0xf] %v2138
    %2186 = vst [vmem:[#allocation3 + $0x1ac] sm:$0xf] %v2142
    %2187 = vst [vmem:[#allocation3 + $0x1d0] sm:$0xf] %v2146
    %2188 = vst [vmem:[#allocation3 + $0x1f4] sm:$0xf] %v2150
    %2189 = vst [vmem:[#allocation3 + $0x218] sm:$0xf] %v2154
    %2190 = vst [vmem:[#allocation3 + $0x23c] sm:$0xf] %v2158
    %v2191 = vld [vmem:[#allocation3] sm:$0xff]
    %v2192 = vld [vmem:[#allocation3 + $0x8] sm:$0xff]
    %v2193 = vld [vmem:[#allocation3 + $0x10] sm:$0xff]
    %v2194 = vld [vmem:[#allocation3 + $0x18] sm:$0xff]
    %v2195 = vld [vmem:[#allocation3 + $0x20] sm:$0xf]
    %v2196 = vld [vmem:[#allocation3 + $0x24] sm:$0xff]
    %v2197 = vld [vmem:[#allocation3 + $0x2c] sm:$0xff]
    %v2198 = vld [vmem:[#allocation3 + $0x34] sm:$0xff]
    %v2199 = vld [vmem:[#allocation3 + $0x3c] sm:$0xff]
    %v2200 = vld [vmem:[#allocation3 + $0x44] sm:$0xf]
    %v2201 = vld [vmem:[#allocation3 + $0x48] sm:$0xff]
    %v2202 = vld [vmem:[#allocation3 + $0x50] sm:$0xff]
    %v2203 = vld [vmem:[#allocation3 + $0x58] sm:$0xff]
    %v2204 = vld [vmem:[#allocation3 + $0x60] sm:$0xff]
    %v2205 = vld [vmem:[#allocation3 + $0x68] sm:$0xf]
    %v2206 = vld [vmem:[#allocation3 + $0x6c] sm:$0xff]
    %v2207 = vld [vmem:[#allocation3 + $0x74] sm:$0xff]
    %v2208 = vld [vmem:[#allocation3 + $0x7c] sm:$0xff]
    %v2209 = vld [vmem:[#allocation3 + $0x84] sm:$0xff]
    %v2210 = vld [vmem:[#allocation3 + $0x8c] sm:$0xf]
    %v2211 = vld [vmem:[#allocation3 + $0x90] sm:$0xff]
    %v2212 = vld [vmem:[#allocation3 + $0x98] sm:$0xff]
    %v2213 = vld [vmem:[#allocation3 + $0xa0] sm:$0xff]
    %v2214 = vld [vmem:[#allocation3 + $0xa8] sm:$0xff]
    %v2215 = vld [vmem:[#allocation3 + $0xb0] sm:$0xf]
    %v2216 = vld [vmem:[#allocation3 + $0xb4] sm:$0xff]
    %v2217 = vld [vmem:[#allocation3 + $0xbc] sm:$0xff]
    %v2218 = vld [vmem:[#allocation3 + $0xc4] sm:$0xff]
    %v2219 = vld [vmem:[#allocation3 + $0xcc] sm:$0xff]
    %v2220 = vld [vmem:[#allocation3 + $0xd4] sm:$0xf]
    %v2221 = vld [vmem:[#allocation3 + $0xd8] sm:$0xff]
    %v2222 = vld [vmem:[#allocation3 + $0xe0] sm:$0xff]
    %v2223 = vld [vmem:[#allocation3 + $0xe8] sm:$0xff]
    %v2224 = vld [vmem:[#allocation3 + $0xf0] sm:$0xff]
    %v2225 = vld [vmem:[#allocation3 + $0xf8] sm:$0xf]
    %v2226 = vld [vmem:[#allocation3 + $0xfc] sm:$0xff]
    %v2227 = vld [vmem:[#allocation3 + $0x104] sm:$0xff]
    %v2228 = vld [vmem:[#allocation3 + $0x10c] sm:$0xff]
    %v2229 = vld [vmem:[#allocation3 + $0x114] sm:$0xff]
    %v2230 = vld [vmem:[#allocation3 + $0x11c] sm:$0xf]
    %v2231 = vld [vmem:[#allocation3 + $0x120] sm:$0xff]
    %v2232 = vld [vmem:[#allocation3 + $0x128] sm:$0xff]
    %v2233 = vld [vmem:[#allocation3 + $0x130] sm:$0xff]
    %v2234 = vld [vmem:[#allocation3 + $0x138] sm:$0xff]
    %v2235 = vld [vmem:[#allocation3 + $0x140] sm:$0xf]
    %v2236 = vld [vmem:[#allocation3 + $0x144] sm:$0xff]
    %v2237 = vld [vmem:[#allocation3 + $0x14c] sm:$0xff]
    %v2238 = vld [vmem:[#allocation3 + $0x154] sm:$0xff]
    %v2239 = vld [vmem:[#allocation3 + $0x15c] sm:$0xff]
    %v2240 = vld [vmem:[#allocation3 + $0x164] sm:$0xf]
    %v2241 = vld [vmem:[#allocation3 + $0x168] sm:$0xff]
    %v2242 = vld [vmem:[#allocation3 + $0x170] sm:$0xff]
    %v2243 = vld [vmem:[#allocation3 + $0x178] sm:$0xff]
    %v2244 = vld [vmem:[#allocation3 + $0x180] sm:$0xff]
    %v2245 = vld [vmem:[#allocation3 + $0x188] sm:$0xf]
    %v2246 = vld [vmem:[#allocation3 + $0x18c] sm:$0xff]
    %v2247 = vld [vmem:[#allocation3 + $0x194] sm:$0xff]
    %v2248 = vld [vmem:[#allocation3 + $0x19c] sm:$0xff]
    %v2249 = vld [vmem:[#allocation3 + $0x1a4] sm:$0xff]
    %v2250 = vld [vmem:[#allocation3 + $0x1ac] sm:$0xf]
    %v2251 = vld [vmem:[#allocation3 + $0x1b0] sm:$0xff]
    %v2252 = vld [vmem:[#allocation3 + $0x1b8] sm:$0xff]
    %v2253 = vld [vmem:[#allocation3 + $0x1c0] sm:$0xff]
    %v2254 = vld [vmem:[#allocation3 + $0x1c8] sm:$0xff]
    %v2255 = vld [vmem:[#allocation3 + $0x1d0] sm:$0xf]
    %v2256 = vld [vmem:[#allocation3 + $0x1d4] sm:$0xff]
    %v2257 = vld [vmem:[#allocation3 + $0x1dc] sm:$0xff]
    %v2258 = vld [vmem:[#allocation3 + $0x1e4] sm:$0xff]
    %v2259 = vld [vmem:[#allocation3 + $0x1ec] sm:$0xff]
    %v2260 = vld [vmem:[#allocation3 + $0x1f4] sm:$0xf]
    %v2261 = vld [vmem:[#allocation3 + $0x1f8] sm:$0xff]
    %v2262 = vld [vmem:[#allocation3 + $0x200] sm:$0xff]
    %v2263 = vld [vmem:[#allocation3 + $0x208] sm:$0xff]
    %v2264 = vld [vmem:[#allocation3 + $0x210] sm:$0xff]
    %v2265 = vld [vmem:[#allocation3 + $0x218] sm:$0xf]
    %v2266 = vld [vmem:[#allocation3 + $0x21c] sm:$0xff]
    %v2267 = vld [vmem:[#allocation3 + $0x224] sm:$0xff]
    %v2268 = vld [vmem:[#allocation3 + $0x22c] sm:$0xff]
    %v2269 = vld [vmem:[#allocation3 + $0x234] sm:$0xff]
    %v2270 = vld [vmem:[#allocation3 + $0x23c] sm:$0xf]
    %v2271 = vld [vmem:[%s5] sm:$0xf]
    %v2272 = vld [vmem:[%s5 + $0x4] sm:$0xf]
    %v2273 = vld [vmem:[%s5 + $0x8] sm:$0xf]
    %v2274 = vld [vmem:[%s5 + $0xc] sm:$0xf]
    %v2275 = vld [vmem:[%s5 + $0x10] sm:$0xf]
    %v2276 = vld [vmem:[%s5 + $0x14] sm:$0xf]
    %v2277 = vld [vmem:[%s5 + $0x18] sm:$0xf]
    %v2278 = vld [vmem:[%s5 + $0x1c] sm:$0xf]
    %v2279 = vld [vmem:[%s5 + $0x20] sm:$0xf]
    %v2280 = vld [vmem:[%s5 + $0x24] sm:$0xf]
    %v2281 = vld [vmem:[%s5 + $0x28] sm:$0xf]
    %v2282 = vld [vmem:[%s5 + $0x2c] sm:$0xf]
    %v2283 = vld [vmem:[%s5 + $0x30] sm:$0xf]
    %v2284 = vld [vmem:[%s5 + $0x34] sm:$0xf]
    %v2285 = vld [vmem:[%s5 + $0x38] sm:$0xf]
    %v2286 = vld [vmem:[%s5 + $0x3c] sm:$0xf]
    %v2287 = vld [vmem:[%s5 + $0x40] sm:$0xf]
    %v2288 = vld [vmem:[%s5 + $0x44] sm:$0xf]
    %v2289 = vld [vmem:[%s5 + $0x48] sm:$0xf]
    %v2290 = vld [vmem:[%s5 + $0x4c] sm:$0xf]
    %v2291 = vld [vmem:[%s5 + $0x50] sm:$0xf]
    %v2292 = vld [vmem:[%s5 + $0x54] sm:$0xf]
    %v2293 = vld [vmem:[%s5 + $0x58] sm:$0xf]
    %v2294 = vld [vmem:[%s5 + $0x5c] sm:$0xf]
    %v2295 = vld [vmem:[%s5 + $0x60] sm:$0xf]
    %v2296 = vld [vmem:[%s5 + $0x64] sm:$0xf]
    %v2297 = vld [vmem:[%s5 + $0x68] sm:$0xf]
    %v2298 = vld [vmem:[%s5 + $0x6c] sm:$0xf]
    %v2299 = vld [vmem:[%s5 + $0x70] sm:$0xf]
    %v2300 = vld [vmem:[%s5 + $0x74] sm:$0xf]
    %v2301 = vld [vmem:[%s5 + $0x78] sm:$0xf]
    %v2302 = vld [vmem:[%s5 + $0x7c] sm:$0xf]
    %v2303 = vld [vmem:[%s5 + $0x80] sm:$0xf]
    %v2304 = vld [vmem:[%s5 + $0x84] sm:$0xf]
    %v2305 = vld [vmem:[%s5 + $0x88] sm:$0xf]
    %v2306 = vld [vmem:[%s5 + $0x8c] sm:$0xf]
    %v2307 = vld [vmem:[%s5 + $0x90] sm:$0xf]
    %v2308 = vld [vmem:[%s5 + $0x94] sm:$0xf]
    %v2309 = vld [vmem:[%s5 + $0x98] sm:$0xf]
    %v2310 = vld [vmem:[%s5 + $0x9c] sm:$0xf]
    %v2311 = vld [vmem:[%s5 + $0xa0] sm:$0xf]
    %v2312 = vld [vmem:[%s5 + $0xa4] sm:$0xf]
    %v2313 = vld [vmem:[%s5 + $0xa8] sm:$0xf]
    %v2314 = vld [vmem:[%s5 + $0xac] sm:$0xf]
    %v2315 = vld [vmem:[%s5 + $0xb0] sm:$0xf]
    %v2316 = vld [vmem:[%s5 + $0xb4] sm:$0xf]
    %v2317 = vld [vmem:[%s5 + $0xb8] sm:$0xf]
    %v2318 = vld [vmem:[%s5 + $0xbc] sm:$0xf]
    %v2319 = vld [vmem:[%s5 + $0xc0] sm:$0xf]
    %v2320 = vld [vmem:[%s5 + $0xc4] sm:$0xf]
    %v2321 = vld [vmem:[%s5 + $0xc8] sm:$0xf]
    %v2322 = vld [vmem:[%s5 + $0xcc] sm:$0xf]
    %v2323 = vld [vmem:[%s5 + $0xd0] sm:$0xf]
    %v2324 = vld [vmem:[%s5 + $0xd4] sm:$0xf]
    %v2325 = vld [vmem:[%s5 + $0xd8] sm:$0xf]
    %v2326 = vld [vmem:[%s5 + $0xdc] sm:$0xf]
    %v2327 = vld [vmem:[%s5 + $0xe0] sm:$0xf]
    %v2328 = vld [vmem:[%s5 + $0xe4] sm:$0xf]
    %v2329 = vld [vmem:[%s5 + $0xe8] sm:$0xf]
    %v2330 = vld [vmem:[%s5 + $0xec] sm:$0xf]
    %v2331 = vld [vmem:[%s5 + $0xf0] sm:$0xf]
    %v2332 = vld [vmem:[%s5 + $0xf4] sm:$0xf]
    %v2333 = vld [vmem:[%s5 + $0xf8] sm:$0xf]
    %v2334 = vld [vmem:[%s5 + $0xfc] sm:$0xf]
    %v2335 = vld [vmem:[%s5 + $0x100] sm:$0xf]
    %v2336 = vld [vmem:[%s5 + $0x104] sm:$0xf]
    %v2337 = vld [vmem:[%s5 + $0x108] sm:$0xf]
    %v2338 = vld [vmem:[%s5 + $0x10c] sm:$0xf]
    %v2339 = vld [vmem:[%s5 + $0x110] sm:$0xf]
    %v2340 = vld [vmem:[%s5 + $0x114] sm:$0xf]
    %v2341 = vld [vmem:[%s5 + $0x118] sm:$0xf]
    %v2342 = vld [vmem:[%s5 + $0x11c] sm:$0xf]
    %v2343 = vld [vmem:[%s5 + $0x120] sm:$0xf]
    %v2344 = vld [vmem:[%s5 + $0x124] sm:$0xf]
    %v2345 = vld [vmem:[%s5 + $0x128] sm:$0xf]
    %v2346 = vld [vmem:[%s5 + $0x12c] sm:$0xf]
    %v2347 = vld [vmem:[%s5 + $0x130] sm:$0xf]
    %v2348 = vld [vmem:[%s5 + $0x134] sm:$0xf]
    %v2349 = vld [vmem:[%s5 + $0x138] sm:$0xf]
    %v2350 = vld [vmem:[%s5 + $0x13c] sm:$0xf]
    %v2351 = vld [vmem:[%s5 + $0x140] sm:$0xf]
    %v2352 = vld [vmem:[%s5 + $0x144] sm:$0xf]
    %v2353 = vld [vmem:[%s5 + $0x148] sm:$0xf]
    %v2354 = vld [vmem:[%s5 + $0x14c] sm:$0xf]
    %v2355 = vld [vmem:[%s5 + $0x150] sm:$0xf]
    %v2356 = vld [vmem:[%s5 + $0x154] sm:$0xf]
    %v2357 = vld [vmem:[%s5 + $0x158] sm:$0xf]
    %v2358 = vld [vmem:[%s5 + $0x15c] sm:$0xf]
    %v2359 = vld [vmem:[%s5 + $0x160] sm:$0xf]
    %v2360 = vld [vmem:[%s5 + $0x164] sm:$0xf]
    %v2361 = vld [vmem:[%s5 + $0x168] sm:$0xf]
    %v2362 = vld [vmem:[%s5 + $0x16c] sm:$0xf]
    %v2363 = vld [vmem:[%s5 + $0x170] sm:$0xf]
    %v2364 = vld [vmem:[%s5 + $0x174] sm:$0xf]
    %v2365 = vld [vmem:[%s5 + $0x178] sm:$0xf]
    %v2366 = vld [vmem:[%s5 + $0x17c] sm:$0xf]
    %v2367 = vld [vmem:[%s5 + $0x180] sm:$0xf]
    %v2368 = vld [vmem:[%s5 + $0x184] sm:$0xf]
    %v2369 = vld [vmem:[%s5 + $0x188] sm:$0xf]
    %v2370 = vld [vmem:[%s5 + $0x18c] sm:$0xf]
    %v2371 = vld [vmem:[%s5 + $0x190] sm:$0xf]
    %v2372 = vld [vmem:[%s5 + $0x194] sm:$0xf]
    %v2373 = vld [vmem:[%s5 + $0x198] sm:$0xf]
    %v2374 = vld [vmem:[%s5 + $0x19c] sm:$0xf]
    %v2375 = vld [vmem:[%s5 + $0x1a0] sm:$0xf]
    %v2376 = vld [vmem:[%s5 + $0x1a4] sm:$0xf]
    %v2377 = vld [vmem:[%s5 + $0x1a8] sm:$0xf]
    %v2378 = vld [vmem:[%s5 + $0x1ac] sm:$0xf]
    %v2379 = vld [vmem:[%s5 + $0x1b0] sm:$0xf]
    %v2380 = vld [vmem:[%s5 + $0x1b4] sm:$0xf]
    %v2381 = vld [vmem:[%s5 + $0x1b8] sm:$0xf]
    %v2382 = vld [vmem:[%s5 + $0x1bc] sm:$0xf]
    %v2383 = vld [vmem:[%s5 + $0x1c0] sm:$0xf]
    %v2384 = vld [vmem:[%s5 + $0x1c4] sm:$0xf]
    %v2385 = vld [vmem:[%s5 + $0x1c8] sm:$0xf]
    %v2386 = vld [vmem:[%s5 + $0x1cc] sm:$0xf]
    %v2387 = vld [vmem:[%s5 + $0x1d0] sm:$0xf]
    %v2388 = vld [vmem:[%s5 + $0x1d4] sm:$0xf]
    %v2389 = vld [vmem:[%s5 + $0x1d8] sm:$0xf]
    %v2390 = vld [vmem:[%s5 + $0x1dc] sm:$0xf]
    %v2391 = vld [vmem:[%s5 + $0x1e0] sm:$0xf]
    %v2392 = vld [vmem:[%s5 + $0x1e4] sm:$0xf]
    %v2393 = vld [vmem:[%s5 + $0x1e8] sm:$0xf]
    %v2394 = vld [vmem:[%s5 + $0x1ec] sm:$0xf]
    %v2395 = vld [vmem:[%s5 + $0x1f0] sm:$0xf]
    %v2396 = vld [vmem:[%s5 + $0x1f4] sm:$0xf]
    %v2397 = vld [vmem:[%s5 + $0x1f8] sm:$0xf]
    %v2398 = vld [vmem:[%s5 + $0x1fc] sm:$0xf]
    %v2399 = vld [vmem:[%s5 + $0x200] sm:$0xf]
    %v2400 = vld [vmem:[%s5 + $0x204] sm:$0xf]
    %v2401 = vld [vmem:[%s5 + $0x208] sm:$0xf]
    %v2402 = vld [vmem:[%s5 + $0x20c] sm:$0xf]
    %v2403 = vld [vmem:[%s5 + $0x210] sm:$0xf]
    %v2404 = vld [vmem:[%s5 + $0x214] sm:$0xf]
    %v2405 = vld [vmem:[%s5 + $0x218] sm:$0xf]
    %v2406 = vld [vmem:[%s5 + $0x21c] sm:$0xf]
    %v2407 = vld [vmem:[%s5 + $0x220] sm:$0xf]
    %v2408 = vld [vmem:[%s5 + $0x224] sm:$0xf]
    %v2409 = vld [vmem:[%s5 + $0x228] sm:$0xf]
    %v2410 = vld [vmem:[%s5 + $0x22c] sm:$0xf]
    %v2411 = vld [vmem:[%s5 + $0x230] sm:$0xf]
    %v2412 = vld [vmem:[%s5 + $0x234] sm:$0xf]
    %v2413 = vld [vmem:[%s5 + $0x238] sm:$0xf]
    %v2414 = vld [vmem:[%s5 + $0x23c] sm:$0xf]
    %v2415 = vld [vmem:[%s6] sm:$0x1]
    %v2417 = vperm.slane %v2415, 0
    %v2499 = vunpack.c.l.b16 %v2191
    %v2500 = vunpack.c.h.b16 %v2191
    %v2501 = vunpack.c.l.b16 %v2192
    %v2502 = vunpack.c.h.b16 %v2192
    %v2503 = vunpack.c.l.b16 %v2193
    %v2504 = vunpack.c.h.b16 %v2193
    %v2505 = vunpack.c.l.b16 %v2194
    %v2506 = vunpack.c.h.b16 %v2194
    %v2507 = vunpack.c.l.b16 %v2195
    %v2508 = vunpack.c.l.b16 %v2196
    %v2509 = vunpack.c.h.b16 %v2196
    %v2510 = vunpack.c.l.b16 %v2197
    %v2511 = vunpack.c.h.b16 %v2197
    %v2512 = vunpack.c.l.b16 %v2198
    %v2513 = vunpack.c.h.b16 %v2198
    %v2514 = vunpack.c.l.b16 %v2199
    %v2515 = vunpack.c.h.b16 %v2199
    %v2516 = vunpack.c.l.b16 %v2200
    %v2517 = vunpack.c.l.b16 %v2201
    %v2518 = vunpack.c.h.b16 %v2201
    %v2519 = vunpack.c.l.b16 %v2202
    %v2520 = vunpack.c.h.b16 %v2202
    %v2521 = vunpack.c.l.b16 %v2203
    %v2522 = vunpack.c.h.b16 %v2203
    %v2523 = vunpack.c.l.b16 %v2204
    %v2524 = vunpack.c.h.b16 %v2204
    %v2525 = vunpack.c.l.b16 %v2205
    %v2526 = vunpack.c.l.b16 %v2206
    %v2527 = vunpack.c.h.b16 %v2206
    %v2528 = vunpack.c.l.b16 %v2207
    %v2529 = vunpack.c.h.b16 %v2207
    %v2530 = vunpack.c.l.b16 %v2208
    %v2531 = vunpack.c.h.b16 %v2208
    %v2532 = vunpack.c.l.b16 %v2209
    %v2533 = vunpack.c.h.b16 %v2209
    %v2534 = vunpack.c.l.b16 %v2210
    %v2535 = vunpack.c.l.b16 %v2211
    %v2536 = vunpack.c.h.b16 %v2211
    %v2537 = vunpack.c.l.b16 %v2212
    %v2538 = vunpack.c.h.b16 %v2212
    %v2539 = vunpack.c.l.b16 %v2213
    %v2540 = vunpack.c.h.b16 %v2213
    %v2541 = vunpack.c.l.b16 %v2214
    %v2542 = vunpack.c.h.b16 %v2214
    %v2543 = vunpack.c.l.b16 %v2215
    %v2544 = vunpack.c.l.b16 %v2216
    %v2545 = vunpack.c.h.b16 %v2216
    %v2546 = vunpack.c.l.b16 %v2217
    %v2547 = vunpack.c.h.b16 %v2217
    %v2548 = vunpack.c.l.b16 %v2218
    %v2549 = vunpack.c.h.b16 %v2218
    %v2550 = vunpack.c.l.b16 %v2219
    %v2551 = vunpack.c.h.b16 %v2219
    %v2552 = vunpack.c.l.b16 %v2220
    %v2553 = vunpack.c.l.b16 %v2221
    %v2554 = vunpack.c.h.b16 %v2221
    %v2555 = vunpack.c.l.b16 %v2222
    %v2556 = vunpack.c.h.b16 %v2222
    %v2557 = vunpack.c.l.b16 %v2223
    %v2558 = vunpack.c.h.b16 %v2223
    %v2559 = vunpack.c.l.b16 %v2224
    %v2560 = vunpack.c.h.b16 %v2224
    %v2561 = vunpack.c.l.b16 %v2225
    %v2562 = vunpack.c.l.b16 %v2226
    %v2563 = vunpack.c.h.b16 %v2226
    %v2564 = vunpack.c.l.b16 %v2227
    %v2565 = vunpack.c.h.b16 %v2227
    %v2566 = vunpack.c.l.b16 %v2228
    %v2567 = vunpack.c.h.b16 %v2228
    %v2568 = vunpack.c.l.b16 %v2229
    %v2569 = vunpack.c.h.b16 %v2229
    %v2570 = vunpack.c.l.b16 %v2230
    %v2571 = vunpack.c.l.b16 %v2231
    %v2572 = vunpack.c.h.b16 %v2231
    %v2573 = vunpack.c.l.b16 %v2232
    %v2574 = vunpack.c.h.b16 %v2232
    %v2575 = vunpack.c.l.b16 %v2233
    %v2576 = vunpack.c.h.b16 %v2233
    %v2577 = vunpack.c.l.b16 %v2234
    %v2578 = vunpack.c.h.b16 %v2234
    %v2579 = vunpack.c.l.b16 %v2235
    %v2580 = vunpack.c.l.b16 %v2236
    %v2581 = vunpack.c.h.b16 %v2236
    %v2582 = vunpack.c.l.b16 %v2237
    %v2583 = vunpack.c.h.b16 %v2237
    %v2584 = vunpack.c.l.b16 %v2238
    %v2585 = vunpack.c.h.b16 %v2238
    %v2586 = vunpack.c.l.b16 %v2239
    %v2587 = vunpack.c.h.b16 %v2239
    %v2588 = vunpack.c.l.b16 %v2240
    %v2589 = vunpack.c.l.b16 %v2241
    %v2590 = vunpack.c.h.b16 %v2241
    %v2591 = vunpack.c.l.b16 %v2242
    %v2592 = vunpack.c.h.b16 %v2242
    %v2593 = vunpack.c.l.b16 %v2243
    %v2594 = vunpack.c.h.b16 %v2243
    %v2595 = vunpack.c.l.b16 %v2244
    %v2596 = vunpack.c.h.b16 %v2244
    %v2597 = vunpack.c.l.b16 %v2245
    %v2598 = vunpack.c.l.b16 %v2246
    %v2599 = vunpack.c.h.b16 %v2246
    %v2600 = vunpack.c.l.b16 %v2247
    %v2601 = vunpack.c.h.b16 %v2247
    %v2602 = vunpack.c.l.b16 %v2248
    %v2603 = vunpack.c.h.b16 %v2248
    %v2604 = vunpack.c.l.b16 %v2249
    %v2605 = vunpack.c.h.b16 %v2249
    %v2606 = vunpack.c.l.b16 %v2250
    %v2607 = vunpack.c.l.b16 %v2251
    %v2608 = vunpack.c.h.b16 %v2251
    %v2609 = vunpack.c.l.b16 %v2252
    %v2610 = vunpack.c.h.b16 %v2252
    %v2611 = vunpack.c.l.b16 %v2253
    %v2612 = vunpack.c.h.b16 %v2253
    %v2613 = vunpack.c.l.b16 %v2254
    %v2614 = vunpack.c.h.b16 %v2254
    %v2615 = vunpack.c.l.b16 %v2255
    %v2616 = vunpack.c.l.b16 %v2256
    %v2617 = vunpack.c.h.b16 %v2256
    %v2618 = vunpack.c.l.b16 %v2257
    %v2619 = vunpack.c.h.b16 %v2257
    %v2620 = vunpack.c.l.b16 %v2258
    %v2621 = vunpack.c.h.b16 %v2258
    %v2622 = vunpack.c.l.b16 %v2259
    %v2623 = vunpack.c.h.b16 %v2259
    %v2624 = vunpack.c.l.b16 %v2260
    %v2625 = vunpack.c.l.b16 %v2261
    %v2626 = vunpack.c.h.b16 %v2261
    %v2627 = vunpack.c.l.b16 %v2262
    %v2628 = vunpack.c.h.b16 %v2262
    %v2629 = vunpack.c.l.b16 %v2263
    %v2630 = vunpack.c.h.b16 %v2263
    %v2631 = vunpack.c.l.b16 %v2264
    %v2632 = vunpack.c.h.b16 %v2264
    %v2633 = vunpack.c.l.b16 %v2265
    %v2634 = vunpack.c.l.b16 %v2266
    %v2635 = vunpack.c.h.b16 %v2266
    %v2636 = vunpack.c.l.b16 %v2267
    %v2637 = vunpack.c.h.b16 %v2267
    %v2638 = vunpack.c.l.b16 %v2268
    %v2639 = vunpack.c.h.b16 %v2268
    %v2640 = vunpack.c.l.b16 %v2269
    %v2641 = vunpack.c.h.b16 %v2269
    %v2642 = vunpack.c.l.b16 %v2270
    %v2643 = vpack.c.b16 %v2508, %v2499
    %v2644 = vpack.c.b16 %v2509, %v2500
    %v2645 = vpack.c.b16 %v2510, %v2501
    %v2646 = vpack.c.b16 %v2511, %v2502
    %v2647 = vpack.c.b16 %v2512, %v2503
    %v2648 = vpack.c.b16 %v2513, %v2504
    %v2649 = vpack.c.b16 %v2514, %v2505
    %v2650 = vpack.c.b16 %v2515, %v2506
    %v2651 = vpack.c.b16 %v2516, %v2507
    %v2652 = vpack.c.b16 %v2526, %v2517
    %v2653 = vpack.c.b16 %v2527, %v2518
    %v2654 = vpack.c.b16 %v2528, %v2519
    %v2655 = vpack.c.b16 %v2529, %v2520
    %v2656 = vpack.c.b16 %v2530, %v2521
    %v2657 = vpack.c.b16 %v2531, %v2522
    %v2658 = vpack.c.b16 %v2532, %v2523
    %v2659 = vpack.c.b16 %v2533, %v2524
    %v2660 = vpack.c.b16 %v2534, %v2525
    %v2661 = vpack.c.b16 %v2544, %v2535
    %v2662 = vpack.c.b16 %v2545, %v2536
    %v2663 = vpack.c.b16 %v2546, %v2537
    %v2664 = vpack.c.b16 %v2547, %v2538
    %v2665 = vpack.c.b16 %v2548, %v2539
    %v2666 = vpack.c.b16 %v2549, %v2540
    %v2667 = vpack.c.b16 %v2550, %v2541
    %v2668 = vpack.c.b16 %v2551, %v2542
    %v2669 = vpack.c.b16 %v2552, %v2543
    %v2670 = vpack.c.b16 %v2562, %v2553
    %v2671 = vpack.c.b16 %v2563, %v2554
    %v2672 = vpack.c.b16 %v2564, %v2555
    %v2673 = vpack.c.b16 %v2565, %v2556
    %v2674 = vpack.c.b16 %v2566, %v2557
    %v2675 = vpack.c.b16 %v2567, %v2558
    %v2676 = vpack.c.b16 %v2568, %v2559
    %v2677 = vpack.c.b16 %v2569, %v2560
    %v2678 = vpack.c.b16 %v2570, %v2561
    %v2679 = vpack.c.b16 %v2580, %v2571
    %v2680 = vpack.c.b16 %v2581, %v2572
    %v2681 = vpack.c.b16 %v2582, %v2573
    %v2682 = vpack.c.b16 %v2583, %v2574
    %v2683 = vpack.c.b16 %v2584, %v2575
    %v2684 = vpack.c.b16 %v2585, %v2576
    %v2685 = vpack.c.b16 %v2586, %v2577
    %v2686 = vpack.c.b16 %v2587, %v2578
    %v2687 = vpack.c.b16 %v2588, %v2579
    %v2688 = vpack.c.b16 %v2598, %v2589
    %v2689 = vpack.c.b16 %v2599, %v2590
    %v2690 = vpack.c.b16 %v2600, %v2591
    %v2691 = vpack.c.b16 %v2601, %v2592
    %v2692 = vpack.c.b16 %v2602, %v2593
    %v2693 = vpack.c.b16 %v2603, %v2594
    %v2694 = vpack.c.b16 %v2604, %v2595
    %v2695 = vpack.c.b16 %v2605, %v2596
    %v2696 = vpack.c.b16 %v2606, %v2597
    %v2697 = vpack.c.b16 %v2616, %v2607
    %v2698 = vpack.c.b16 %v2617, %v2608
    %v2699 = vpack.c.b16 %v2618, %v2609
    %v2700 = vpack.c.b16 %v2619, %v2610
    %v2701 = vpack.c.b16 %v2620, %v2611
    %v2702 = vpack.c.b16 %v2621, %v2612
    %v2703 = vpack.c.b16 %v2622, %v2613
    %v2704 = vpack.c.b16 %v2623, %v2614
    %v2705 = vpack.c.b16 %v2624, %v2615
    %v2706 = vpack.c.b16 %v2634, %v2625
    %v2707 = vpack.c.b16 %v2635, %v2626
    %v2708 = vpack.c.b16 %v2636, %v2627
    %v2709 = vpack.c.b16 %v2637, %v2628
    %v2710 = vpack.c.b16 %v2638, %v2629
    %v2711 = vpack.c.b16 %v2639, %v2630
    %v2712 = vpack.c.b16 %v2640, %v2631
    %v2713 = vpack.c.b16 %v2641, %v2632
    %v2714 = vpack.c.b16 %v2642, %v2633
    %v2931 = vunpack.c.l.b16 %v2271
    %v2932 = vunpack.c.l.b16 %v2272
    %v2933 = vunpack.c.l.b16 %v2273
    %v2934 = vunpack.c.l.b16 %v2274
    %v2935 = vunpack.c.l.b16 %v2275
    %v2936 = vunpack.c.l.b16 %v2276
    %v2937 = vunpack.c.l.b16 %v2277
    %v2938 = vunpack.c.l.b16 %v2278
    %v2939 = vunpack.c.l.b16 %v2279
    %v2940 = vunpack.c.l.b16 %v2280
    %v2941 = vunpack.c.l.b16 %v2281
    %v2942 = vunpack.c.l.b16 %v2282
    %v2943 = vunpack.c.l.b16 %v2283
    %v2944 = vunpack.c.l.b16 %v2284
    %v2945 = vunpack.c.l.b16 %v2285
    %v2946 = vunpack.c.l.b16 %v2286
    %v2947 = vunpack.c.l.b16 %v2287
    %v2948 = vunpack.c.l.b16 %v2288
    %v2949 = vunpack.c.l.b16 %v2289
    %v2950 = vunpack.c.l.b16 %v2290
    %v2951 = vunpack.c.l.b16 %v2291
    %v2952 = vunpack.c.l.b16 %v2292
    %v2953 = vunpack.c.l.b16 %v2293
    %v2954 = vunpack.c.l.b16 %v2294
    %v2955 = vunpack.c.l.b16 %v2295
    %v2956 = vunpack.c.l.b16 %v2296
    %v2957 = vunpack.c.l.b16 %v2297
    %v2958 = vunpack.c.l.b16 %v2298
    %v2959 = vunpack.c.l.b16 %v2299
    %v2960 = vunpack.c.l.b16 %v2300
    %v2961 = vunpack.c.l.b16 %v2301
    %v2962 = vunpack.c.l.b16 %v2302
    %v2963 = vunpack.c.l.b16 %v2303
    %v2964 = vunpack.c.l.b16 %v2304
    %v2965 = vunpack.c.l.b16 %v2305
    %v2966 = vunpack.c.l.b16 %v2306
    %v2967 = vunpack.c.l.b16 %v2307
    %v2968 = vunpack.c.l.b16 %v2308
    %v2969 = vunpack.c.l.b16 %v2309
    %v2970 = vunpack.c.l.b16 %v2310
    %v2971 = vunpack.c.l.b16 %v2311
    %v2972 = vunpack.c.l.b16 %v2312
    %v2973 = vunpack.c.l.b16 %v2313
    %v2974 = vunpack.c.l.b16 %v2314
    %v2975 = vunpack.c.l.b16 %v2315
    %v2976 = vunpack.c.l.b16 %v2316
    %v2977 = vunpack.c.l.b16 %v2317
    %v2978 = vunpack.c.l.b16 %v2318
    %v2979 = vunpack.c.l.b16 %v2319
    %v2980 = vunpack.c.l.b16 %v2320
    %v2981 = vunpack.c.l.b16 %v2321
    %v2982 = vunpack.c.l.b16 %v2322
    %v2983 = vunpack.c.l.b16 %v2323
    %v2984 = vunpack.c.l.b16 %v2324
    %v2985 = vunpack.c.l.b16 %v2325
    %v2986 = vunpack.c.l.b16 %v2326
    %v2987 = vunpack.c.l.b16 %v2327
    %v2988 = vunpack.c.l.b16 %v2328
    %v2989 = vunpack.c.l.b16 %v2329
    %v2990 = vunpack.c.l.b16 %v2330
    %v2991 = vunpack.c.l.b16 %v2331
    %v2992 = vunpack.c.l.b16 %v2332
    %v2993 = vunpack.c.l.b16 %v2333
    %v2994 = vunpack.c.l.b16 %v2334
    %v2995 = vunpack.c.l.b16 %v2335
    %v2996 = vunpack.c.l.b16 %v2336
    %v2997 = vunpack.c.l.b16 %v2337
    %v2998 = vunpack.c.l.b16 %v2338
    %v2999 = vunpack.c.l.b16 %v2339
    %v3000 = vunpack.c.l.b16 %v2340
    %v3001 = vunpack.c.l.b16 %v2341
    %v3002 = vunpack.c.l.b16 %v2342
    %v3003 = vunpack.c.l.b16 %v2343
    %v3004 = vunpack.c.l.b16 %v2344
    %v3005 = vunpack.c.l.b16 %v2345
    %v3006 = vunpack.c.l.b16 %v2346
    %v3007 = vunpack.c.l.b16 %v2347
    %v3008 = vunpack.c.l.b16 %v2348
    %v3009 = vunpack.c.l.b16 %v2349
    %v3010 = vunpack.c.l.b16 %v2350
    %v3011 = vunpack.c.l.b16 %v2351
    %v3012 = vunpack.c.l.b16 %v2352
    %v3013 = vunpack.c.l.b16 %v2353
    %v3014 = vunpack.c.l.b16 %v2354
    %v3015 = vunpack.c.l.b16 %v2355
    %v3016 = vunpack.c.l.b16 %v2356
    %v3017 = vunpack.c.l.b16 %v2357
    %v3018 = vunpack.c.l.b16 %v2358
    %v3019 = vunpack.c.l.b16 %v2359
    %v3020 = vunpack.c.l.b16 %v2360
    %v3021 = vunpack.c.l.b16 %v2361
    %v3022 = vunpack.c.l.b16 %v2362
    %v3023 = vunpack.c.l.b16 %v2363
    %v3024 = vunpack.c.l.b16 %v2364
    %v3025 = vunpack.c.l.b16 %v2365
    %v3026 = vunpack.c.l.b16 %v2366
    %v3027 = vunpack.c.l.b16 %v2367
    %v3028 = vunpack.c.l.b16 %v2368
    %v3029 = vunpack.c.l.b16 %v2369
    %v3030 = vunpack.c.l.b16 %v2370
    %v3031 = vunpack.c.l.b16 %v2371
    %v3032 = vunpack.c.l.b16 %v2372
    %v3033 = vunpack.c.l.b16 %v2373
    %v3034 = vunpack.c.l.b16 %v2374
    %v3035 = vunpack.c.l.b16 %v2375
    %v3036 = vunpack.c.l.b16 %v2376
    %v3037 = vunpack.c.l.b16 %v2377
    %v3038 = vunpack.c.l.b16 %v2378
    %v3039 = vunpack.c.l.b16 %v2379
    %v3040 = vunpack.c.l.b16 %v2380
    %v3041 = vunpack.c.l.b16 %v2381
    %v3042 = vunpack.c.l.b16 %v2382
    %v3043 = vunpack.c.l.b16 %v2383
    %v3044 = vunpack.c.l.b16 %v2384
    %v3045 = vunpack.c.l.b16 %v2385
    %v3046 = vunpack.c.l.b16 %v2386
    %v3047 = vunpack.c.l.b16 %v2387
    %v3048 = vunpack.c.l.b16 %v2388
    %v3049 = vunpack.c.l.b16 %v2389
    %v3050 = vunpack.c.l.b16 %v2390
    %v3051 = vunpack.c.l.b16 %v2391
    %v3052 = vunpack.c.l.b16 %v2392
    %v3053 = vunpack.c.l.b16 %v2393
    %v3054 = vunpack.c.l.b16 %v2394
    %v3055 = vunpack.c.l.b16 %v2395
    %v3056 = vunpack.c.l.b16 %v2396
    %v3057 = vunpack.c.l.b16 %v2397
    %v3058 = vunpack.c.l.b16 %v2398
    %v3059 = vunpack.c.l.b16 %v2399
    %v3060 = vunpack.c.l.b16 %v2400
    %v3061 = vunpack.c.l.b16 %v2401
    %v3062 = vunpack.c.l.b16 %v2402
    %v3063 = vunpack.c.l.b16 %v2403
    %v3064 = vunpack.c.l.b16 %v2404
    %v3065 = vunpack.c.l.b16 %v2405
    %v3066 = vunpack.c.l.b16 %v2406
    %v3067 = vunpack.c.l.b16 %v2407
    %v3068 = vunpack.c.l.b16 %v2408
    %v3069 = vunpack.c.l.b16 %v2409
    %v3070 = vunpack.c.l.b16 %v2410
    %v3071 = vunpack.c.l.b16 %v2411
    %v3072 = vunpack.c.l.b16 %v2412
    %v3073 = vunpack.c.l.b16 %v2413
    %v3074 = vunpack.c.l.b16 %v2414
    %v3075 = vpack.c.b16 %v2932, %v2931
    %v3076 = vpack.c.b16 %v2934, %v2933
    %v3077 = vpack.c.b16 %v2936, %v2935
    %v3078 = vpack.c.b16 %v2938, %v2937
    %v3079 = vpack.c.b16 %v2940, %v2939
    %v3080 = vpack.c.b16 %v2942, %v2941
    %v3081 = vpack.c.b16 %v2944, %v2943
    %v3082 = vpack.c.b16 %v2946, %v2945
    %v3083 = vpack.c.b16 %v2948, %v2947
    %v3084 = vpack.c.b16 %v2950, %v2949
    %v3085 = vpack.c.b16 %v2952, %v2951
    %v3086 = vpack.c.b16 %v2954, %v2953
    %v3087 = vpack.c.b16 %v2956, %v2955
    %v3088 = vpack.c.b16 %v2958, %v2957
    %v3089 = vpack.c.b16 %v2960, %v2959
    %v3090 = vpack.c.b16 %v2962, %v2961
    %v3091 = vpack.c.b16 %v2964, %v2963
    %v3092 = vpack.c.b16 %v2966, %v2965
    %v3093 = vpack.c.b16 %v2968, %v2967
    %v3094 = vpack.c.b16 %v2970, %v2969
    %v3095 = vpack.c.b16 %v2972, %v2971
    %v3096 = vpack.c.b16 %v2974, %v2973
    %v3097 = vpack.c.b16 %v2976, %v2975
    %v3098 = vpack.c.b16 %v2978, %v2977
    %v3099 = vpack.c.b16 %v2980, %v2979
    %v3100 = vpack.c.b16 %v2982, %v2981
    %v3101 = vpack.c.b16 %v2984, %v2983
    %v3102 = vpack.c.b16 %v2986, %v2985
    %v3103 = vpack.c.b16 %v2988, %v2987
    %v3104 = vpack.c.b16 %v2990, %v2989
    %v3105 = vpack.c.b16 %v2992, %v2991
    %v3106 = vpack.c.b16 %v2994, %v2993
    %v3107 = vpack.c.b16 %v2996, %v2995
    %v3108 = vpack.c.b16 %v2998, %v2997
    %v3109 = vpack.c.b16 %v3000, %v2999
    %v3110 = vpack.c.b16 %v3002, %v3001
    %v3111 = vpack.c.b16 %v3004, %v3003
    %v3112 = vpack.c.b16 %v3006, %v3005
    %v3113 = vpack.c.b16 %v3008, %v3007
    %v3114 = vpack.c.b16 %v3010, %v3009
    %v3115 = vpack.c.b16 %v3012, %v3011
    %v3116 = vpack.c.b16 %v3014, %v3013
    %v3117 = vpack.c.b16 %v3016, %v3015
    %v3118 = vpack.c.b16 %v3018, %v3017
    %v3119 = vpack.c.b16 %v3020, %v3019
    %v3120 = vpack.c.b16 %v3022, %v3021
    %v3121 = vpack.c.b16 %v3024, %v3023
    %v3122 = vpack.c.b16 %v3026, %v3025
    %v3123 = vpack.c.b16 %v3028, %v3027
    %v3124 = vpack.c.b16 %v3030, %v3029
    %v3125 = vpack.c.b16 %v3032, %v3031
    %v3126 = vpack.c.b16 %v3034, %v3033
    %v3127 = vpack.c.b16 %v3036, %v3035
    %v3128 = vpack.c.b16 %v3038, %v3037
    %v3129 = vpack.c.b16 %v3040, %v3039
    %v3130 = vpack.c.b16 %v3042, %v3041
    %v3131 = vpack.c.b16 %v3044, %v3043
    %v3132 = vpack.c.b16 %v3046, %v3045
    %v3133 = vpack.c.b16 %v3048, %v3047
    %v3134 = vpack.c.b16 %v3050, %v3049
    %v3135 = vpack.c.b16 %v3052, %v3051
    %v3136 = vpack.c.b16 %v3054, %v3053
    %v3137 = vpack.c.b16 %v3056, %v3055
    %v3138 = vpack.c.b16 %v3058, %v3057
    %v3139 = vpack.c.b16 %v3060, %v3059
    %v3140 = vpack.c.b16 %v3062, %v3061
    %v3141 = vpack.c.b16 %v3064, %v3063
    %v3142 = vpack.c.b16 %v3066, %v3065
    %v3143 = vpack.c.b16 %v3068, %v3067
    %v3144 = vpack.c.b16 %v3070, %v3069
    %v3145 = vpack.c.b16 %v3072, %v3071
    %v3146 = vpack.c.b16 %v3074, %v3073
    %3219 = vmatpush.bf16.msra.mxu0 %v3082
    %3220 = vmatpush.bf16.msra.mxu0 %v3081
    %3221 = vmatpush.bf16.msra.mxu0 %v3080
    %3222 = vmatpush.bf16.msra.mxu0 %v3079
    %3223 = vmatpush.bf16.msra.mxu0 %v3078
    %3224 = vmatpush.bf16.msra.mxu0 %v3077
    %3225 = vmatpush.bf16.msra.mxu0 %v3076
    %3226 = vmatpush.bf16.msra.mxu0 %v3075
    %3227 = vmatmul.bf16.gmra.mxu0 %v2643
    %v3228 = vpop.f32.mrf.mxu0
    %v3229 = vadd.f32 %v2417, %v3228
    %v3230 = vpop.f32.mrf.mxu0
    %v3231 = vadd.f32 %v2417, %v3230
    %3232 = vmatmul.bf16.gmra.mxu0 %v2652
    %v3233 = vpop.f32.mrf.mxu0
    %v3234 = vadd.f32 %v2417, %v3233
    %v3235 = vpop.f32.mrf.mxu0
    %v3236 = vadd.f32 %v2417, %v3235
    %3237 = vmatmul.bf16.gmra.mxu0 %v2661
    %v3238 = vpop.f32.mrf.mxu0
    %v3239 = vadd.f32 %v2417, %v3238
    %v3240 = vpop.f32.mrf.mxu0
    %v3241 = vadd.f32 %v2417, %v3240
    %3242 = vmatmul.bf16.gmra.mxu0 %v2670
    %v3243 = vpop.f32.mrf.mxu0
    %v3244 = vadd.f32 %v2417, %v3243
    %v3245 = vpop.f32.mrf.mxu0
    %v3246 = vadd.f32 %v2417, %v3245
    %3247 = vmatmul.bf16.gmra.mxu0 %v2679
    %v3248 = vpop.f32.mrf.mxu0
    %v3249 = vadd.f32 %v2417, %v3248
    %v3250 = vpop.f32.mrf.mxu0
    %v3251 = vadd.f32 %v2417, %v3250
    %3252 = vmatmul.bf16.gmra.mxu0 %v2688
    %v3253 = vpop.f32.mrf.mxu0
    %v3254 = vadd.f32 %v2417, %v3253
    %v3255 = vpop.f32.mrf.mxu0
    %v3256 = vadd.f32 %v2417, %v3255
    %3257 = vmatmul.bf16.gmra.mxu0 %v2697
    %v3258 = vpop.f32.mrf.mxu0
    %v3259 = vadd.f32 %v2417, %v3258
    %v3260 = vpop.f32.mrf.mxu0
    %v3261 = vadd.f32 %v2417, %v3260
    %3262 = vmatmul.bf16.gmra.mxu0 %v2706
    %v3263 = vpop.f32.mrf.mxu0
    %v3264 = vadd.f32 %v2417, %v3263
    %v3265 = vpop.f32.mrf.mxu0
    %v3266 = vadd.f32 %v2417, %v3265
    %3267 = vdwg.mxu0
    %3268 = vmatpush.bf16.msra.mxu0 %v3090
    %3269 = vmatpush.bf16.msra.mxu0 %v3089
    %3270 = vmatpush.bf16.msra.mxu0 %v3088
    %3271 = vmatpush.bf16.msra.mxu0 %v3087
    %3272 = vmatpush.bf16.msra.mxu0 %v3086
    %3273 = vmatpush.bf16.msra.mxu0 %v3085
    %3274 = vmatpush.bf16.msra.mxu0 %v3084
    %3275 = vmatpush.bf16.msra.mxu0 %v3083
    %3276 = vmatmul.bf16.gmra.mxu0 %v2644
    %v3277 = vpop.f32.mrf.mxu0
    %v3278 = vadd.f32 %v3229, %v3277
    %v3279 = vpop.f32.mrf.mxu0
    %v3280 = vadd.f32 %v3231, %v3279
    %3281 = vmatmul.bf16.gmra.mxu0 %v2653
    %v3282 = vpop.f32.mrf.mxu0
    %v3283 = vadd.f32 %v3234, %v3282
    %v3284 = vpop.f32.mrf.mxu0
    %v3285 = vadd.f32 %v3236, %v3284
    %3286 = vmatmul.bf16.gmra.mxu0 %v2662
    %v3287 = vpop.f32.mrf.mxu0
    %v3288 = vadd.f32 %v3239, %v3287
    %v3289 = vpop.f32.mrf.mxu0
    %v3290 = vadd.f32 %v3241, %v3289
    %3291 = vmatmul.bf16.gmra.mxu0 %v2671
    %v3292 = vpop.f32.mrf.mxu0
    %v3293 = vadd.f32 %v3244, %v3292
    %v3294 = vpop.f32.mrf.mxu0
    %v3295 = vadd.f32 %v3246, %v3294
    %3296 = vmatmul.bf16.gmra.mxu0 %v2680
    %v3297 = vpop.f32.mrf.mxu0
    %v3298 = vadd.f32 %v3249, %v3297
    %v3299 = vpop.f32.mrf.mxu0
    %v3300 = vadd.f32 %v3251, %v3299
    %3301 = vmatmul.bf16.gmra.mxu0 %v2689
    %v3302 = vpop.f32.mrf.mxu0
    %v3303 = vadd.f32 %v3254, %v3302
    %v3304 = vpop.f32.mrf.mxu0
    %v3305 = vadd.f32 %v3256, %v3304
    %3306 = vmatmul.bf16.gmra.mxu0 %v2698
    %v3307 = vpop.f32.mrf.mxu0
    %v3308 = vadd.f32 %v3259, %v3307
    %v3309 = vpop.f32.mrf.mxu0
    %v3310 = vadd.f32 %v3261, %v3309
    %3311 = vmatmul.bf16.gmra.mxu0 %v2707
    %v3312 = vpop.f32.mrf.mxu0
    %v3313 = vadd.f32 %v3264, %v3312
    %v3314 = vpop.f32.mrf.mxu0
    %v3315 = vadd.f32 %v3266, %v3314
    %3316 = vdwg.mxu0
    %3317 = vmatpush.bf16.msra.mxu0 %v3098
    %3318 = vmatpush.bf16.msra.mxu0 %v3097
    %3319 = vmatpush.bf16.msra.mxu0 %v3096
    %3320 = vmatpush.bf16.msra.mxu0 %v3095
    %3321 = vmatpush.bf16.msra.mxu0 %v3094
    %3322 = vmatpush.bf16.msra.mxu0 %v3093
    %3323 = vmatpush.bf16.msra.mxu0 %v3092
    %3324 = vmatpush.bf16.msra.mxu0 %v3091
    %3325 = vmatmul.bf16.gmra.mxu0 %v2645
    %v3326 = vpop.f32.mrf.mxu0
    %v3327 = vadd.f32 %v3278, %v3326
    %v3328 = vpop.f32.mrf.mxu0
    %v3329 = vadd.f32 %v3280, %v3328
    %3330 = vmatmul.bf16.gmra.mxu0 %v2654
    %v3331 = vpop.f32.mrf.mxu0
    %v3332 = vadd.f32 %v3283, %v3331
    %v3333 = vpop.f32.mrf.mxu0
    %v3334 = vadd.f32 %v3285, %v3333
    %3335 = vmatmul.bf16.gmra.mxu0 %v2663
    %v3336 = vpop.f32.mrf.mxu0
    %v3337 = vadd.f32 %v3288, %v3336
    %v3338 = vpop.f32.mrf.mxu0
    %v3339 = vadd.f32 %v3290, %v3338
    %3340 = vmatmul.bf16.gmra.mxu0 %v2672
    %v3341 = vpop.f32.mrf.mxu0
    %v3342 = vadd.f32 %v3293, %v3341
    %v3343 = vpop.f32.mrf.mxu0
    %v3344 = vadd.f32 %v3295, %v3343
    %3345 = vmatmul.bf16.gmra.mxu0 %v2681
    %v3346 = vpop.f32.mrf.mxu0
    %v3347 = vadd.f32 %v3298, %v3346
    %v3348 = vpop.f32.mrf.mxu0
    %v3349 = vadd.f32 %v3300, %v3348
    %3350 = vmatmul.bf16.gmra.mxu0 %v2690
    %v3351 = vpop.f32.mrf.mxu0
    %v3352 = vadd.f32 %v3303, %v3351
    %v3353 = vpop.f32.mrf.mxu0
    %v3354 = vadd.f32 %v3305, %v3353
    %3355 = vmatmul.bf16.gmra.mxu0 %v2699
    %v3356 = vpop.f32.mrf.mxu0
    %v3357 = vadd.f32 %v3308, %v3356
    %v3358 = vpop.f32.mrf.mxu0
    %v3359 = vadd.f32 %v3310, %v3358
    %3360 = vmatmul.bf16.gmra.mxu0 %v2708
    %v3361 = vpop.f32.mrf.mxu0
    %v3362 = vadd.f32 %v3313, %v3361
    %v3363 = vpop.f32.mrf.mxu0
    %v3364 = vadd.f32 %v3315, %v3363
    %3365 = vdwg.mxu0
    %3366 = vmatpush.bf16.msra.mxu0 %v3106
    %3367 = vmatpush.bf16.msra.mxu0 %v3105
    %3368 = vmatpush.bf16.msra.mxu0 %v3104
    %3369 = vmatpush.bf16.msra.mxu0 %v3103
    %3370 = vmatpush.bf16.msra.mxu0 %v3102
    %3371 = vmatpush.bf16.msra.mxu0 %v3101
    %3372 = vmatpush.bf16.msra.mxu0 %v3100
    %3373 = vmatpush.bf16.msra.mxu0 %v3099
    %3374 = vmatmul.bf16.gmra.mxu0 %v2646
    %v3375 = vpop.f32.mrf.mxu0
    %v3376 = vadd.f32 %v3327, %v3375
    %v3377 = vpop.f32.mrf.mxu0
    %v3378 = vadd.f32 %v3329, %v3377
    %3379 = vmatmul.bf16.gmra.mxu0 %v2655
    %v3380 = vpop.f32.mrf.mxu0
    %v3381 = vadd.f32 %v3332, %v3380
    %v3382 = vpop.f32.mrf.mxu0
    %v3383 = vadd.f32 %v3334, %v3382
    %3384 = vmatmul.bf16.gmra.mxu0 %v2664
    %v3385 = vpop.f32.mrf.mxu0
    %v3386 = vadd.f32 %v3337, %v3385
    %v3387 = vpop.f32.mrf.mxu0
    %v3388 = vadd.f32 %v3339, %v3387
    %3389 = vmatmul.bf16.gmra.mxu0 %v2673
    %v3390 = vpop.f32.mrf.mxu0
    %v3391 = vadd.f32 %v3342, %v3390
    %v3392 = vpop.f32.mrf.mxu0
    %v3393 = vadd.f32 %v3344, %v3392
    %3394 = vmatmul.bf16.gmra.mxu0 %v2682
    %v3395 = vpop.f32.mrf.mxu0
    %v3396 = vadd.f32 %v3347, %v3395
    %v3397 = vpop.f32.mrf.mxu0
    %v3398 = vadd.f32 %v3349, %v3397
    %3399 = vmatmul.bf16.gmra.mxu0 %v2691
    %v3400 = vpop.f32.mrf.mxu0
    %v3401 = vadd.f32 %v3352, %v3400
    %v3402 = vpop.f32.mrf.mxu0
    %v3403 = vadd.f32 %v3354, %v3402
    %3404 = vmatmul.bf16.gmra.mxu0 %v2700
    %v3405 = vpop.f32.mrf.mxu0
    %v3406 = vadd.f32 %v3357, %v3405
    %v3407 = vpop.f32.mrf.mxu0
    %v3408 = vadd.f32 %v3359, %v3407
    %3409 = vmatmul.bf16.gmra.mxu0 %v2709
    %v3410 = vpop.f32.mrf.mxu0
    %v3411 = vadd.f32 %v3362, %v3410
    %v3412 = vpop.f32.mrf.mxu0
    %v3413 = vadd.f32 %v3364, %v3412
    %3414 = vdwg.mxu0
    %3415 = vmatpush.bf16.msra.mxu0 %v3114
    %3416 = vmatpush.bf16.msra.mxu0 %v3113
    %3417 = vmatpush.bf16.msra.mxu0 %v3112
    %3418 = vmatpush.bf16.msra.mxu0 %v3111
    %3419 = vmatpush.bf16.msra.mxu0 %v3110
    %3420 = vmatpush.bf16.msra.mxu0 %v3109
    %3421 = vmatpush.bf16.msra.mxu0 %v3108
    %3422 = vmatpush.bf16.msra.mxu0 %v3107
    %3423 = vmatmul.bf16.gmra.mxu0 %v2647
    %v3424 = vpop.f32.mrf.mxu0
    %v3425 = vadd.f32 %v3376, %v3424
    %v3426 = vpop.f32.mrf.mxu0
    %v3427 = vadd.f32 %v3378, %v3426
    %3428 = vmatmul.bf16.gmra.mxu0 %v2656
    %v3429 = vpop.f32.mrf.mxu0
    %v3430 = vadd.f32 %v3381, %v3429
    %v3431 = vpop.f32.mrf.mxu0
    %v3432 = vadd.f32 %v3383, %v3431
    %3433 = vmatmul.bf16.gmra.mxu0 %v2665
    %v3434 = vpop.f32.mrf.mxu0
    %v3435 = vadd.f32 %v3386, %v3434
    %v3436 = vpop.f32.mrf.mxu0
    %v3437 = vadd.f32 %v3388, %v3436
    %3438 = vmatmul.bf16.gmra.mxu0 %v2674
    %v3439 = vpop.f32.mrf.mxu0
    %v3440 = vadd.f32 %v3391, %v3439
    %v3441 = vpop.f32.mrf.mxu0
    %v3442 = vadd.f32 %v3393, %v3441
    %3443 = vmatmul.bf16.gmra.mxu0 %v2683
    %v3444 = vpop.f32.mrf.mxu0
    %v3445 = vadd.f32 %v3396, %v3444
    %v3446 = vpop.f32.mrf.mxu0
    %v3447 = vadd.f32 %v3398, %v3446
    %3448 = vmatmul.bf16.gmra.mxu0 %v2692
    %v3449 = vpop.f32.mrf.mxu0
    %v3450 = vadd.f32 %v3401, %v3449
    %v3451 = vpop.f32.mrf.mxu0
    %v3452 = vadd.f32 %v3403, %v3451
    %3453 = vmatmul.bf16.gmra.mxu0 %v2701
    %v3454 = vpop.f32.mrf.mxu0
    %v3455 = vadd.f32 %v3406, %v3454
    %v3456 = vpop.f32.mrf.mxu0
    %v3457 = vadd.f32 %v3408, %v3456
    %3458 = vmatmul.bf16.gmra.mxu0 %v2710
    %v3459 = vpop.f32.mrf.mxu0
    %v3460 = vadd.f32 %v3411, %v3459
    %v3461 = vpop.f32.mrf.mxu0
    %v3462 = vadd.f32 %v3413, %v3461
    %3463 = vdwg.mxu0
    %3464 = vmatpush.bf16.msra.mxu0 %v3122
    %3465 = vmatpush.bf16.msra.mxu0 %v3121
    %3466 = vmatpush.bf16.msra.mxu0 %v3120
    %3467 = vmatpush.bf16.msra.mxu0 %v3119
    %3468 = vmatpush.bf16.msra.mxu0 %v3118
    %3469 = vmatpush.bf16.msra.mxu0 %v3117
    %3470 = vmatpush.bf16.msra.mxu0 %v3116
    %3471 = vmatpush.bf16.msra.mxu0 %v3115
    %3472 = vmatmul.bf16.gmra.mxu0 %v2648
    %v3473 = vpop.f32.mrf.mxu0
    %v3474 = vadd.f32 %v3425, %v3473
    %v3475 = vpop.f32.mrf.mxu0
    %v3476 = vadd.f32 %v3427, %v3475
    %3477 = vmatmul.bf16.gmra.mxu0 %v2657
    %v3478 = vpop.f32.mrf.mxu0
    %v3479 = vadd.f32 %v3430, %v3478
    %v3480 = vpop.f32.mrf.mxu0
    %v3481 = vadd.f32 %v3432, %v3480
    %3482 = vmatmul.bf16.gmra.mxu0 %v2666
    %v3483 = vpop.f32.mrf.mxu0
    %v3484 = vadd.f32 %v3435, %v3483
    %v3485 = vpop.f32.mrf.mxu0
    %v3486 = vadd.f32 %v3437, %v3485
    %3487 = vmatmul.bf16.gmra.mxu0 %v2675
    %v3488 = vpop.f32.mrf.mxu0
    %v3489 = vadd.f32 %v3440, %v3488
    %v3490 = vpop.f32.mrf.mxu0
    %v3491 = vadd.f32 %v3442, %v3490
    %3492 = vmatmul.bf16.gmra.mxu0 %v2684
    %v3493 = vpop.f32.mrf.mxu0
    %v3494 = vadd.f32 %v3445, %v3493
    %v3495 = vpop.f32.mrf.mxu0
    %v3496 = vadd.f32 %v3447, %v3495
    %3497 = vmatmul.bf16.gmra.mxu0 %v2693
    %v3498 = vpop.f32.mrf.mxu0
    %v3499 = vadd.f32 %v3450, %v3498
    %v3500 = vpop.f32.mrf.mxu0
    %v3501 = vadd.f32 %v3452, %v3500
    %3502 = vmatmul.bf16.gmra.mxu0 %v2702
    %v3503 = vpop.f32.mrf.mxu0
    %v3504 = vadd.f32 %v3455, %v3503
    %v3505 = vpop.f32.mrf.mxu0
    %v3506 = vadd.f32 %v3457, %v3505
    %3507 = vmatmul.bf16.gmra.mxu0 %v2711
    %v3508 = vpop.f32.mrf.mxu0
    %v3509 = vadd.f32 %v3460, %v3508
    %v3510 = vpop.f32.mrf.mxu0
    %v3511 = vadd.f32 %v3462, %v3510
    %3512 = vdwg.mxu0
    %3513 = vmatpush.bf16.msra.mxu0 %v3130
    %3514 = vmatpush.bf16.msra.mxu0 %v3129
    %3515 = vmatpush.bf16.msra.mxu0 %v3128
    %3516 = vmatpush.bf16.msra.mxu0 %v3127
    %3517 = vmatpush.bf16.msra.mxu0 %v3126
    %3518 = vmatpush.bf16.msra.mxu0 %v3125
    %3519 = vmatpush.bf16.msra.mxu0 %v3124
    %3520 = vmatpush.bf16.msra.mxu0 %v3123
    %3521 = vmatmul.bf16.gmra.mxu0 %v2649
    %v3522 = vpop.f32.mrf.mxu0
    %v3523 = vadd.f32 %v3474, %v3522
    %v3524 = vpop.f32.mrf.mxu0
    %v3525 = vadd.f32 %v3476, %v3524
    %3526 = vmatmul.bf16.gmra.mxu0 %v2658
    %v3527 = vpop.f32.mrf.mxu0
    %v3528 = vadd.f32 %v3479, %v3527
    %v3529 = vpop.f32.mrf.mxu0
    %v3530 = vadd.f32 %v3481, %v3529
    %3531 = vmatmul.bf16.gmra.mxu0 %v2667
    %v3532 = vpop.f32.mrf.mxu0
    %v3533 = vadd.f32 %v3484, %v3532
    %v3534 = vpop.f32.mrf.mxu0
    %v3535 = vadd.f32 %v3486, %v3534
    %3536 = vmatmul.bf16.gmra.mxu0 %v2676
    %v3537 = vpop.f32.mrf.mxu0
    %v3538 = vadd.f32 %v3489, %v3537
    %v3539 = vpop.f32.mrf.mxu0
    %v3540 = vadd.f32 %v3491, %v3539
    %3541 = vmatmul.bf16.gmra.mxu0 %v2685
    %v3542 = vpop.f32.mrf.mxu0
    %v3543 = vadd.f32 %v3494, %v3542
    %v3544 = vpop.f32.mrf.mxu0
    %v3545 = vadd.f32 %v3496, %v3544
    %3546 = vmatmul.bf16.gmra.mxu0 %v2694
    %v3547 = vpop.f32.mrf.mxu0
    %v3548 = vadd.f32 %v3499, %v3547
    %v3549 = vpop.f32.mrf.mxu0
    %v3550 = vadd.f32 %v3501, %v3549
    %3551 = vmatmul.bf16.gmra.mxu0 %v2703
    %v3552 = vpop.f32.mrf.mxu0
    %v3553 = vadd.f32 %v3504, %v3552
    %v3554 = vpop.f32.mrf.mxu0
    %v3555 = vadd.f32 %v3506, %v3554
    %3556 = vmatmul.bf16.gmra.mxu0 %v2712
    %v3557 = vpop.f32.mrf.mxu0
    %v3558 = vadd.f32 %v3509, %v3557
    %v3559 = vpop.f32.mrf.mxu0
    %v3560 = vadd.f32 %v3511, %v3559
    %3561 = vdwg.mxu0
    %3562 = vmatpush.bf16.msra.mxu0 %v3138
    %3563 = vmatpush.bf16.msra.mxu0 %v3137
    %3564 = vmatpush.bf16.msra.mxu0 %v3136
    %3565 = vmatpush.bf16.msra.mxu0 %v3135
    %3566 = vmatpush.bf16.msra.mxu0 %v3134
    %3567 = vmatpush.bf16.msra.mxu0 %v3133
    %3568 = vmatpush.bf16.msra.mxu0 %v3132
    %3569 = vmatpush.bf16.msra.mxu0 %v3131
    %3570 = vmatmul.bf16.gmra.mxu0 %v2650
    %v3571 = vpop.f32.mrf.mxu0
    %v3572 = vadd.f32 %v3523, %v3571
    %v3573 = vpop.f32.mrf.mxu0
    %v3574 = vadd.f32 %v3525, %v3573
    %3575 = vmatmul.bf16.gmra.mxu0 %v2659
    %v3576 = vpop.f32.mrf.mxu0
    %v3577 = vadd.f32 %v3528, %v3576
    %v3578 = vpop.f32.mrf.mxu0
    %v3579 = vadd.f32 %v3530, %v3578
    %3580 = vmatmul.bf16.gmra.mxu0 %v2668
    %v3581 = vpop.f32.mrf.mxu0
    %v3582 = vadd.f32 %v3533, %v3581
    %v3583 = vpop.f32.mrf.mxu0
    %v3584 = vadd.f32 %v3535, %v3583
    %3585 = vmatmul.bf16.gmra.mxu0 %v2677
    %v3586 = vpop.f32.mrf.mxu0
    %v3587 = vadd.f32 %v3538, %v3586
    %v3588 = vpop.f32.mrf.mxu0
    %v3589 = vadd.f32 %v3540, %v3588
    %3590 = vmatmul.bf16.gmra.mxu0 %v2686
    %v3591 = vpop.f32.mrf.mxu0
    %v3592 = vadd.f32 %v3543, %v3591
    %v3593 = vpop.f32.mrf.mxu0
    %v3594 = vadd.f32 %v3545, %v3593
    %3595 = vmatmul.bf16.gmra.mxu0 %v2695
    %v3596 = vpop.f32.mrf.mxu0
    %v3597 = vadd.f32 %v3548, %v3596
    %v3598 = vpop.f32.mrf.mxu0
    %v3599 = vadd.f32 %v3550, %v3598
    %3600 = vmatmul.bf16.gmra.mxu0 %v2704
    %v3601 = vpop.f32.mrf.mxu0
    %v3602 = vadd.f32 %v3553, %v3601
    %v3603 = vpop.f32.mrf.mxu0
    %v3604 = vadd.f32 %v3555, %v3603
    %3605 = vmatmul.bf16.gmra.mxu0 %v2713
    %v3606 = vpop.f32.mrf.mxu0
    %v3607 = vadd.f32 %v3558, %v3606
    %v3608 = vpop.f32.mrf.mxu0
    %v3609 = vadd.f32 %v3560, %v3608
    %3610 = vdwg.mxu0
    %3611 = vmatpush.bf16.msra.mxu0 %v3146
    %3612 = vmatpush.bf16.msra.mxu0 %v3145
    %3613 = vmatpush.bf16.msra.mxu0 %v3144
    %3614 = vmatpush.bf16.msra.mxu0 %v3143
    %3615 = vmatpush.bf16.msra.mxu0 %v3142
    %3616 = vmatpush.bf16.msra.mxu0 %v3141
    %3617 = vmatpush.bf16.msra.mxu0 %v3140
    %3618 = vmatpush.bf16.msra.mxu0 %v3139
    %3619 = vmatmul.bf16.gmra.mxu0 %v2651
    %v3620 = vpop.f32.mrf.mxu0
    %v3621 = vadd.f32 %v3572, %v3620
    %v3622 = vpop.f32.mrf.mxu0
    %v3623 = vadd.f32 %v3574, %v3622
    %3624 = vmatmul.bf16.gmra.mxu0 %v2660
    %v3625 = vpop.f32.mrf.mxu0
    %v3626 = vadd.f32 %v3577, %v3625
    %v3627 = vpop.f32.mrf.mxu0
    %v3628 = vadd.f32 %v3579, %v3627
    %3629 = vmatmul.bf16.gmra.mxu0 %v2669
    %v3630 = vpop.f32.mrf.mxu0
    %v3631 = vadd.f32 %v3582, %v3630
    %v3632 = vpop.f32.mrf.mxu0
    %v3633 = vadd.f32 %v3584, %v3632
    %3634 = vmatmul.bf16.gmra.mxu0 %v2678
    %v3635 = vpop.f32.mrf.mxu0
    %v3636 = vadd.f32 %v3587, %v3635
    %v3637 = vpop.f32.mrf.mxu0
    %v3638 = vadd.f32 %v3589, %v3637
    %3639 = vmatmul.bf16.gmra.mxu0 %v2687
    %v3640 = vpop.f32.mrf.mxu0
    %v3641 = vadd.f32 %v3592, %v3640
    %v3642 = vpop.f32.mrf.mxu0
    %v3643 = vadd.f32 %v3594, %v3642
    %3644 = vmatmul.bf16.gmra.mxu0 %v2696
    %v3645 = vpop.f32.mrf.mxu0
    %v3646 = vadd.f32 %v3597, %v3645
    %v3647 = vpop.f32.mrf.mxu0
    %v3648 = vadd.f32 %v3599, %v3647
    %3649 = vmatmul.bf16.gmra.mxu0 %v2705
    %v3650 = vpop.f32.mrf.mxu0
    %v3651 = vadd.f32 %v3602, %v3650
    %v3652 = vpop.f32.mrf.mxu0
    %v3653 = vadd.f32 %v3604, %v3652
    %3654 = vmatmul.bf16.gmra.mxu0 %v2714
    %v3655 = vpop.f32.mrf.mxu0
    %v3656 = vadd.f32 %v3607, %v3655
    %v3657 = vpop.f32.mrf.mxu0
    %v3658 = vadd.f32 %v3609, %v3657
    %3659 = vdwg.mxu0
    %v3660 = vmax.f32 %v3621, 0.0
    %v3661 = vmax.f32 %v3623, 0.0
    %v3662 = vmax.f32 %v3626, 0.0
    %v3663 = vmax.f32 %v3628, 0.0
    %v3664 = vmax.f32 %v3631, 0.0
    %v3665 = vmax.f32 %v3633, 0.0
    %v3666 = vmax.f32 %v3636, 0.0
    %v3667 = vmax.f32 %v3638, 0.0
    %v3668 = vmax.f32 %v3641, 0.0
    %v3669 = vmax.f32 %v3643, 0.0
    %v3670 = vmax.f32 %v3646, 0.0
    %v3671 = vmax.f32 %v3648, 0.0
    %v3672 = vmax.f32 %v3651, 0.0
    %v3673 = vmax.f32 %v3653, 0.0
    %v3674 = vmax.f32 %v3656, 0.0
    %v3675 = vmax.f32 %v3658, 0.0
    %v3676 = vpack.c.bf16 %v3661, %v3660
    %v3677 = vpack.c.bf16 %v3663, %v3662
    %v3678 = vpack.c.bf16 %v3665, %v3664
    %v3679 = vpack.c.bf16 %v3667, %v3666
    %v3680 = vpack.c.bf16 %v3669, %v3668
    %v3681 = vpack.c.bf16 %v3671, %v3670
    %v3682 = vpack.c.bf16 %v3673, %v3672
    %v3683 = vpack.c.bf16 %v3675, %v3674
    %v3684 = vld [vmem:[%s7] sm:$0xff]
    %v3685 = vld [vmem:[%s7 + $0x8] sm:$0xff]
    %v3686 = vld [vmem:[%s7 + $0x10] sm:$0xff]
    %v3687 = vld [vmem:[%s7 + $0x18] sm:$0xff]
    %v3688 = vld [vmem:[%s7 + $0x20] sm:$0xff]
    %v3689 = vld [vmem:[%s7 + $0x28] sm:$0xff]
    %v3690 = vld [vmem:[%s7 + $0x30] sm:$0xff]
    %v3691 = vld [vmem:[%s7 + $0x38] sm:$0xff]
    %v3692 = vld [vmem:[%s7 + $0x40] sm:$0xff]
    %v3693 = vld [vmem:[%s7 + $0x48] sm:$0xff]
    %v3694 = vld [vmem:[%s7 + $0x50] sm:$0xff]
    %v3695 = vld [vmem:[%s7 + $0x58] sm:$0xff]
    %v3696 = vld [vmem:[%s7 + $0x60] sm:$0xff]
    %v3697 = vld [vmem:[%s7 + $0x68] sm:$0xff]
    %v3698 = vld [vmem:[%s7 + $0x70] sm:$0xff]
    %v3699 = vld [vmem:[%s7 + $0x78] sm:$0xff]
    %v3700 = vld [vmem:[%s8] sm:$0x3]
    %v3702 = vperm.slane %v3700, 0
    %v3703 = vperm.slane %v3700, 1
    %v3722 = vunpack.c.l.b16 %v3684
    %v3723 = vunpack.c.h.b16 %v3684
    %v3724 = vunpack.c.l.b16 %v3685
    %v3725 = vunpack.c.h.b16 %v3685
    %v3726 = vunpack.c.l.b16 %v3686
    %v3727 = vunpack.c.h.b16 %v3686
    %v3728 = vunpack.c.l.b16 %v3687
    %v3729 = vunpack.c.h.b16 %v3687
    %v3730 = vunpack.c.l.b16 %v3688
    %v3731 = vunpack.c.h.b16 %v3688
    %v3732 = vunpack.c.l.b16 %v3689
    %v3733 = vunpack.c.h.b16 %v3689
    %v3734 = vunpack.c.l.b16 %v3690
    %v3735 = vunpack.c.h.b16 %v3690
    %v3736 = vunpack.c.l.b16 %v3691
    %v3737 = vunpack.c.h.b16 %v3691
    %v3738 = vunpack.c.l.b16 %v3692
    %v3739 = vunpack.c.h.b16 %v3692
    %v3740 = vunpack.c.l.b16 %v3693
    %v3741 = vunpack.c.h.b16 %v3693
    %v3742 = vunpack.c.l.b16 %v3694
    %v3743 = vunpack.c.h.b16 %v3694
    %v3744 = vunpack.c.l.b16 %v3695
    %v3745 = vunpack.c.h.b16 %v3695
    %v3746 = vunpack.c.l.b16 %v3696
    %v3747 = vunpack.c.h.b16 %v3696
    %v3748 = vunpack.c.l.b16 %v3697
    %v3749 = vunpack.c.h.b16 %v3697
    %v3750 = vunpack.c.l.b16 %v3698
    %v3751 = vunpack.c.h.b16 %v3698
    %v3752 = vunpack.c.l.b16 %v3699
    %v3753 = vunpack.c.h.b16 %v3699
    %v3754 = vpack.c.b16 %v3724, %v3722
    %v3755 = vpack.c.b16 %v3725, %v3723
    %v3756 = vpack.c.b16 %v3728, %v3726
    %v3757 = vpack.c.b16 %v3729, %v3727
    %v3758 = vpack.c.b16 %v3732, %v3730
    %v3759 = vpack.c.b16 %v3733, %v3731
    %v3760 = vpack.c.b16 %v3736, %v3734
    %v3761 = vpack.c.b16 %v3737, %v3735
    %v3762 = vpack.c.b16 %v3740, %v3738
    %v3763 = vpack.c.b16 %v3741, %v3739
    %v3764 = vpack.c.b16 %v3744, %v3742
    %v3765 = vpack.c.b16 %v3745, %v3743
    %v3766 = vpack.c.b16 %v3748, %v3746
    %v3767 = vpack.c.b16 %v3749, %v3747
    %v3768 = vpack.c.b16 %v3752, %v3750
    %v3769 = vpack.c.b16 %v3753, %v3751
    %3786 = vmatpush.bf16.msra.mxu0 %v3768
    %3787 = vmatpush.bf16.msra.mxu0 %v3766
    %3788 = vmatpush.bf16.msra.mxu0 %v3764
    %3789 = vmatpush.bf16.msra.mxu0 %v3762
    %3790 = vmatpush.bf16.msra.mxu0 %v3760
    %3791 = vmatpush.bf16.msra.mxu0 %v3758
    %3792 = vmatpush.bf16.msra.mxu0 %v3756
    %3793 = vmatpush.bf16.msra.mxu0 %v3754
    %3794 = vmatmul.bf16.gmra.mxu0 %v3676
    %v3795 = vpop.f32.mrf.mxu0
    %v3796 = vadd.f32 %v3702, %v3795
    %v3797 = vpop.f32.mrf.mxu0
    %v3798 = vadd.f32 %v3702, %v3797
    %3799 = vmatmul.bf16.gmra.mxu0 %v3677
    %v3800 = vpop.f32.mrf.mxu0
    %v3801 = vadd.f32 %v3702, %v3800
    %v3802 = vpop.f32.mrf.mxu0
    %v3803 = vadd.f32 %v3702, %v3802
    %3804 = vmatmul.bf16.gmra.mxu0 %v3678
    %v3805 = vpop.f32.mrf.mxu0
    %v3806 = vadd.f32 %v3702, %v3805
    %v3807 = vpop.f32.mrf.mxu0
    %v3808 = vadd.f32 %v3702, %v3807
    %3809 = vmatmul.bf16.gmra.mxu0 %v3679
    %v3810 = vpop.f32.mrf.mxu0
    %v3811 = vadd.f32 %v3702, %v3810
    %v3812 = vpop.f32.mrf.mxu0
    %v3813 = vadd.f32 %v3702, %v3812
    %3814 = vmatmul.bf16.gmra.mxu0 %v3680
    %v3815 = vpop.f32.mrf.mxu0
    %v3816 = vadd.f32 %v3702, %v3815
    %v3817 = vpop.f32.mrf.mxu0
    %v3818 = vadd.f32 %v3702, %v3817
    %3819 = vmatmul.bf16.gmra.mxu0 %v3681
    %v3820 = vpop.f32.mrf.mxu0
    %v3821 = vadd.f32 %v3702, %v3820
    %v3822 = vpop.f32.mrf.mxu0
    %v3823 = vadd.f32 %v3702, %v3822
    %3824 = vmatmul.bf16.gmra.mxu0 %v3682
    %v3825 = vpop.f32.mrf.mxu0
    %v3826 = vadd.f32 %v3702, %v3825
    %v3827 = vpop.f32.mrf.mxu0
    %v3828 = vadd.f32 %v3702, %v3827
    %3829 = vmatmul.bf16.gmra.mxu0 %v3683
    %v3830 = vpop.f32.mrf.mxu0
    %v3831 = vadd.f32 %v3702, %v3830
    %v3832 = vpop.f32.mrf.mxu0
    %v3833 = vadd.f32 %v3702, %v3832
    %3834 = vdwg.mxu0
    %3835 = vmatpush.bf16.msra.mxu0 %v3769
    %3836 = vmatpush.bf16.msra.mxu0 %v3767
    %3837 = vmatpush.bf16.msra.mxu0 %v3765
    %3838 = vmatpush.bf16.msra.mxu0 %v3763
    %3839 = vmatpush.bf16.msra.mxu0 %v3761
    %3840 = vmatpush.bf16.msra.mxu0 %v3759
    %3841 = vmatpush.bf16.msra.mxu0 %v3757
    %3842 = vmatpush.bf16.msra.mxu0 %v3755
    %3843 = vmatmul.bf16.gmra.mxu0 %v3676
    %v3844 = vpop.f32.mrf.mxu0
    %v3845 = vadd.f32 %v3703, %v3844
    %v3846 = vpop.f32.mrf.mxu0
    %v3847 = vadd.f32 %v3703, %v3846
    %3848 = vmatmul.bf16.gmra.mxu0 %v3677
    %v3849 = vpop.f32.mrf.mxu0
    %v3850 = vadd.f32 %v3703, %v3849
    %v3851 = vpop.f32.mrf.mxu0
    %v3852 = vadd.f32 %v3703, %v3851
    %3853 = vmatmul.bf16.gmra.mxu0 %v3678
    %v3854 = vpop.f32.mrf.mxu0
    %v3855 = vadd.f32 %v3703, %v3854
    %v3856 = vpop.f32.mrf.mxu0
    %v3857 = vadd.f32 %v3703, %v3856
    %3858 = vmatmul.bf16.gmra.mxu0 %v3679
    %v3859 = vpop.f32.mrf.mxu0
    %v3860 = vadd.f32 %v3703, %v3859
    %v3861 = vpop.f32.mrf.mxu0
    %v3862 = vadd.f32 %v3703, %v3861
    %3863 = vmatmul.bf16.gmra.mxu0 %v3680
    %v3864 = vpop.f32.mrf.mxu0
    %v3865 = vadd.f32 %v3703, %v3864
    %v3866 = vpop.f32.mrf.mxu0
    %v3867 = vadd.f32 %v3703, %v3866
    %3868 = vmatmul.bf16.gmra.mxu0 %v3681
    %v3869 = vpop.f32.mrf.mxu0
    %v3870 = vadd.f32 %v3703, %v3869
    %v3871 = vpop.f32.mrf.mxu0
    %v3872 = vadd.f32 %v3703, %v3871
    %3873 = vmatmul.bf16.gmra.mxu0 %v3682
    %v3874 = vpop.f32.mrf.mxu0
    %v3875 = vadd.f32 %v3703, %v3874
    %v3876 = vpop.f32.mrf.mxu0
    %v3877 = vadd.f32 %v3703, %v3876
    %3878 = vmatmul.bf16.gmra.mxu0 %v3683
    %v3879 = vpop.f32.mrf.mxu0
    %v3880 = vadd.f32 %v3703, %v3879
    %v3881 = vpop.f32.mrf.mxu0
    %v3882 = vadd.f32 %v3703, %v3881
    %3883 = vdwg.mxu0
    %v3884 = vld [vmem:[%s9] sm:$0xff]
    %v3885 = vld [vmem:[%s9 + $0x8] sm:$0xff]
    %v3886 = vld [vmem:[%s9 + $0x10] sm:$0xff]
    %v3887 = vld [vmem:[%s9 + $0x18] sm:$0xff]
    %v3888 = vld [vmem:[%s9 + $0x20] sm:$0xff]
    %v3889 = vld [vmem:[%s9 + $0x28] sm:$0xff]
    %v3890 = vld [vmem:[%s9 + $0x30] sm:$0xff]
    %v3891 = vld [vmem:[%s9 + $0x38] sm:$0xff]
    %v3892 = vld [vmem:[%s9 + $0x40] sm:$0xff]
    %v3893 = vld [vmem:[%s9 + $0x48] sm:$0xff]
    %v3894 = vld [vmem:[%s9 + $0x50] sm:$0xff]
    %v3895 = vld [vmem:[%s9 + $0x58] sm:$0xff]
    %v3896 = vld [vmem:[%s9 + $0x60] sm:$0xff]
    %v3897 = vld [vmem:[%s9 + $0x68] sm:$0xff]
    %v3898 = vld [vmem:[%s9 + $0x70] sm:$0xff]
    %v3899 = vld [vmem:[%s9 + $0x78] sm:$0xff]
    %v3900 = vld [vmem:[%s10] sm:$0x3]
    %v3902 = vperm.slane %v3900, 0
    %v3903 = vperm.slane %v3900, 1
    %v3922 = vunpack.c.l.b16 %v3884
    %v3923 = vunpack.c.h.b16 %v3884
    %v3924 = vunpack.c.l.b16 %v3885
    %v3925 = vunpack.c.h.b16 %v3885
    %v3926 = vunpack.c.l.b16 %v3886
    %v3927 = vunpack.c.h.b16 %v3886
    %v3928 = vunpack.c.l.b16 %v3887
    %v3929 = vunpack.c.h.b16 %v3887
    %v3930 = vunpack.c.l.b16 %v3888
    %v3931 = vunpack.c.h.b16 %v3888
    %v3932 = vunpack.c.l.b16 %v3889
    %v3933 = vunpack.c.h.b16 %v3889
    %v3934 = vunpack.c.l.b16 %v3890
    %v3935 = vunpack.c.h.b16 %v3890
    %v3936 = vunpack.c.l.b16 %v3891
    %v3937 = vunpack.c.h.b16 %v3891
    %v3938 = vunpack.c.l.b16 %v3892
    %v3939 = vunpack.c.h.b16 %v3892
    %v3940 = vunpack.c.l.b16 %v3893
    %v3941 = vunpack.c.h.b16 %v3893
    %v3942 = vunpack.c.l.b16 %v3894
    %v3943 = vunpack.c.h.b16 %v3894
    %v3944 = vunpack.c.l.b16 %v3895
    %v3945 = vunpack.c.h.b16 %v3895
    %v3946 = vunpack.c.l.b16 %v3896
    %v3947 = vunpack.c.h.b16 %v3896
    %v3948 = vunpack.c.l.b16 %v3897
    %v3949 = vunpack.c.h.b16 %v3897
    %v3950 = vunpack.c.l.b16 %v3898
    %v3951 = vunpack.c.h.b16 %v3898
    %v3952 = vunpack.c.l.b16 %v3899
    %v3953 = vunpack.c.h.b16 %v3899
    %v3954 = vpack.c.b16 %v3924, %v3922
    %v3955 = vpack.c.b16 %v3925, %v3923
    %v3956 = vpack.c.b16 %v3928, %v3926
    %v3957 = vpack.c.b16 %v3929, %v3927
    %v3958 = vpack.c.b16 %v3932, %v3930
    %v3959 = vpack.c.b16 %v3933, %v3931
    %v3960 = vpack.c.b16 %v3936, %v3934
    %v3961 = vpack.c.b16 %v3937, %v3935
    %v3962 = vpack.c.b16 %v3940, %v3938
    %v3963 = vpack.c.b16 %v3941, %v3939
    %v3964 = vpack.c.b16 %v3944, %v3942
    %v3965 = vpack.c.b16 %v3945, %v3943
    %v3966 = vpack.c.b16 %v3948, %v3946
    %v3967 = vpack.c.b16 %v3949, %v3947
    %v3968 = vpack.c.b16 %v3952, %v3950
    %v3969 = vpack.c.b16 %v3953, %v3951
    %3986 = vmatpush.bf16.msra.mxu0 %v3968
    %3987 = vmatpush.bf16.msra.mxu0 %v3966
    %3988 = vmatpush.bf16.msra.mxu0 %v3964
    %3989 = vmatpush.bf16.msra.mxu0 %v3962
    %3990 = vmatpush.bf16.msra.mxu0 %v3960
    %3991 = vmatpush.bf16.msra.mxu0 %v3958
    %3992 = vmatpush.bf16.msra.mxu0 %v3956
    %3993 = vmatpush.bf16.msra.mxu0 %v3954
    %3994 = vmatmul.bf16.gmra.mxu0 %v218
    %v3995 = vpop.f32.mrf.mxu0
    %v3996 = vadd.f32 %v3902, %v3995
    %v3997 = vpop.f32.mrf.mxu0
    %v3998 = vadd.f32 %v3902, %v3997
    %3999 = vmatmul.bf16.gmra.mxu0 %v219
    %v4000 = vpop.f32.mrf.mxu0
    %v4001 = vadd.f32 %v3902, %v4000
    %v4002 = vpop.f32.mrf.mxu0
    %v4003 = vadd.f32 %v3902, %v4002
    %4004 = vmatmul.bf16.gmra.mxu0 %v220
    %v4005 = vpop.f32.mrf.mxu0
    %v4006 = vadd.f32 %v3902, %v4005
    %v4007 = vpop.f32.mrf.mxu0
    %v4008 = vadd.f32 %v3902, %v4007
    %4009 = vmatmul.bf16.gmra.mxu0 %v221
    %v4010 = vpop.f32.mrf.mxu0
    %v4011 = vadd.f32 %v3902, %v4010
    %v4012 = vpop.f32.mrf.mxu0
    %v4013 = vadd.f32 %v3902, %v4012
    %4014 = vmatmul.bf16.gmra.mxu0 %v222
    %v4015 = vpop.f32.mrf.mxu0
    %v4016 = vadd.f32 %v3902, %v4015
    %v4017 = vpop.f32.mrf.mxu0
    %v4018 = vadd.f32 %v3902, %v4017
    %4019 = vmatmul.bf16.gmra.mxu0 %v223
    %v4020 = vpop.f32.mrf.mxu0
    %v4021 = vadd.f32 %v3902, %v4020
    %v4022 = vpop.f32.mrf.mxu0
    %v4023 = vadd.f32 %v3902, %v4022
    %4024 = vmatmul.bf16.gmra.mxu0 %v224
    %v4025 = vpop.f32.mrf.mxu0
    %v4026 = vadd.f32 %v3902, %v4025
    %v4027 = vpop.f32.mrf.mxu0
    %v4028 = vadd.f32 %v3902, %v4027
    %4029 = vmatmul.bf16.gmra.mxu0 %v225
    %v4030 = vpop.f32.mrf.mxu0
    %v4031 = vadd.f32 %v3902, %v4030
    %v4032 = vpop.f32.mrf.mxu0
    %v4033 = vadd.f32 %v3902, %v4032
    %4034 = vdwg.mxu0
    %4035 = vmatpush.bf16.msra.mxu0 %v3969
    %4036 = vmatpush.bf16.msra.mxu0 %v3967
    %4037 = vmatpush.bf16.msra.mxu0 %v3965
    %4038 = vmatpush.bf16.msra.mxu0 %v3963
    %4039 = vmatpush.bf16.msra.mxu0 %v3961
    %4040 = vmatpush.bf16.msra.mxu0 %v3959
    %4041 = vmatpush.bf16.msra.mxu0 %v3957
    %4042 = vmatpush.bf16.msra.mxu0 %v3955
    %4043 = vmatmul.bf16.gmra.mxu0 %v218
    %v4044 = vpop.f32.mrf.mxu0
    %v4045 = vadd.f32 %v3903, %v4044
    %v4046 = vpop.f32.mrf.mxu0
    %v4047 = vadd.f32 %v3903, %v4046
    %4048 = vmatmul.bf16.gmra.mxu0 %v219
    %v4049 = vpop.f32.mrf.mxu0
    %v4050 = vadd.f32 %v3903, %v4049
    %v4051 = vpop.f32.mrf.mxu0
    %v4052 = vadd.f32 %v3903, %v4051
    %4053 = vmatmul.bf16.gmra.mxu0 %v220
    %v4054 = vpop.f32.mrf.mxu0
    %v4055 = vadd.f32 %v3903, %v4054
    %v4056 = vpop.f32.mrf.mxu0
    %v4057 = vadd.f32 %v3903, %v4056
    %4058 = vmatmul.bf16.gmra.mxu0 %v221
    %v4059 = vpop.f32.mrf.mxu0
    %v4060 = vadd.f32 %v3903, %v4059
    %v4061 = vpop.f32.mrf.mxu0
    %v4062 = vadd.f32 %v3903, %v4061
    %4063 = vmatmul.bf16.gmra.mxu0 %v222
    %v4064 = vpop.f32.mrf.mxu0
    %v4065 = vadd.f32 %v3903, %v4064
    %v4066 = vpop.f32.mrf.mxu0
    %v4067 = vadd.f32 %v3903, %v4066
    %4068 = vmatmul.bf16.gmra.mxu0 %v223
    %v4069 = vpop.f32.mrf.mxu0
    %v4070 = vadd.f32 %v3903, %v4069
    %v4071 = vpop.f32.mrf.mxu0
    %v4072 = vadd.f32 %v3903, %v4071
    %4073 = vmatmul.bf16.gmra.mxu0 %v224
    %v4074 = vpop.f32.mrf.mxu0
    %v4075 = vadd.f32 %v3903, %v4074
    %v4076 = vpop.f32.mrf.mxu0
    %v4077 = vadd.f32 %v3903, %v4076
    %4078 = vmatmul.bf16.gmra.mxu0 %v225
    %v4079 = vpop.f32.mrf.mxu0
    %v4080 = vadd.f32 %v3903, %v4079
    %v4081 = vpop.f32.mrf.mxu0
    %v4082 = vadd.f32 %v3903, %v4081
    %4083 = vdwg.mxu0
    %v4084 = vadd.f32 %v3796, %v3996
    %v4085 = vadd.f32 %v3845, %v4045
    %v4086 = vadd.f32 %v3798, %v3998
    %v4087 = vadd.f32 %v3847, %v4047
    %v4088 = vadd.f32 %v3801, %v4001
    %v4089 = vadd.f32 %v3850, %v4050
    %v4090 = vadd.f32 %v3803, %v4003
    %v4091 = vadd.f32 %v3852, %v4052
    %v4092 = vadd.f32 %v3806, %v4006
    %v4093 = vadd.f32 %v3855, %v4055
    %v4094 = vadd.f32 %v3808, %v4008
    %v4095 = vadd.f32 %v3857, %v4057
    %v4096 = vadd.f32 %v3811, %v4011
    %v4097 = vadd.f32 %v3860, %v4060
    %v4098 = vadd.f32 %v3813, %v4013
    %v4099 = vadd.f32 %v3862, %v4062
    %v4100 = vadd.f32 %v3816, %v4016
    %v4101 = vadd.f32 %v3865, %v4065
    %v4102 = vadd.f32 %v3818, %v4018
    %v4103 = vadd.f32 %v3867, %v4067
    %v4104 = vadd.f32 %v3821, %v4021
    %v4105 = vadd.f32 %v3870, %v4070
    %v4106 = vadd.f32 %v3823, %v4023
    %v4107 = vadd.f32 %v3872, %v4072
    %v4108 = vadd.f32 %v3826, %v4026
    %v4109 = vadd.f32 %v3875, %v4075
    %v4110 = vadd.f32 %v3828, %v4028
    %v4111 = vadd.f32 %v3877, %v4077
    %v4112 = vadd.f32 %v3831, %v4031
    %v4113 = vadd.f32 %v3880, %v4080
    %v4114 = vadd.f32 %v3833, %v4033
    %v4115 = vadd.f32 %v3882, %v4082
    %v4116 = vmax.f32 %v4084, 0.0
    %v4117 = vmax.f32 %v4085, 0.0
    %v4118 = vmax.f32 %v4086, 0.0
    %v4119 = vmax.f32 %v4087, 0.0
    %v4120 = vmax.f32 %v4088, 0.0
    %v4121 = vmax.f32 %v4089, 0.0
    %v4122 = vmax.f32 %v4090, 0.0
    %v4123 = vmax.f32 %v4091, 0.0
    %v4124 = vmax.f32 %v4092, 0.0
    %v4125 = vmax.f32 %v4093, 0.0
    %v4126 = vmax.f32 %v4094, 0.0
    %v4127 = vmax.f32 %v4095, 0.0
    %v4128 = vmax.f32 %v4096, 0.0
    %v4129 = vmax.f32 %v4097, 0.0
    %v4130 = vmax.f32 %v4098, 0.0
    %v4131 = vmax.f32 %v4099, 0.0
    %v4132 = vmax.f32 %v4100, 0.0
    %v4133 = vmax.f32 %v4101, 0.0
    %v4134 = vmax.f32 %v4102, 0.0
    %v4135 = vmax.f32 %v4103, 0.0
    %v4136 = vmax.f32 %v4104, 0.0
    %v4137 = vmax.f32 %v4105, 0.0
    %v4138 = vmax.f32 %v4106, 0.0
    %v4139 = vmax.f32 %v4107, 0.0
    %v4140 = vmax.f32 %v4108, 0.0
    %v4141 = vmax.f32 %v4109, 0.0
    %v4142 = vmax.f32 %v4110, 0.0
    %v4143 = vmax.f32 %v4111, 0.0
    %v4144 = vmax.f32 %v4112, 0.0
    %v4145 = vmax.f32 %v4113, 0.0
    %v4146 = vmax.f32 %v4114, 0.0
    %v4147 = vmax.f32 %v4115, 0.0
    %v4148 = vadd.f32 %v4116, %v4118
    %v4149 = vadd.f32 %v4148, %v4120
    %v4150 = vadd.f32 %v4149, %v4122
    %v4151 = vadd.f32 %v4150, %v4124
    %v4152 = vadd.f32 %v4151, %v4126
    %v4153 = vadd.f32 %v4152, %v4128
    %v4154 = vadd.f32 %v4153, %v4130
    %v4155 = vrot.slane %v4154, 4
    %v4156 = vadd.f32 %v4154, %v4155
    %v4157 = vrot.slane %v4156, 2
    %v4158 = vadd.f32 %v4156, %v4157
    %v4159 = vrot.slane %v4158, 1
    %v4160 = vadd.f32 %v4158, %v4159
    %v4161 = vadd.f32 %v4117, %v4119
    %v4162 = vadd.f32 %v4161, %v4121
    %v4163 = vadd.f32 %v4162, %v4123
    %v4164 = vadd.f32 %v4163, %v4125
    %v4165 = vadd.f32 %v4164, %v4127
    %v4166 = vadd.f32 %v4165, %v4129
    %v4167 = vadd.f32 %v4166, %v4131
    %v4168 = vrot.slane %v4167, 4
    %v4169 = vadd.f32 %v4167, %v4168
    %v4170 = vrot.slane %v4169, 2
    %v4171 = vadd.f32 %v4169, %v4170
    %v4172 = vrot.slane %v4171, 1
    %v4173 = vadd.f32 %v4171, %v4172
    %v4174 = vadd.f32 %v4132, %v4134
    %v4175 = vadd.f32 %v4174, %v4136
    %v4176 = vadd.f32 %v4175, %v4138
    %v4177 = vadd.f32 %v4176, %v4140
    %v4178 = vadd.f32 %v4177, %v4142
    %v4179 = vadd.f32 %v4178, %v4144
    %v4180 = vadd.f32 %v4179, %v4146
    %v4181 = vrot.slane %v4180, 4
    %v4182 = vadd.f32 %v4180, %v4181
    %v4183 = vrot.slane %v4182, 2
    %v4184 = vadd.f32 %v4182, %v4183
    %v4185 = vrot.slane %v4184, 1
    %v4186 = vadd.f32 %v4184, %v4185
    %v4187 = vadd.f32 %v4133, %v4135
    %v4188 = vadd.f32 %v4187, %v4137
    %v4189 = vadd.f32 %v4188, %v4139
    %v4190 = vadd.f32 %v4189, %v4141
    %v4191 = vadd.f32 %v4190, %v4143
    %v4192 = vadd.f32 %v4191, %v4145
    %v4193 = vadd.f32 %v4192, %v4147
    %v4194 = vrot.slane %v4193, 4
    %v4195 = vadd.f32 %v4193, %v4194
    %v4196 = vrot.slane %v4195, 2
    %v4197 = vadd.f32 %v4195, %v4196
    %v4198 = vrot.slane %v4197, 1
    %v4199 = vadd.f32 %v4197, %v4198
    %v4200 = vrcp.pop 64.0
    %v4201 = vmul.f32 64.0, %v4200
    %v4202 = vsub.f32 1.0, %v4201
    %v4203 = vmul.f32 %v4200, %v4202
    %v4204 = vadd.f32 %v4200, %v4203
    %vm4205 = vweird.f32 %v4200
    %v4206 = vsel %vm4205, %v4200, %v4204
    %v4207 = vmul.f32 %v4160, %v4206
    %v4208 = vmul.f32 %v4173, %v4206
    %v4209 = vmul.f32 %v4186, %v4206
    %v4210 = vmul.f32 %v4199, %v4206
    %v4211 = vpack.c.bf16 %v4207, %v4207
    %v4212 = vpack.c.bf16 %v4208, %v4208
    %v4213 = vpack.c.bf16 %v4209, %v4209
    %v4214 = vpack.c.bf16 %v4210, %v4210
    %v4215 = vld [vmem:[%s11] sm:$0xff]
    %v4216 = vld [vmem:[%s11 + $0x8] sm:$0xff]
    %v4217 = vld [vmem:[%s11 + $0x10] sm:$0xff]
    %v4218 = vld [vmem:[%s11 + $0x18] sm:$0xff]
    %v4219 = vld [vmem:[%s11 + $0x20] sm:$0xff]
    %v4220 = vld [vmem:[%s11 + $0x28] sm:$0xff]
    %v4221 = vld [vmem:[%s11 + $0x30] sm:$0xff]
    %v4222 = vld [vmem:[%s11 + $0x38] sm:$0xff]
    %v4223 = vld [vmem:[%s11 + $0x40] sm:$0xff]
    %v4224 = vld [vmem:[%s11 + $0x48] sm:$0xff]
    %v4225 = vld [vmem:[%s11 + $0x50] sm:$0xff]
    %v4226 = vld [vmem:[%s11 + $0x58] sm:$0xff]
    %v4227 = vld [vmem:[%s11 + $0x60] sm:$0xff]
    %v4228 = vld [vmem:[%s11 + $0x68] sm:$0xff]
    %v4229 = vld [vmem:[%s11 + $0x70] sm:$0xff]
    %v4230 = vld [vmem:[%s11 + $0x78] sm:$0xff]
    %v4231 = vld [vmem:[%s11 + $0x80] sm:$0xff]
    %v4232 = vld [vmem:[%s11 + $0x88] sm:$0xff]
    %v4233 = vld [vmem:[%s11 + $0x90] sm:$0xff]
    %v4234 = vld [vmem:[%s11 + $0x98] sm:$0xff]
    %v4235 = vld [vmem:[%s11 + $0xa0] sm:$0xff]
    %v4236 = vld [vmem:[%s11 + $0xa8] sm:$0xff]
    %v4237 = vld [vmem:[%s11 + $0xb0] sm:$0xff]
    %v4238 = vld [vmem:[%s11 + $0xb8] sm:$0xff]
    %v4239 = vld [vmem:[%s11 + $0xc0] sm:$0xff]
    %v4240 = vld [vmem:[%s11 + $0xc8] sm:$0xff]
    %v4241 = vld [vmem:[%s11 + $0xd0] sm:$0xff]
    %v4242 = vld [vmem:[%s11 + $0xd8] sm:$0xff]
    %v4243 = vld [vmem:[%s11 + $0xe0] sm:$0xff]
    %v4244 = vld [vmem:[%s11 + $0xe8] sm:$0xff]
    %v4245 = vld [vmem:[%s11 + $0xf0] sm:$0xff]
    %v4246 = vld [vmem:[%s11 + $0xf8] sm:$0xff]
    %v4247 = vld [vmem:[%s11 + $0x100] sm:$0xff]
    %v4248 = vld [vmem:[%s11 + $0x108] sm:$0xff]
    %v4249 = vld [vmem:[%s11 + $0x110] sm:$0xff]
    %v4250 = vld [vmem:[%s11 + $0x118] sm:$0xff]
    %v4251 = vld [vmem:[%s11 + $0x120] sm:$0xff]
    %v4252 = vld [vmem:[%s11 + $0x128] sm:$0xff]
    %v4253 = vld [vmem:[%s11 + $0x130] sm:$0xff]
    %v4254 = vld [vmem:[%s11 + $0x138] sm:$0xff]
    %v4255 = vld [vmem:[%s11 + $0x140] sm:$0xff]
    %v4256 = vld [vmem:[%s11 + $0x148] sm:$0xff]
    %v4257 = vld [vmem:[%s11 + $0x150] sm:$0xff]
    %v4258 = vld [vmem:[%s11 + $0x158] sm:$0xff]
    %v4259 = vld [vmem:[%s11 + $0x160] sm:$0xff]
    %v4260 = vld [vmem:[%s11 + $0x168] sm:$0xff]
    %v4261 = vld [vmem:[%s11 + $0x170] sm:$0xff]
    %v4262 = vld [vmem:[%s11 + $0x178] sm:$0xff]
    %v4263 = vld [vmem:[%s11 + $0x180] sm:$0xff]
    %v4264 = vld [vmem:[%s11 + $0x188] sm:$0xff]
    %v4265 = vld [vmem:[%s11 + $0x190] sm:$0xff]
    %v4266 = vld [vmem:[%s11 + $0x198] sm:$0xff]
    %v4267 = vld [vmem:[%s11 + $0x1a0] sm:$0xff]
    %v4268 = vld [vmem:[%s11 + $0x1a8] sm:$0xff]
    %v4269 = vld [vmem:[%s11 + $0x1b0] sm:$0xff]
    %v4270 = vld [vmem:[%s11 + $0x1b8] sm:$0xff]
    %v4271 = vld [vmem:[%s11 + $0x1c0] sm:$0xff]
    %v4272 = vld [vmem:[%s11 + $0x1c8] sm:$0xff]
    %v4273 = vld [vmem:[%s11 + $0x1d0] sm:$0xff]
    %v4274 = vld [vmem:[%s11 + $0x1d8] sm:$0xff]
    %v4275 = vld [vmem:[%s11 + $0x1e0] sm:$0xff]
    %v4276 = vld [vmem:[%s11 + $0x1e8] sm:$0xff]
    %v4277 = vld [vmem:[%s11 + $0x1f0] sm:$0xff]
    %v4278 = vld [vmem:[%s11 + $0x1f8] sm:$0xff]
    %v4279 = vld [vmem:[%s12] sm:$0xf]
    %v4281 = vperm.slane %v4279, 0
    %v4282 = vperm.slane %v4279, 1
    %v4283 = vperm.slane %v4279, 2
    %v4284 = vperm.slane %v4279, 3
    %v4293 = vunpack.c.l.b16 %v4211
    %v4294 = vunpack.c.l.b16 %v4212
    %v4295 = vunpack.c.l.b16 %v4213
    %v4296 = vunpack.c.l.b16 %v4214
    %vm4297 = vcmask 1041409
    %v4298 = vsel %vm4297, %v4295, %v4293
    %v4299 = vsel %vm4297, %v4296, %v4294
    %v4300 = vpack.c.b16 %v4298, %v4298
    %v4301 = vpack.c.b16 %v4299, %v4299
    %v4368 = vunpack.c.l.b16 %v4215
    %v4369 = vunpack.c.h.b16 %v4215
    %v4370 = vunpack.c.l.b16 %v4216
    %v4371 = vunpack.c.h.b16 %v4216
    %v4372 = vunpack.c.l.b16 %v4217
    %v4373 = vunpack.c.h.b16 %v4217
    %v4374 = vunpack.c.l.b16 %v4218
    %v4375 = vunpack.c.h.b16 %v4218
    %v4376 = vunpack.c.l.b16 %v4219
    %v4377 = vunpack.c.h.b16 %v4219
    %v4378 = vunpack.c.l.b16 %v4220
    %v4379 = vunpack.c.h.b16 %v4220
    %v4380 = vunpack.c.l.b16 %v4221
    %v4381 = vunpack.c.h.b16 %v4221
    %v4382 = vunpack.c.l.b16 %v4222
    %v4383 = vunpack.c.h.b16 %v4222
    %v4384 = vunpack.c.l.b16 %v4223
    %v4385 = vunpack.c.h.b16 %v4223
    %v4386 = vunpack.c.l.b16 %v4224
    %v4387 = vunpack.c.h.b16 %v4224
    %v4388 = vunpack.c.l.b16 %v4225
    %v4389 = vunpack.c.h.b16 %v4225
    %v4390 = vunpack.c.l.b16 %v4226
    %v4391 = vunpack.c.h.b16 %v4226
    %v4392 = vunpack.c.l.b16 %v4227
    %v4393 = vunpack.c.h.b16 %v4227
    %v4394 = vunpack.c.l.b16 %v4228
    %v4395 = vunpack.c.h.b16 %v4228
    %v4396 = vunpack.c.l.b16 %v4229
    %v4397 = vunpack.c.h.b16 %v4229
    %v4398 = vunpack.c.l.b16 %v4230
    %v4399 = vunpack.c.h.b16 %v4230
    %v4400 = vunpack.c.l.b16 %v4231
    %v4401 = vunpack.c.h.b16 %v4231
    %v4402 = vunpack.c.l.b16 %v4232
    %v4403 = vunpack.c.h.b16 %v4232
    %v4404 = vunpack.c.l.b16 %v4233
    %v4405 = vunpack.c.h.b16 %v4233
    %v4406 = vunpack.c.l.b16 %v4234
    %v4407 = vunpack.c.h.b16 %v4234
    %v4408 = vunpack.c.l.b16 %v4235
    %v4409 = vunpack.c.h.b16 %v4235
    %v4410 = vunpack.c.l.b16 %v4236
    %v4411 = vunpack.c.h.b16 %v4236
    %v4412 = vunpack.c.l.b16 %v4237
    %v4413 = vunpack.c.h.b16 %v4237
    %v4414 = vunpack.c.l.b16 %v4238
    %v4415 = vunpack.c.h.b16 %v4238
    %v4416 = vunpack.c.l.b16 %v4239
    %v4417 = vunpack.c.h.b16 %v4239
    %v4418 = vunpack.c.l.b16 %v4240
    %v4419 = vunpack.c.h.b16 %v4240
    %v4420 = vunpack.c.l.b16 %v4241
    %v4421 = vunpack.c.h.b16 %v4241
    %v4422 = vunpack.c.l.b16 %v4242
    %v4423 = vunpack.c.h.b16 %v4242
    %v4424 = vunpack.c.l.b16 %v4243
    %v4425 = vunpack.c.h.b16 %v4243
    %v4426 = vunpack.c.l.b16 %v4244
    %v4427 = vunpack.c.h.b16 %v4244
    %v4428 = vunpack.c.l.b16 %v4245
    %v4429 = vunpack.c.h.b16 %v4245
    %v4430 = vunpack.c.l.b16 %v4246
    %v4431 = vunpack.c.h.b16 %v4246
    %v4432 = vunpack.c.l.b16 %v4247
    %v4433 = vunpack.c.h.b16 %v4247
    %v4434 = vunpack.c.l.b16 %v4248
    %v4435 = vunpack.c.h.b16 %v4248
    %v4436 = vunpack.c.l.b16 %v4249
    %v4437 = vunpack.c.h.b16 %v4249
    %v4438 = vunpack.c.l.b16 %v4250
    %v4439 = vunpack.c.h.b16 %v4250
    %v4440 = vunpack.c.l.b16 %v4251
    %v4441 = vunpack.c.h.b16 %v4251
    %v4442 = vunpack.c.l.b16 %v4252
    %v4443 = vunpack.c.h.b16 %v4252
    %v4444 = vunpack.c.l.b16 %v4253
    %v4445 = vunpack.c.h.b16 %v4253
    %v4446 = vunpack.c.l.b16 %v4254
    %v4447 = vunpack.c.h.b16 %v4254
    %v4448 = vunpack.c.l.b16 %v4255
    %v4449 = vunpack.c.h.b16 %v4255
    %v4450 = vunpack.c.l.b16 %v4256
    %v4451 = vunpack.c.h.b16 %v4256
    %v4452 = vunpack.c.l.b16 %v4257
    %v4453 = vunpack.c.h.b16 %v4257
    %v4454 = vunpack.c.l.b16 %v4258
    %v4455 = vunpack.c.h.b16 %v4258
    %v4456 = vunpack.c.l.b16 %v4259
    %v4457 = vunpack.c.h.b16 %v4259
    %v4458 = vunpack.c.l.b16 %v4260
    %v4459 = vunpack.c.h.b16 %v4260
    %v4460 = vunpack.c.l.b16 %v4261
    %v4461 = vunpack.c.h.b16 %v4261
    %v4462 = vunpack.c.l.b16 %v4262
    %v4463 = vunpack.c.h.b16 %v4262
    %v4464 = vunpack.c.l.b16 %v4263
    %v4465 = vunpack.c.h.b16 %v4263
    %v4466 = vunpack.c.l.b16 %v4264
    %v4467 = vunpack.c.h.b16 %v4264
    %v4468 = vunpack.c.l.b16 %v4265
    %v4469 = vunpack.c.h.b16 %v4265
    %v4470 = vunpack.c.l.b16 %v4266
    %v4471 = vunpack.c.h.b16 %v4266
    %v4472 = vunpack.c.l.b16 %v4267
    %v4473 = vunpack.c.h.b16 %v4267
    %v4474 = vunpack.c.l.b16 %v4268
    %v4475 = vunpack.c.h.b16 %v4268
    %v4476 = vunpack.c.l.b16 %v4269
    %v4477 = vunpack.c.h.b16 %v4269
    %v4478 = vunpack.c.l.b16 %v4270
    %v4479 = vunpack.c.h.b16 %v4270
    %v4480 = vunpack.c.l.b16 %v4271
    %v4481 = vunpack.c.h.b16 %v4271
    %v4482 = vunpack.c.l.b16 %v4272
    %v4483 = vunpack.c.h.b16 %v4272
    %v4484 = vunpack.c.l.b16 %v4273
    %v4485 = vunpack.c.h.b16 %v4273
    %v4486 = vunpack.c.l.b16 %v4274
    %v4487 = vunpack.c.h.b16 %v4274
    %v4488 = vunpack.c.l.b16 %v4275
    %v4489 = vunpack.c.h.b16 %v4275
    %v4490 = vunpack.c.l.b16 %v4276
    %v4491 = vunpack.c.h.b16 %v4276
    %v4492 = vunpack.c.l.b16 %v4277
    %v4493 = vunpack.c.h.b16 %v4277
    %v4494 = vunpack.c.l.b16 %v4278
    %v4495 = vunpack.c.h.b16 %v4278
    %v4496 = vpack.c.b16 %v4372, %v4368
    %v4497 = vpack.c.b16 %v4373, %v4369
    %v4498 = vpack.c.b16 %v4374, %v4370
    %v4499 = vpack.c.b16 %v4375, %v4371
    %v4500 = vpack.c.b16 %v4380, %v4376
    %v4501 = vpack.c.b16 %v4381, %v4377
    %v4502 = vpack.c.b16 %v4382, %v4378
    %v4503 = vpack.c.b16 %v4383, %v4379
    %v4504 = vpack.c.b16 %v4388, %v4384
    %v4505 = vpack.c.b16 %v4389, %v4385
    %v4506 = vpack.c.b16 %v4390, %v4386
    %v4507 = vpack.c.b16 %v4391, %v4387
    %v4508 = vpack.c.b16 %v4396, %v4392
    %v4509 = vpack.c.b16 %v4397, %v4393
    %v4510 = vpack.c.b16 %v4398, %v4394
    %v4511 = vpack.c.b16 %v4399, %v4395
    %v4512 = vpack.c.b16 %v4404, %v4400
    %v4513 = vpack.c.b16 %v4405, %v4401
    %v4514 = vpack.c.b16 %v4406, %v4402
    %v4515 = vpack.c.b16 %v4407, %v4403
    %v4516 = vpack.c.b16 %v4412, %v4408
    %v4517 = vpack.c.b16 %v4413, %v4409
    %v4518 = vpack.c.b16 %v4414, %v4410
    %v4519 = vpack.c.b16 %v4415, %v4411
    %v4520 = vpack.c.b16 %v4420, %v4416
    %v4521 = vpack.c.b16 %v4421, %v4417
    %v4522 = vpack.c.b16 %v4422, %v4418
    %v4523 = vpack.c.b16 %v4423, %v4419
    %v4524 = vpack.c.b16 %v4428, %v4424
    %v4525 = vpack.c.b16 %v4429, %v4425
    %v4526 = vpack.c.b16 %v4430, %v4426
    %v4527 = vpack.c.b16 %v4431, %v4427
    %v4528 = vpack.c.b16 %v4436, %v4432
    %v4529 = vpack.c.b16 %v4437, %v4433
    %v4530 = vpack.c.b16 %v4438, %v4434
    %v4531 = vpack.c.b16 %v4439, %v4435
    %v4532 = vpack.c.b16 %v4444, %v4440
    %v4533 = vpack.c.b16 %v4445, %v4441
    %v4534 = vpack.c.b16 %v4446, %v4442
    %v4535 = vpack.c.b16 %v4447, %v4443
    %v4536 = vpack.c.b16 %v4452, %v4448
    %v4537 = vpack.c.b16 %v4453, %v4449
    %v4538 = vpack.c.b16 %v4454, %v4450
    %v4539 = vpack.c.b16 %v4455, %v4451
    %v4540 = vpack.c.b16 %v4460, %v4456
    %v4541 = vpack.c.b16 %v4461, %v4457
    %v4542 = vpack.c.b16 %v4462, %v4458
    %v4543 = vpack.c.b16 %v4463, %v4459
    %v4544 = vpack.c.b16 %v4468, %v4464
    %v4545 = vpack.c.b16 %v4469, %v4465
    %v4546 = vpack.c.b16 %v4470, %v4466
    %v4547 = vpack.c.b16 %v4471, %v4467
    %v4548 = vpack.c.b16 %v4476, %v4472
    %v4549 = vpack.c.b16 %v4477, %v4473
    %v4550 = vpack.c.b16 %v4478, %v4474
    %v4551 = vpack.c.b16 %v4479, %v4475
    %v4552 = vpack.c.b16 %v4484, %v4480
    %v4553 = vpack.c.b16 %v4485, %v4481
    %v4554 = vpack.c.b16 %v4486, %v4482
    %v4555 = vpack.c.b16 %v4487, %v4483
    %v4556 = vpack.c.b16 %v4492, %v4488
    %v4557 = vpack.c.b16 %v4493, %v4489
    %v4558 = vpack.c.b16 %v4494, %v4490
    %v4559 = vpack.c.b16 %v4495, %v4491
    %4624 = vmatpush.bf16.msra.mxu0 %v4524
    %4625 = vmatpush.bf16.msra.mxu0 %v4520
    %4626 = vmatpush.bf16.msra.mxu0 %v4516
    %4627 = vmatpush.bf16.msra.mxu0 %v4512
    %4628 = vmatpush.bf16.msra.mxu0 %v4508
    %4629 = vmatpush.bf16.msra.mxu0 %v4504
    %4630 = vmatpush.bf16.msra.mxu0 %v4500
    %4631 = vmatpush.bf16.msra.mxu0 %v4496
    %4632 = vmatmul.bf16.gmra.mxu0 %v4300
    %v4633 = vpop.f32.mrf.mxu0
    %v4634 = vadd.f32 %v4281, %v4633
    %v4635 = vpop.f32.mrf.mxu0
    %4636 = vdwg.mxu0
    %4637 = vmatpush.bf16.msra.mxu0 %v4556
    %4638 = vmatpush.bf16.msra.mxu0 %v4552
    %4639 = vmatpush.bf16.msra.mxu0 %v4548
    %4640 = vmatpush.bf16.msra.mxu0 %v4544
    %4641 = vmatpush.bf16.msra.mxu0 %v4540
    %4642 = vmatpush.bf16.msra.mxu0 %v4536
    %4643 = vmatpush.bf16.msra.mxu0 %v4532
    %4644 = vmatpush.bf16.msra.mxu0 %v4528
    %4645 = vmatmul.bf16.gmra.mxu0 %v4301
    %v4646 = vpop.f32.mrf.mxu0
    %v4647 = vadd.f32 %v4634, %v4646
    %v4648 = vpop.f32.mrf.mxu0
    %4649 = vdwg.mxu0
    %4650 = vmatpush.bf16.msra.mxu0 %v4525
    %4651 = vmatpush.bf16.msra.mxu0 %v4521
    %4652 = vmatpush.bf16.msra.mxu0 %v4517
    %4653 = vmatpush.bf16.msra.mxu0 %v4513
    %4654 = vmatpush.bf16.msra.mxu0 %v4509
    %4655 = vmatpush.bf16.msra.mxu0 %v4505
    %4656 = vmatpush.bf16.msra.mxu0 %v4501
    %4657 = vmatpush.bf16.msra.mxu0 %v4497
    %4658 = vmatmul.bf16.gmra.mxu0 %v4300
    %v4659 = vpop.f32.mrf.mxu0
    %v4660 = vadd.f32 %v4282, %v4659
    %v4661 = vpop.f32.mrf.mxu0
    %4662 = vdwg.mxu0
    %4663 = vmatpush.bf16.msra.mxu0 %v4557
    %4664 = vmatpush.bf16.msra.mxu0 %v4553
    %4665 = vmatpush.bf16.msra.mxu0 %v4549
    %4666 = vmatpush.bf16.msra.mxu0 %v4545
    %4667 = vmatpush.bf16.msra.mxu0 %v4541
    %4668 = vmatpush.bf16.msra.mxu0 %v4537
    %4669 = vmatpush.bf16.msra.mxu0 %v4533
    %4670 = vmatpush.bf16.msra.mxu0 %v4529
    %4671 = vmatmul.bf16.gmra.mxu0 %v4301
    %v4672 = vpop.f32.mrf.mxu0
    %v4673 = vadd.f32 %v4660, %v4672
    %v4674 = vpop.f32.mrf.mxu0
    %4675 = vdwg.mxu0
    %4676 = vmatpush.bf16.msra.mxu0 %v4526
    %4677 = vmatpush.bf16.msra.mxu0 %v4522
    %4678 = vmatpush.bf16.msra.mxu0 %v4518
    %4679 = vmatpush.bf16.msra.mxu0 %v4514
    %4680 = vmatpush.bf16.msra.mxu0 %v4510
    %4681 = vmatpush.bf16.msra.mxu0 %v4506
    %4682 = vmatpush.bf16.msra.mxu0 %v4502
    %4683 = vmatpush.bf16.msra.mxu0 %v4498
    %4684 = vmatmul.bf16.gmra.mxu0 %v4300
    %v4685 = vpop.f32.mrf.mxu0
    %v4686 = vadd.f32 %v4283, %v4685
    %v4687 = vpop.f32.mrf.mxu0
    %4688 = vdwg.mxu0
    %4689 = vmatpush.bf16.msra.mxu0 %v4558
    %4690 = vmatpush.bf16.msra.mxu0 %v4554
    %4691 = vmatpush.bf16.msra.mxu0 %v4550
    %4692 = vmatpush.bf16.msra.mxu0 %v4546
    %4693 = vmatpush.bf16.msra.mxu0 %v4542
    %4694 = vmatpush.bf16.msra.mxu0 %v4538
    %4695 = vmatpush.bf16.msra.mxu0 %v4534
    %4696 = vmatpush.bf16.msra.mxu0 %v4530
    %4697 = vmatmul.bf16.gmra.mxu0 %v4301
    %v4698 = vpop.f32.mrf.mxu0
    %v4699 = vadd.f32 %v4686, %v4698
    %v4700 = vpop.f32.mrf.mxu0
    %4701 = vdwg.mxu0
    %4702 = vmatpush.bf16.msra.mxu0 %v4527
    %4703 = vmatpush.bf16.msra.mxu0 %v4523
    %4704 = vmatpush.bf16.msra.mxu0 %v4519
    %4705 = vmatpush.bf16.msra.mxu0 %v4515
    %4706 = vmatpush.bf16.msra.mxu0 %v4511
    %4707 = vmatpush.bf16.msra.mxu0 %v4507
    %4708 = vmatpush.bf16.msra.mxu0 %v4503
    %4709 = vmatpush.bf16.msra.mxu0 %v4499
    %4710 = vmatmul.bf16.gmra.mxu0 %v4300
    %v4711 = vpop.f32.mrf.mxu0
    %v4712 = vadd.f32 %v4284, %v4711
    %v4713 = vpop.f32.mrf.mxu0
    %4714 = vdwg.mxu0
    %4715 = vmatpush.bf16.msra.mxu0 %v4559
    %4716 = vmatpush.bf16.msra.mxu0 %v4555
    %4717 = vmatpush.bf16.msra.mxu0 %v4551
    %4718 = vmatpush.bf16.msra.mxu0 %v4547
    %4719 = vmatpush.bf16.msra.mxu0 %v4543
    %4720 = vmatpush.bf16.msra.mxu0 %v4539
    %4721 = vmatpush.bf16.msra.mxu0 %v4535
    %4722 = vmatpush.bf16.msra.mxu0 %v4531
    %4723 = vmatmul.bf16.gmra.mxu0 %v4301
    %v4724 = vpop.f32.mrf.mxu0
    %v4725 = vadd.f32 %v4712, %v4724
    %v4726 = vpop.f32.mrf.mxu0
    %4727 = vdwg.mxu0
    %v4728 = vmax.f32 %v4647, 0.0
    %v4729 = vmax.f32 %v4673, 0.0
    %v4730 = vmax.f32 %v4699, 0.0
    %v4731 = vmax.f32 %v4725, 0.0
    %v4732 = vpack.c.bf16 %v4728, %v4728
    %v4733 = vpack.c.bf16 %v4729, %v4729
    %v4734 = vpack.c.bf16 %v4730, %v4730
    %v4735 = vpack.c.bf16 %v4731, %v4731
    %v4736 = vld [vmem:[%s13] sm:$0xf]
    %v4737 = vld [vmem:[%s13 + $0x4] sm:$0xf]
    %v4738 = vld [vmem:[%s13 + $0x8] sm:$0xf]
    %v4739 = vld [vmem:[%s13 + $0xc] sm:$0xf]
    %v4740 = vld [vmem:[%s13 + $0x10] sm:$0xf]
    %v4741 = vld [vmem:[%s13 + $0x14] sm:$0xf]
    %v4742 = vld [vmem:[%s13 + $0x18] sm:$0xf]
    %v4743 = vld [vmem:[%s13 + $0x1c] sm:$0xf]
    %v4744 = vld [vmem:[%s13 + $0x20] sm:$0xf]
    %v4745 = vld [vmem:[%s13 + $0x24] sm:$0xf]
    %v4746 = vld [vmem:[%s13 + $0x28] sm:$0xf]
    %v4747 = vld [vmem:[%s13 + $0x2c] sm:$0xf]
    %v4748 = vld [vmem:[%s13 + $0x30] sm:$0xf]
    %v4749 = vld [vmem:[%s13 + $0x34] sm:$0xf]
    %v4750 = vld [vmem:[%s13 + $0x38] sm:$0xf]
    %v4751 = vld [vmem:[%s13 + $0x3c] sm:$0xf]
    %v4752 = vld [vmem:[%s13 + $0x40] sm:$0xf]
    %v4753 = vld [vmem:[%s13 + $0x44] sm:$0xf]
    %v4754 = vld [vmem:[%s13 + $0x48] sm:$0xf]
    %v4755 = vld [vmem:[%s13 + $0x4c] sm:$0xf]
    %v4756 = vld [vmem:[%s13 + $0x50] sm:$0xf]
    %v4757 = vld [vmem:[%s13 + $0x54] sm:$0xf]
    %v4758 = vld [vmem:[%s13 + $0x58] sm:$0xf]
    %v4759 = vld [vmem:[%s13 + $0x5c] sm:$0xf]
    %v4760 = vld [vmem:[%s13 + $0x60] sm:$0xf]
    %v4761 = vld [vmem:[%s13 + $0x64] sm:$0xf]
    %v4762 = vld [vmem:[%s13 + $0x68] sm:$0xf]
    %v4763 = vld [vmem:[%s13 + $0x6c] sm:$0xf]
    %v4764 = vld [vmem:[%s13 + $0x70] sm:$0xf]
    %v4765 = vld [vmem:[%s13 + $0x74] sm:$0xf]
    %v4766 = vld [vmem:[%s13 + $0x78] sm:$0xf]
    %v4767 = vld [vmem:[%s13 + $0x7c] sm:$0xf]
    %v4768 = vld [vmem:[%s13 + $0x80] sm:$0xf]
    %v4769 = vld [vmem:[%s13 + $0x84] sm:$0xf]
    %v4770 = vld [vmem:[%s13 + $0x88] sm:$0xf]
    %v4771 = vld [vmem:[%s13 + $0x8c] sm:$0xf]
    %v4772 = vld [vmem:[%s13 + $0x90] sm:$0xf]
    %v4773 = vld [vmem:[%s13 + $0x94] sm:$0xf]
    %v4774 = vld [vmem:[%s13 + $0x98] sm:$0xf]
    %v4775 = vld [vmem:[%s13 + $0x9c] sm:$0xf]
    %v4776 = vld [vmem:[%s13 + $0xa0] sm:$0xf]
    %v4777 = vld [vmem:[%s13 + $0xa4] sm:$0xf]
    %v4778 = vld [vmem:[%s13 + $0xa8] sm:$0xf]
    %v4779 = vld [vmem:[%s13 + $0xac] sm:$0xf]
    %v4780 = vld [vmem:[%s13 + $0xb0] sm:$0xf]
    %v4781 = vld [vmem:[%s13 + $0xb4] sm:$0xf]
    %v4782 = vld [vmem:[%s13 + $0xb8] sm:$0xf]
    %v4783 = vld [vmem:[%s13 + $0xbc] sm:$0xf]
    %v4784 = vld [vmem:[%s13 + $0xc0] sm:$0xf]
    %v4785 = vld [vmem:[%s13 + $0xc4] sm:$0xf]
    %v4786 = vld [vmem:[%s13 + $0xc8] sm:$0xf]
    %v4787 = vld [vmem:[%s13 + $0xcc] sm:$0xf]
    %v4788 = vld [vmem:[%s13 + $0xd0] sm:$0xf]
    %v4789 = vld [vmem:[%s13 + $0xd4] sm:$0xf]
    %v4790 = vld [vmem:[%s13 + $0xd8] sm:$0xf]
    %v4791 = vld [vmem:[%s13 + $0xdc] sm:$0xf]
    %v4792 = vld [vmem:[%s13 + $0xe0] sm:$0xf]
    %v4793 = vld [vmem:[%s13 + $0xe4] sm:$0xf]
    %v4794 = vld [vmem:[%s13 + $0xe8] sm:$0xf]
    %v4795 = vld [vmem:[%s13 + $0xec] sm:$0xf]
    %v4796 = vld [vmem:[%s13 + $0xf0] sm:$0xf]
    %v4797 = vld [vmem:[%s13 + $0xf4] sm:$0xf]
    %v4798 = vld [vmem:[%s13 + $0xf8] sm:$0xf]
    %v4799 = vld [vmem:[%s13 + $0xfc] sm:$0xf]
    %v4800 = vld [vmem:[%s14] sm:$0x1]
    %v4802 = vperm.slane %v4800, 0
    %v4868 = vunpack.c.l.b16 %v4736
    %v4869 = vunpack.c.l.b16 %v4737
    %v4870 = vunpack.c.l.b16 %v4738
    %v4871 = vunpack.c.l.b16 %v4739
    %v4872 = vunpack.c.l.b16 %v4740
    %v4873 = vunpack.c.l.b16 %v4741
    %v4874 = vunpack.c.l.b16 %v4742
    %v4875 = vunpack.c.l.b16 %v4743
    %v4876 = vunpack.c.l.b16 %v4744
    %v4877 = vunpack.c.l.b16 %v4745
    %v4878 = vunpack.c.l.b16 %v4746
    %v4879 = vunpack.c.l.b16 %v4747
    %v4880 = vunpack.c.l.b16 %v4748
    %v4881 = vunpack.c.l.b16 %v4749
    %v4882 = vunpack.c.l.b16 %v4750
    %v4883 = vunpack.c.l.b16 %v4751
    %v4884 = vunpack.c.l.b16 %v4752
    %v4885 = vunpack.c.l.b16 %v4753
    %v4886 = vunpack.c.l.b16 %v4754
    %v4887 = vunpack.c.l.b16 %v4755
    %v4888 = vunpack.c.l.b16 %v4756
    %v4889 = vunpack.c.l.b16 %v4757
    %v4890 = vunpack.c.l.b16 %v4758
    %v4891 = vunpack.c.l.b16 %v4759
    %v4892 = vunpack.c.l.b16 %v4760
    %v4893 = vunpack.c.l.b16 %v4761
    %v4894 = vunpack.c.l.b16 %v4762
    %v4895 = vunpack.c.l.b16 %v4763
    %v4896 = vunpack.c.l.b16 %v4764
    %v4897 = vunpack.c.l.b16 %v4765
    %v4898 = vunpack.c.l.b16 %v4766
    %v4899 = vunpack.c.l.b16 %v4767
    %v4900 = vunpack.c.l.b16 %v4768
    %v4901 = vunpack.c.l.b16 %v4769
    %v4902 = vunpack.c.l.b16 %v4770
    %v4903 = vunpack.c.l.b16 %v4771
    %v4904 = vunpack.c.l.b16 %v4772
    %v4905 = vunpack.c.l.b16 %v4773
    %v4906 = vunpack.c.l.b16 %v4774
    %v4907 = vunpack.c.l.b16 %v4775
    %v4908 = vunpack.c.l.b16 %v4776
    %v4909 = vunpack.c.l.b16 %v4777
    %v4910 = vunpack.c.l.b16 %v4778
    %v4911 = vunpack.c.l.b16 %v4779
    %v4912 = vunpack.c.l.b16 %v4780
    %v4913 = vunpack.c.l.b16 %v4781
    %v4914 = vunpack.c.l.b16 %v4782
    %v4915 = vunpack.c.l.b16 %v4783
    %v4916 = vunpack.c.l.b16 %v4784
    %v4917 = vunpack.c.l.b16 %v4785
    %v4918 = vunpack.c.l.b16 %v4786
    %v4919 = vunpack.c.l.b16 %v4787
    %v4920 = vunpack.c.l.b16 %v4788
    %v4921 = vunpack.c.l.b16 %v4789
    %v4922 = vunpack.c.l.b16 %v4790
    %v4923 = vunpack.c.l.b16 %v4791
    %v4924 = vunpack.c.l.b16 %v4792
    %v4925 = vunpack.c.l.b16 %v4793
    %v4926 = vunpack.c.l.b16 %v4794
    %v4927 = vunpack.c.l.b16 %v4795
    %v4928 = vunpack.c.l.b16 %v4796
    %v4929 = vunpack.c.l.b16 %v4797
    %v4930 = vunpack.c.l.b16 %v4798
    %v4931 = vunpack.c.l.b16 %v4799
    %v4932 = vpack.c.b16 %v4869, %v4868
    %v4933 = vpack.c.b16 %v4871, %v4870
    %v4934 = vpack.c.b16 %v4873, %v4872
    %v4935 = vpack.c.b16 %v4875, %v4874
    %v4936 = vpack.c.b16 %v4877, %v4876
    %v4937 = vpack.c.b16 %v4879, %v4878
    %v4938 = vpack.c.b16 %v4881, %v4880
    %v4939 = vpack.c.b16 %v4883, %v4882
    %v4940 = vpack.c.b16 %v4885, %v4884
    %v4941 = vpack.c.b16 %v4887, %v4886
    %v4942 = vpack.c.b16 %v4889, %v4888
    %v4943 = vpack.c.b16 %v4891, %v4890
    %v4944 = vpack.c.b16 %v4893, %v4892
    %v4945 = vpack.c.b16 %v4895, %v4894
    %v4946 = vpack.c.b16 %v4897, %v4896
    %v4947 = vpack.c.b16 %v4899, %v4898
    %v4948 = vpack.c.b16 %v4901, %v4900
    %v4949 = vpack.c.b16 %v4903, %v4902
    %v4950 = vpack.c.b16 %v4905, %v4904
    %v4951 = vpack.c.b16 %v4907, %v4906
    %v4952 = vpack.c.b16 %v4909, %v4908
    %v4953 = vpack.c.b16 %v4911, %v4910
    %v4954 = vpack.c.b16 %v4913, %v4912
    %v4955 = vpack.c.b16 %v4915, %v4914
    %v4956 = vpack.c.b16 %v4917, %v4916
    %v4957 = vpack.c.b16 %v4919, %v4918
    %v4958 = vpack.c.b16 %v4921, %v4920
    %v4959 = vpack.c.b16 %v4923, %v4922
    %v4960 = vpack.c.b16 %v4925, %v4924
    %v4961 = vpack.c.b16 %v4927, %v4926
    %v4962 = vpack.c.b16 %v4929, %v4928
    %v4963 = vpack.c.b16 %v4931, %v4930
    %4996 = vmatpush.bf16.msra.mxu0 %v4939
    %4997 = vmatpush.bf16.msra.mxu0 %v4938
    %4998 = vmatpush.bf16.msra.mxu0 %v4937
    %4999 = vmatpush.bf16.msra.mxu0 %v4936
    %5000 = vmatpush.bf16.msra.mxu0 %v4935
    %5001 = vmatpush.bf16.msra.mxu0 %v4934
    %5002 = vmatpush.bf16.msra.mxu0 %v4933
    %5003 = vmatpush.bf16.msra.mxu0 %v4932
    %5004 = vmatmul.bf16.gmra.mxu0 %v4732
    %v5005 = vpop.f32.mrf.mxu0
    %v5006 = vadd.f32 %v4802, %v5005
    %v5007 = vpop.f32.mrf.mxu0
    %5008 = vdwg.mxu0
    %5009 = vmatpush.bf16.msra.mxu0 %v4947
    %5010 = vmatpush.bf16.msra.mxu0 %v4946
    %5011 = vmatpush.bf16.msra.mxu0 %v4945
    %5012 = vmatpush.bf16.msra.mxu0 %v4944
    %5013 = vmatpush.bf16.msra.mxu0 %v4943
    %5014 = vmatpush.bf16.msra.mxu0 %v4942
    %5015 = vmatpush.bf16.msra.mxu0 %v4941
    %5016 = vmatpush.bf16.msra.mxu0 %v4940
    %5017 = vmatmul.bf16.gmra.mxu0 %v4733
    %v5018 = vpop.f32.mrf.mxu0
    %v5019 = vadd.f32 %v5006, %v5018
    %v5020 = vpop.f32.mrf.mxu0
    %5021 = vdwg.mxu0
    %5022 = vmatpush.bf16.msra.mxu0 %v4955
    %5023 = vmatpush.bf16.msra.mxu0 %v4954
    %5024 = vmatpush.bf16.msra.mxu0 %v4953
    %5025 = vmatpush.bf16.msra.mxu0 %v4952
    %5026 = vmatpush.bf16.msra.mxu0 %v4951
    %5027 = vmatpush.bf16.msra.mxu0 %v4950
    %5028 = vmatpush.bf16.msra.mxu0 %v4949
    %5029 = vmatpush.bf16.msra.mxu0 %v4948
    %5030 = vmatmul.bf16.gmra.mxu0 %v4734
    %v5031 = vpop.f32.mrf.mxu0
    %v5032 = vadd.f32 %v5019, %v5031
    %v5033 = vpop.f32.mrf.mxu0
    %5034 = vdwg.mxu0
    %5035 = vmatpush.bf16.msra.mxu0 %v4963
    %5036 = vmatpush.bf16.msra.mxu0 %v4962
    %5037 = vmatpush.bf16.msra.mxu0 %v4961
    %5038 = vmatpush.bf16.msra.mxu0 %v4960
    %5039 = vmatpush.bf16.msra.mxu0 %v4959
    %5040 = vmatpush.bf16.msra.mxu0 %v4958
    %5041 = vmatpush.bf16.msra.mxu0 %v4957
    %5042 = vmatpush.bf16.msra.mxu0 %v4956
    %5043 = vmatmul.bf16.gmra.mxu0 %v4735
    %v5044 = vpop.f32.mrf.mxu0
    %v5045 = vadd.f32 %v5032, %v5044
    %v5046 = vpop.f32.mrf.mxu0
    %5047 = vdwg.mxu0
    %v5049 = vrot.slane %v5045, 1
    %5051 = vst [vmem:[#allocation4] sm:$0x1] %v5045
    %5052 = vst [vmem:[#allocation4 + $0x1] sm:$0x1] %v5049
    // Predicated region
    $region62: #{resnet_forward.1} parent=1 // pred_check
      _
    $region63: #{resnet_forward.1} parent=1 // pred_check_branch
      %5054 = sbr.rel (0) target = $region65
    $region64: #{resnet_forward.1} parent=1 // pred_region
      %5056 = vsyncadd [#allocation5], 0
      %s5057 = sshll.u32 [#allocation4], 4
      %s5058 = int_to_ptr.vmem [resolvable:$true] %s5057
      %s5059 = sshll.u32 %s15, 4
      %s5060 = int_to_ptr.hbm [resolvable:$true] %s5059
      %5065 = dma.vmem_to_hbm [thread:$0]  %s5058, 32, %s5060, [#allocation5], 16, 16, 1
    $region65: #{resnet_forward.1} parent=1 // pred_fallthru
      _
    // Predicated region
    $region66: #{resnet_forward.1} parent=1 // pred_check
      _
    $region67: #{resnet_forward.1} parent=1 // pred_check_branch
      %5067 = sbr.rel (0) target = $region69
    $region68: #{resnet_forward.1} parent=1 // pred_region
      %5069 = dma.done [#allocation5], 32
    $region69: #{resnet_forward.1} parent=1 // pred_fallthru
      _
    %5070 = vsyncpa [#allocation5], 1

</llo_original>
